<compile_context>
chip_gen: v5e
topology: v5e:2x2
jax: 0.10.0
libtpu: 0.0.40
codegen_flags: <defaults>
</compile_context>

<pallas_src>
import functools
import math

import jax
import jax.numpy as jnp
from jax import lax
from jax.experimental import pallas as pl
from jax.experimental.pallas import tpu as pltpu

NUM_HEADS = 4
LN_EPS = 1e-5


def _vmem_spec():
    return pl.BlockSpec(memory_space=pltpu.MemorySpace.VMEM)


def _layer_norm(x, g, b):
    """LayerNorm over the last dim; x (N, D), g/b (1, D), f32 math."""
    mu = jnp.mean(x, axis=-1, keepdims=True)
    xc = x - mu
    var = jnp.mean(xc * xc, axis=-1, keepdims=True)
    return xc * lax.rsqrt(var + LN_EPS) * g + b


def _bf16_dot(x, w_bf16):
    """MXU matmul with bf16 operands and f32 accumulation."""
    return jnp.dot(x.astype(jnp.bfloat16), w_bf16,
                   preferred_element_type=jnp.float32)


# --------------------------------------------------------------- fused kernel
def rna3d_fused_kernel(x_ref, w_in_ref, pe_b_ref, w_qkvo_ref, w_ff1_ref,
                       w_ff2_ref, vec_ref, w_head_ref, b_head_ref, out_ref,
                       *, num_heads):
    x = x_ref[...]                    # (B, S, 3)  f32
    w_in = w_in_ref[...]              # (3, D)     f32
    pe_b = pe_b_ref[...]              # (S, D)     f32   (= pe[:S] + b_in)
    B, S, _ = x.shape
    D = w_in.shape[1]
    num_layers = w_qkvo_ref.shape[0]
    dh = D // num_heads
    scale = 1.0 / math.sqrt(dh)
    latent = w_head_ref.shape[1] // 2

    # ---- input_proj (Linear 3 -> D) + positional encoding ------------------
    # Din == 3: unrolled broadcast MACs on the VPU (no MXU push for K=3).
    h = jnp.broadcast_to(pe_b[None, :, :], (B, S, D))
    for c in range(3):
        h = h + x[:, :, c:c + 1] * w_in[c:c + 1, :][None, :, :]
    h2d = h.reshape(B * S, D)                                     # (B*S, D) f32

    # Per-head lane masks, hoisted out of the layer loop (built once).
    lane = lax.broadcasted_iota(jnp.int32, (1, 1, 1, D), 3)
    head_masks = [(lane >= hh * dh) & (lane < (hh + 1) * dh)
                  for hh in range(num_heads)]

    # ---- transformer encoder layers (post-norm, ReLU FFN) ------------------
    # TODO(synk): nn.Dropout(p=0.1) has no eval-mode effect; treated as identity.
    for li in range(num_layers):
        w_qkvo = w_qkvo_ref[li]       # (D, 4D) bf16   [Wq|Wk|Wv|Wo]
        w_ff1 = w_ff1_ref[li]         # (D, 4D) bf16
        w_ff2 = w_ff2_ref[li]         # (4D, D) bf16
        vec = vec_ref[li]             # (8, 4D) f32    packed biases / LN params
        b_qkv = vec[0:1, :3 * D]      # (1, 3D)
        b_o = vec[0:1, 3 * D:]        # (1, D)
        b1 = vec[1:2, :]              # (1, 4D)
        b2 = vec[2:3, :D]             # (1, D)
        g1, be1 = vec[3:4, :D], vec[4:5, :D]
        g2, be2 = vec[5:6, :D], vec[6:7, :D]

        # Fused QKV projection: a single (B*S, D) @ (D, 3D) MXU push.
        qkv = _bf16_dot(h2d, w_qkvo[:, :3 * D]) + b_qkv           # (B*S, 3D) f32
        qkv3 = qkv.reshape(B, S, 3 * D)
        v3 = qkv3[:, :, 2 * D:]                                   # (B, S, D)

        # Per-head attention on the VPU.  p_all[b, i, j, d] carries head(d)'s
        # softmax prob so the head "concat" is just the natural (B, S, D)
        # lane layout and Wo is applied once below.
        p_all = jnp.zeros((B, S, S, D), jnp.float32)
        for hh in range(num_heads):
            qh = qkv3[:, :, hh * dh:(hh + 1) * dh]                # (B, S, dh)
            kh = qkv3[:, :, D + hh * dh:D + (hh + 1) * dh]        # (B, S, dh)
            s = jnp.sum(qh[:, :, None, :] * kh[:, None, :, :], axis=-1) * scale
            s = s - jnp.max(s, axis=-1, keepdims=True)            # stable softmax
            p = jnp.exp(s)                                        # EUP
            p = p * pl.reciprocal(jnp.sum(p, axis=-1, keepdims=True), approx=True)
            p_all = p_all + jnp.where(head_masks[hh], p[:, :, :, None], 0.0)

        attn3 = jnp.sum(p_all * v3[:, None, :, :], axis=2)        # (B, S, D)
        # Output projection: one full-width Wo matmul.
        attn = _bf16_dot(attn3.reshape(B * S, D), w_qkvo[:, 3 * D:]) + b_o

        # Post-norm residual blocks (dropout = identity in eval).
        x1 = _layer_norm(h2d + attn, g1, be1)
        ff = jnp.maximum(_bf16_dot(x1, w_ff1) + b1, 0.0)          # ReLU
        ff = _bf16_dot(ff, w_ff2) + b2
        h2d = _layer_norm(x1 + ff, g2, be2)

    # ---- mean pool over sequence + fused fc_mu / fc_logv heads -------------
    pooled = jnp.sum(h2d.reshape(B, S, D), axis=1) * (1.0 / S)    # (B, D)
    heads = _bf16_dot(pooled, w_head_ref[...]) + b_head_ref[...]  # (B, 2*latent)
    col = lax.broadcasted_iota(jnp.int32, heads.shape, 1)
    # clamp only the logvar half ([-10, 10]); mu half passes through.
    out_ref[...] = jnp.where(col < latent, heads,
                             jnp.clip(heads, -10.0, 10.0))


# ------------------------------------------------------------------- wrapper
def rna3d_encoder_forward(x, packed):
    B = x.shape[0]
    latent = packed['w_head'].shape[1] // 2
    out = pl.pallas_call(
        functools.partial(rna3d_fused_kernel, num_heads=NUM_HEADS),
        out_shape=jax.ShapeDtypeStruct((B, 2 * latent), jnp.float32),
        in_specs=[_vmem_spec()] * 9,
        out_specs=_vmem_spec(),
    )(x, packed['w_in'], packed['pe_b'], packed['w_qkvo'], packed['w_ff1'],
      packed['w_ff2'], packed['vec'], packed['w_head'], packed['b_head'])
    return out[:, :latent], out[:, latent:]


# ------------------------------------------------------------ params / packing
def positional_encoding(max_len, d_model):
    pos = jnp.arange(max_len, dtype=jnp.float32)[:, None]
    div = jnp.exp(-math.log(10000.0)
                  * jnp.arange(0, d_model, 2, dtype=jnp.float32) / d_model)
    pe = jnp.zeros((max_len, d_model), jnp.float32)
    pe = pe.at[:, 0::2].set(jnp.sin(pos * div))
    pe = pe.at[:, 1::2].set(jnp.cos(pos * div))
    return pe


def make_params(key, d_model, num_layers, latent_dim):
    def dense(k, fan_in, fan_out):
        kw, kb = jax.random.split(k)
        lim = 1.0 / math.sqrt(fan_in)
        w = jax.random.uniform(kw, (fan_in, fan_out), jnp.float32, -lim, lim)
        b = jax.random.uniform(kb, (1, fan_out), jnp.float32, -lim, lim)
        return w, b

    keys = jax.random.split(key, 3 + num_layers)
    params = {}
    params['w_in'], params['b_in'] = dense(keys[0], 3, d_model)
    params['w_mu'], params['b_mu'] = dense(keys[1], d_model, latent_dim)
    params['w_lv'], params['b_lv'] = dense(keys[2], d_model, latent_dim)
    layers = []
    for li in range(num_layers):
        lk = jax.random.split(keys[3 + li], 6)
        p = {}
        p['wq'], p['bq'] = dense(lk[0], d_model, d_model)
        p['wk'], p['bk'] = dense(lk[1], d_model, d_model)
        p['wv'], p['bv'] = dense(lk[2], d_model, d_model)
        p['wo'], p['bo'] = dense(lk[3], d_model, d_model)
        p['w1'], p['b1'] = dense(lk[4], d_model, 4 * d_model)
        p['w2'], p['b2'] = dense(lk[5], 4 * d_model, d_model)
        p['g1'] = jnp.ones((1, d_model), jnp.float32)
        p['be1'] = jnp.zeros((1, d_model), jnp.float32)
        p['g2'] = jnp.ones((1, d_model), jnp.float32)
        p['be2'] = jnp.zeros((1, d_model), jnp.float32)
        layers.append(p)
    params['layers'] = layers
    return params


def pack_params(params, seq_len, d_model, max_len=4096):
    """Pack per-layer params into layer-stacked slabs for the fused kernel."""
    D = d_model
    pe_b = positional_encoding(max_len, D)[:seq_len] + params['b_in']   # (S, D)

    def pad_row(a):  # (1, D) -> (1, 4D)
        return jnp.pad(a, ((0, 0), (0, 3 * D)))

    w_qkvo, w_ff1, w_ff2, vec = [], [], [], []
    for p in params['layers']:
        w_qkvo.append(jnp.concatenate([p['wq'], p['wk'], p['wv'], p['wo']], axis=1))
        w_ff1.append(p['w1'])
        w_ff2.append(p['w2'])
        rows = [jnp.concatenate([p['bq'], p['bk'], p['bv'], p['bo']], axis=1),
                p['b1'],
                pad_row(p['b2']), pad_row(p['g1']), pad_row(p['be1']),
                pad_row(p['g2']), pad_row(p['be2']),
                jnp.zeros((1, 4 * D), jnp.float32)]          # pad to 8 sublanes
        vec.append(jnp.concatenate(rows, axis=0))            # (8, 4D)

    return {
        'w_in': params['w_in'],                                          # (3, D) f32
        'pe_b': pe_b.astype(jnp.float32),                                # (S, D) f32
        'w_qkvo': jnp.stack(w_qkvo).astype(jnp.bfloat16),                # (L, D, 4D)
        'w_ff1': jnp.stack(w_ff1).astype(jnp.bfloat16),                  # (L, D, 4D)
        'w_ff2': jnp.stack(w_ff2).astype(jnp.bfloat16),                  # (L, 4D, D)
        'vec': jnp.stack(vec),                                           # (L, 8, 4D) f32
        'w_head': jnp.concatenate([params['w_mu'], params['w_lv']],
                                  axis=1).astype(jnp.bfloat16),          # (D, 2*lat)
        'b_head': jnp.concatenate([params['b_mu'], params['b_lv']], axis=1),
    }


if __name__ == "__main__":
    B, S, D_MODEL, NUM_LAYERS, LATENT = 2, 8, 32, 2, 16
    key = jax.random.PRNGKey(0)
    kx, kp = jax.random.split(key)
    x = jax.random.normal(kx, (B, S, 3), jnp.float32)        # (batch, seq, xyz)
    params = make_params(kp, D_MODEL, NUM_LAYERS, LATENT)
    packed = pack_params(params, S, D_MODEL)

    mu, logv = rna3d_encoder_forward(x, packed)
    mu, logv = jax.block_until_ready((mu, logv))
    assert mu.shape == (B, LATENT) and logv.shape == (B, LATENT)
    assert bool(jnp.all(jnp.isfinite(mu))) and bool(jnp.all(jnp.isfinite(logv)))
    assert bool(jnp.all(logv >= -10.0)) and bool(jnp.all(logv <= 10.0))
    print("KERNEL_OK")
</pallas_src>

<mosaic_0001>
module attributes {stable_mosaic.version = 11 : i64} {
  func.func @rna3d_fused_kernel(%arg0: memref<2x8x3xf32, #tpu.memory_space<vmem>>, %arg1: memref<3x32xf32, #tpu.memory_space<vmem>>, %arg2: memref<8x32xf32, #tpu.memory_space<vmem>>, %arg3: memref<2x32x128xbf16, #tpu.memory_space<vmem>>, %arg4: memref<2x32x128xbf16, #tpu.memory_space<vmem>>, %arg5: memref<2x128x32xbf16, #tpu.memory_space<vmem>>, %arg6: memref<2x8x128xf32, #tpu.memory_space<vmem>>, %arg7: memref<32x32xbf16, #tpu.memory_space<vmem>>, %arg8: memref<1x32xf32, #tpu.memory_space<vmem>>, %arg9: memref<2x32xf32, #tpu.memory_space<vmem>>) attributes {dimension_semantics = [], scalar_prefetch = 0 : i64, scratch_operands = 0 : i64, tpu.core_type = #tpu.core_type<tc>} {
    %c0 = arith.constant 0 : index
    %c0_0 = arith.constant 0 : index
    %c0_1 = arith.constant 0 : index
    %0 = vector.load %arg0[%c0, %c0_0, %c0_1] : memref<2x8x3xf32, #tpu.memory_space<vmem>>, vector<2x8x3xf32>
    %c0_2 = arith.constant 0 : index
    %c0_3 = arith.constant 0 : index
    %1 = vector.load %arg1[%c0_2, %c0_3] : memref<3x32xf32, #tpu.memory_space<vmem>>, vector<3x32xf32>
    %c0_4 = arith.constant 0 : index
    %c0_5 = arith.constant 0 : index
    %2 = vector.load %arg2[%c0_4, %c0_5] : memref<8x32xf32, #tpu.memory_space<vmem>>, vector<8x32xf32>
    %3 = vector.shape_cast %2 : vector<8x32xf32> to vector<1x8x32xf32>
    %4 = vector.shape_cast %3 : vector<1x8x32xf32> to vector<1x8x32xf32>
    %5 = vector.broadcast %4 : vector<1x8x32xf32> to vector<2x8x32xf32>
    %6 = vector.extract_strided_slice %0 {offsets = [0, 0, 0], sizes = [2, 8, 1], strides = [1, 1, 1]} : vector<2x8x3xf32> to vector<2x8x1xf32>
    %7 = vector.extract_strided_slice %1 {offsets = [0, 0], sizes = [1, 32], strides = [1, 1]} : vector<3x32xf32> to vector<1x32xf32>
    %8 = vector.shape_cast %7 : vector<1x32xf32> to vector<1x1x32xf32>
    %9 = vector.broadcast %6 : vector<2x8x1xf32> to vector<2x8x32xf32>
    %10 = vector.broadcast %8 : vector<1x1x32xf32> to vector<2x8x32xf32>
    %11 = arith.mulf %9, %10 : vector<2x8x32xf32>
    %12 = arith.addf %5, %11 : vector<2x8x32xf32>
    %13 = vector.extract_strided_slice %0 {offsets = [0, 0, 1], sizes = [2, 8, 1], strides = [1, 1, 1]} : vector<2x8x3xf32> to vector<2x8x1xf32>
    %14 = vector.extract_strided_slice %1 {offsets = [1, 0], sizes = [1, 32], strides = [1, 1]} : vector<3x32xf32> to vector<1x32xf32>
    %15 = vector.shape_cast %14 : vector<1x32xf32> to vector<1x1x32xf32>
    %16 = vector.broadcast %13 : vector<2x8x1xf32> to vector<2x8x32xf32>
    %17 = vector.broadcast %15 : vector<1x1x32xf32> to vector<2x8x32xf32>
    %18 = arith.mulf %16, %17 : vector<2x8x32xf32>
    %19 = arith.addf %12, %18 : vector<2x8x32xf32>
    %20 = vector.extract_strided_slice %0 {offsets = [0, 0, 2], sizes = [2, 8, 1], strides = [1, 1, 1]} : vector<2x8x3xf32> to vector<2x8x1xf32>
    %21 = vector.extract_strided_slice %1 {offsets = [2, 0], sizes = [1, 32], strides = [1, 1]} : vector<3x32xf32> to vector<1x32xf32>
    %22 = vector.shape_cast %21 : vector<1x32xf32> to vector<1x1x32xf32>
    %23 = vector.broadcast %20 : vector<2x8x1xf32> to vector<2x8x32xf32>
    %24 = vector.broadcast %22 : vector<1x1x32xf32> to vector<2x8x32xf32>
    %25 = arith.mulf %23, %24 : vector<2x8x32xf32>
    %26 = arith.addf %19, %25 : vector<2x8x32xf32>
    %27 = vector.shape_cast %26 : vector<2x8x32xf32> to vector<16x32xf32>
    %28 = tpu.iota {dimensions = array<i32: 3>} : vector<1x1x1x32xi32>
    %c0_i32 = arith.constant 0 : i32
    %29 = vector.broadcast %c0_i32 : i32 to vector<1x1x1x32xi32>
    %30 = arith.cmpi sge, %28, %29 : vector<1x1x1x32xi32>
    %c8_i32 = arith.constant 8 : i32
    %31 = vector.broadcast %c8_i32 : i32 to vector<1x1x1x32xi32>
    %32 = arith.cmpi slt, %28, %31 : vector<1x1x1x32xi32>
    %33 = arith.andi %30, %32 : vector<1x1x1x32xi1>
    %c8_i32_6 = arith.constant 8 : i32
    %34 = vector.broadcast %c8_i32_6 : i32 to vector<1x1x1x32xi32>
    %35 = arith.cmpi sge, %28, %34 : vector<1x1x1x32xi32>
    %c16_i32 = arith.constant 16 : i32
    %36 = vector.broadcast %c16_i32 : i32 to vector<1x1x1x32xi32>
    %37 = arith.cmpi slt, %28, %36 : vector<1x1x1x32xi32>
    %38 = arith.andi %35, %37 : vector<1x1x1x32xi1>
    %c16_i32_7 = arith.constant 16 : i32
    %39 = vector.broadcast %c16_i32_7 : i32 to vector<1x1x1x32xi32>
    %40 = arith.cmpi sge, %28, %39 : vector<1x1x1x32xi32>
    %c24_i32 = arith.constant 24 : i32
    %41 = vector.broadcast %c24_i32 : i32 to vector<1x1x1x32xi32>
    %42 = arith.cmpi slt, %28, %41 : vector<1x1x1x32xi32>
    %43 = arith.andi %40, %42 : vector<1x1x1x32xi1>
    %c24_i32_8 = arith.constant 24 : i32
    %44 = vector.broadcast %c24_i32_8 : i32 to vector<1x1x1x32xi32>
    %45 = arith.cmpi sge, %28, %44 : vector<1x1x1x32xi32>
    %c32_i32 = arith.constant 32 : i32
    %46 = vector.broadcast %c32_i32 : i32 to vector<1x1x1x32xi32>
    %47 = arith.cmpi slt, %28, %46 : vector<1x1x1x32xi32>
    %48 = arith.andi %45, %47 : vector<1x1x1x32xi1>
    %c0_9 = arith.constant 0 : index
    %c0_10 = arith.constant 0 : index
    %c0_11 = arith.constant 0 : index
    %49 = vector.load %arg3[%c0_9, %c0_10, %c0_11] : memref<2x32x128xbf16, #tpu.memory_space<vmem>>, vector<1x32x128xbf16>
    %50 = vector.shape_cast %49 : vector<1x32x128xbf16> to vector<32x128xbf16>
    %c0_12 = arith.constant 0 : index
    %c0_13 = arith.constant 0 : index
    %c0_14 = arith.constant 0 : index
    %51 = vector.load %arg4[%c0_12, %c0_13, %c0_14] : memref<2x32x128xbf16, #tpu.memory_space<vmem>>, vector<1x32x128xbf16>
    %52 = vector.shape_cast %51 : vector<1x32x128xbf16> to vector<32x128xbf16>
    %c0_15 = arith.constant 0 : index
    %c0_16 = arith.constant 0 : index
    %c0_17 = arith.constant 0 : index
    %53 = vector.load %arg5[%c0_15, %c0_16, %c0_17] : memref<2x128x32xbf16, #tpu.memory_space<vmem>>, vector<1x128x32xbf16>
    %54 = vector.shape_cast %53 : vector<1x128x32xbf16> to vector<128x32xbf16>
    %c0_18 = arith.constant 0 : index
    %c0_19 = arith.constant 0 : index
    %c0_20 = arith.constant 0 : index
    %55 = vector.load %arg6[%c0_18, %c0_19, %c0_20] : memref<2x8x128xf32, #tpu.memory_space<vmem>>, vector<1x8x128xf32>
    %56 = vector.shape_cast %55 : vector<1x8x128xf32> to vector<8x128xf32>
    %57 = vector.extract_strided_slice %56 {offsets = [0, 0], sizes = [1, 96], strides = [1, 1]} : vector<8x128xf32> to vector<1x96xf32>
    %58 = vector.extract_strided_slice %56 {offsets = [0, 96], sizes = [1, 32], strides = [1, 1]} : vector<8x128xf32> to vector<1x32xf32>
    %59 = vector.extract_strided_slice %56 {offsets = [1, 0], sizes = [1, 128], strides = [1, 1]} : vector<8x128xf32> to vector<1x128xf32>
    %60 = vector.extract_strided_slice %56 {offsets = [2, 0], sizes = [1, 32], strides = [1, 1]} : vector<8x128xf32> to vector<1x32xf32>
    %61 = vector.extract_strided_slice %56 {offsets = [3, 0], sizes = [1, 32], strides = [1, 1]} : vector<8x128xf32> to vector<1x32xf32>
    %62 = vector.extract_strided_slice %56 {offsets = [4, 0], sizes = [1, 32], strides = [1, 1]} : vector<8x128xf32> to vector<1x32xf32>
    %63 = vector.extract_strided_slice %56 {offsets = [5, 0], sizes = [1, 32], strides = [1, 1]} : vector<8x128xf32> to vector<1x32xf32>
    %64 = vector.extract_strided_slice %56 {offsets = [6, 0], sizes = [1, 32], strides = [1, 1]} : vector<8x128xf32> to vector<1x32xf32>
    %65 = vector.extract_strided_slice %50 {offsets = [0, 0], sizes = [32, 96], strides = [1, 1]} : vector<32x128xbf16> to vector<32x96xbf16>
    %66 = arith.truncf %27 : vector<16x32xf32> to vector<16x32xbf16>
    %cst = arith.constant dense<0.000000e+00> : vector<16x96xf32>
    %67 = tpu.matmul %66, %65, %cst {dimension_numbers = #tpu.dot_dimension_numbers<[1], [0], [0], [1], [0, 0, 1, 1], [], []>} : vector<16x32xbf16>, vector<32x96xbf16>, vector<16x96xf32> -> vector<16x96xf32>
    %68 = vector.broadcast %57 : vector<1x96xf32> to vector<16x96xf32>
    %69 = arith.addf %67, %68 : vector<16x96xf32>
    %70 = vector.shape_cast %69 : vector<16x96xf32> to vector<2x8x96xf32>
    %71 = vector.extract_strided_slice %70 {offsets = [0, 0, 64], sizes = [2, 8, 32], strides = [1, 1, 1]} : vector<2x8x96xf32> to vector<2x8x32xf32>
    %cst_21 = arith.constant 0.000000e+00 : f32
    %72 = vector.broadcast %cst_21 : f32 to vector<2x8x8x32xf32>
    %73 = vector.extract_strided_slice %70 {offsets = [0, 0, 0], sizes = [2, 8, 8], strides = [1, 1, 1]} : vector<2x8x96xf32> to vector<2x8x8xf32>
    %74 = vector.extract_strided_slice %70 {offsets = [0, 0, 32], sizes = [2, 8, 8], strides = [1, 1, 1]} : vector<2x8x96xf32> to vector<2x8x8xf32>
    %75 = vector.shape_cast %73 : vector<2x8x8xf32> to vector<2x8x1x8xf32>
    %76 = vector.shape_cast %74 : vector<2x8x8xf32> to vector<2x1x8x8xf32>
    %77 = vector.broadcast %75 : vector<2x8x1x8xf32> to vector<2x8x8x8xf32>
    %78 = vector.broadcast %76 : vector<2x1x8x8xf32> to vector<2x8x8x8xf32>
    %79 = arith.mulf %77, %78 : vector<2x8x8x8xf32>
    %cst_22 = arith.constant dense<0.000000e+00> : vector<2x8x8xf32>
    %80 = vector.multi_reduction <add>, %79, %cst_22 [3] : vector<2x8x8x8xf32> to vector<2x8x8xf32>
    %cst_23 = arith.constant 0.353553385 : f32
    %81 = vector.broadcast %cst_23 : f32 to vector<2x8x8xf32>
    %82 = arith.mulf %80, %81 : vector<2x8x8xf32>
    %cst_24 = arith.constant dense<0xFF800000> : vector<2x8xf32>
    %83 = vector.multi_reduction <maximumf>, %82, %cst_24 [2] : vector<2x8x8xf32> to vector<2x8xf32>
    %84 = vector.shape_cast %83 : vector<2x8xf32> to vector<2x8x1xf32>
    %85 = vector.broadcast %84 : vector<2x8x1xf32> to vector<2x8x8xf32>
    %86 = arith.subf %82, %85 : vector<2x8x8xf32>
    %87 = math.exp %86 : vector<2x8x8xf32>
    %cst_25 = arith.constant dense<0.000000e+00> : vector<2x8xf32>
    %88 = vector.multi_reduction <add>, %87, %cst_25 [2] : vector<2x8x8xf32> to vector<2x8xf32>
    %89 = vector.shape_cast %88 : vector<2x8xf32> to vector<2x8x1xf32>
    %90 = tpu.reciprocal %89 {approx = true} : vector<2x8x1xf32> -> vector<2x8x1xf32>
    %91 = vector.broadcast %90 : vector<2x8x1xf32> to vector<2x8x8xf32>
    %92 = arith.mulf %87, %91 : vector<2x8x8xf32>
    %93 = vector.shape_cast %92 : vector<2x8x8xf32> to vector<2x8x8x1xf32>
    %cst_26 = arith.constant 0.000000e+00 : f32
    %94 = vector.shape_cast %33 : vector<1x1x1x32xi1> to vector<1x1x1x32xi1>
    %95 = vector.broadcast %94 : vector<1x1x1x32xi1> to vector<2x8x8x32xi1>
    %96 = vector.shape_cast %93 : vector<2x8x8x1xf32> to vector<2x8x8x1xf32>
    %97 = vector.broadcast %96 : vector<2x8x8x1xf32> to vector<2x8x8x32xf32>
    %98 = vector.broadcast %cst_26 : f32 to vector<2x8x8x32xf32>
    %99 = arith.select %95, %97, %98 : vector<2x8x8x32xi1>, vector<2x8x8x32xf32>
    %100 = arith.addf %72, %99 : vector<2x8x8x32xf32>
    %101 = vector.extract_strided_slice %70 {offsets = [0, 0, 8], sizes = [2, 8, 8], strides = [1, 1, 1]} : vector<2x8x96xf32> to vector<2x8x8xf32>
    %102 = vector.extract_strided_slice %70 {offsets = [0, 0, 40], sizes = [2, 8, 8], strides = [1, 1, 1]} : vector<2x8x96xf32> to vector<2x8x8xf32>
    %103 = vector.shape_cast %101 : vector<2x8x8xf32> to vector<2x8x1x8xf32>
    %104 = vector.shape_cast %102 : vector<2x8x8xf32> to vector<2x1x8x8xf32>
    %105 = vector.broadcast %103 : vector<2x8x1x8xf32> to vector<2x8x8x8xf32>
    %106 = vector.broadcast %104 : vector<2x1x8x8xf32> to vector<2x8x8x8xf32>
    %107 = arith.mulf %105, %106 : vector<2x8x8x8xf32>
    %cst_27 = arith.constant dense<0.000000e+00> : vector<2x8x8xf32>
    %108 = vector.multi_reduction <add>, %107, %cst_27 [3] : vector<2x8x8x8xf32> to vector<2x8x8xf32>
    %cst_28 = arith.constant 0.353553385 : f32
    %109 = vector.broadcast %cst_28 : f32 to vector<2x8x8xf32>
    %110 = arith.mulf %108, %109 : vector<2x8x8xf32>
    %cst_29 = arith.constant dense<0xFF800000> : vector<2x8xf32>
    %111 = vector.multi_reduction <maximumf>, %110, %cst_29 [2] : vector<2x8x8xf32> to vector<2x8xf32>
    %112 = vector.shape_cast %111 : vector<2x8xf32> to vector<2x8x1xf32>
    %113 = vector.broadcast %112 : vector<2x8x1xf32> to vector<2x8x8xf32>
    %114 = arith.subf %110, %113 : vector<2x8x8xf32>
    %115 = math.exp %114 : vector<2x8x8xf32>
    %cst_30 = arith.constant dense<0.000000e+00> : vector<2x8xf32>
    %116 = vector.multi_reduction <add>, %115, %cst_30 [2] : vector<2x8x8xf32> to vector<2x8xf32>
    %117 = vector.shape_cast %116 : vector<2x8xf32> to vector<2x8x1xf32>
    %118 = tpu.reciprocal %117 {approx = true} : vector<2x8x1xf32> -> vector<2x8x1xf32>
    %119 = vector.broadcast %118 : vector<2x8x1xf32> to vector<2x8x8xf32>
    %120 = arith.mulf %115, %119 : vector<2x8x8xf32>
    %121 = vector.shape_cast %120 : vector<2x8x8xf32> to vector<2x8x8x1xf32>
    %cst_31 = arith.constant 0.000000e+00 : f32
    %122 = vector.shape_cast %38 : vector<1x1x1x32xi1> to vector<1x1x1x32xi1>
    %123 = vector.broadcast %122 : vector<1x1x1x32xi1> to vector<2x8x8x32xi1>
    %124 = vector.shape_cast %121 : vector<2x8x8x1xf32> to vector<2x8x8x1xf32>
    %125 = vector.broadcast %124 : vector<2x8x8x1xf32> to vector<2x8x8x32xf32>
    %126 = vector.broadcast %cst_31 : f32 to vector<2x8x8x32xf32>
    %127 = arith.select %123, %125, %126 : vector<2x8x8x32xi1>, vector<2x8x8x32xf32>
    %128 = arith.addf %100, %127 : vector<2x8x8x32xf32>
    %129 = vector.extract_strided_slice %70 {offsets = [0, 0, 16], sizes = [2, 8, 8], strides = [1, 1, 1]} : vector<2x8x96xf32> to vector<2x8x8xf32>
    %130 = vector.extract_strided_slice %70 {offsets = [0, 0, 48], sizes = [2, 8, 8], strides = [1, 1, 1]} : vector<2x8x96xf32> to vector<2x8x8xf32>
    %131 = vector.shape_cast %129 : vector<2x8x8xf32> to vector<2x8x1x8xf32>
    %132 = vector.shape_cast %130 : vector<2x8x8xf32> to vector<2x1x8x8xf32>
    %133 = vector.broadcast %131 : vector<2x8x1x8xf32> to vector<2x8x8x8xf32>
    %134 = vector.broadcast %132 : vector<2x1x8x8xf32> to vector<2x8x8x8xf32>
    %135 = arith.mulf %133, %134 : vector<2x8x8x8xf32>
    %cst_32 = arith.constant dense<0.000000e+00> : vector<2x8x8xf32>
    %136 = vector.multi_reduction <add>, %135, %cst_32 [3] : vector<2x8x8x8xf32> to vector<2x8x8xf32>
    %cst_33 = arith.constant 0.353553385 : f32
    %137 = vector.broadcast %cst_33 : f32 to vector<2x8x8xf32>
    %138 = arith.mulf %136, %137 : vector<2x8x8xf32>
    %cst_34 = arith.constant dense<0xFF800000> : vector<2x8xf32>
    %139 = vector.multi_reduction <maximumf>, %138, %cst_34 [2] : vector<2x8x8xf32> to vector<2x8xf32>
    %140 = vector.shape_cast %139 : vector<2x8xf32> to vector<2x8x1xf32>
    %141 = vector.broadcast %140 : vector<2x8x1xf32> to vector<2x8x8xf32>
    %142 = arith.subf %138, %141 : vector<2x8x8xf32>
    %143 = math.exp %142 : vector<2x8x8xf32>
    %cst_35 = arith.constant dense<0.000000e+00> : vector<2x8xf32>
    %144 = vector.multi_reduction <add>, %143, %cst_35 [2] : vector<2x8x8xf32> to vector<2x8xf32>
    %145 = vector.shape_cast %144 : vector<2x8xf32> to vector<2x8x1xf32>
    %146 = tpu.reciprocal %145 {approx = true} : vector<2x8x1xf32> -> vector<2x8x1xf32>
    %147 = vector.broadcast %146 : vector<2x8x1xf32> to vector<2x8x8xf32>
    %148 = arith.mulf %143, %147 : vector<2x8x8xf32>
    %149 = vector.shape_cast %148 : vector<2x8x8xf32> to vector<2x8x8x1xf32>
    %cst_36 = arith.constant 0.000000e+00 : f32
    %150 = vector.shape_cast %43 : vector<1x1x1x32xi1> to vector<1x1x1x32xi1>
    %151 = vector.broadcast %150 : vector<1x1x1x32xi1> to vector<2x8x8x32xi1>
    %152 = vector.shape_cast %149 : vector<2x8x8x1xf32> to vector<2x8x8x1xf32>
    %153 = vector.broadcast %152 : vector<2x8x8x1xf32> to vector<2x8x8x32xf32>
    %154 = vector.broadcast %cst_36 : f32 to vector<2x8x8x32xf32>
    %155 = arith.select %151, %153, %154 : vector<2x8x8x32xi1>, vector<2x8x8x32xf32>
    %156 = arith.addf %128, %155 : vector<2x8x8x32xf32>
    %157 = vector.extract_strided_slice %70 {offsets = [0, 0, 24], sizes = [2, 8, 8], strides = [1, 1, 1]} : vector<2x8x96xf32> to vector<2x8x8xf32>
    %158 = vector.extract_strided_slice %70 {offsets = [0, 0, 56], sizes = [2, 8, 8], strides = [1, 1, 1]} : vector<2x8x96xf32> to vector<2x8x8xf32>
    %159 = vector.shape_cast %157 : vector<2x8x8xf32> to vector<2x8x1x8xf32>
    %160 = vector.shape_cast %158 : vector<2x8x8xf32> to vector<2x1x8x8xf32>
    %161 = vector.broadcast %159 : vector<2x8x1x8xf32> to vector<2x8x8x8xf32>
    %162 = vector.broadcast %160 : vector<2x1x8x8xf32> to vector<2x8x8x8xf32>
    %163 = arith.mulf %161, %162 : vector<2x8x8x8xf32>
    %cst_37 = arith.constant dense<0.000000e+00> : vector<2x8x8xf32>
    %164 = vector.multi_reduction <add>, %163, %cst_37 [3] : vector<2x8x8x8xf32> to vector<2x8x8xf32>
    %cst_38 = arith.constant 0.353553385 : f32
    %165 = vector.broadcast %cst_38 : f32 to vector<2x8x8xf32>
    %166 = arith.mulf %164, %165 : vector<2x8x8xf32>
    %cst_39 = arith.constant dense<0xFF800000> : vector<2x8xf32>
    %167 = vector.multi_reduction <maximumf>, %166, %cst_39 [2] : vector<2x8x8xf32> to vector<2x8xf32>
    %168 = vector.shape_cast %167 : vector<2x8xf32> to vector<2x8x1xf32>
    %169 = vector.broadcast %168 : vector<2x8x1xf32> to vector<2x8x8xf32>
    %170 = arith.subf %166, %169 : vector<2x8x8xf32>
    %171 = math.exp %170 : vector<2x8x8xf32>
    %cst_40 = arith.constant dense<0.000000e+00> : vector<2x8xf32>
    %172 = vector.multi_reduction <add>, %171, %cst_40 [2] : vector<2x8x8xf32> to vector<2x8xf32>
    %173 = vector.shape_cast %172 : vector<2x8xf32> to vector<2x8x1xf32>
    %174 = tpu.reciprocal %173 {approx = true} : vector<2x8x1xf32> -> vector<2x8x1xf32>
    %175 = vector.broadcast %174 : vector<2x8x1xf32> to vector<2x8x8xf32>
    %176 = arith.mulf %171, %175 : vector<2x8x8xf32>
    %177 = vector.shape_cast %176 : vector<2x8x8xf32> to vector<2x8x8x1xf32>
    %cst_41 = arith.constant 0.000000e+00 : f32
    %178 = vector.shape_cast %48 : vector<1x1x1x32xi1> to vector<1x1x1x32xi1>
    %179 = vector.broadcast %178 : vector<1x1x1x32xi1> to vector<2x8x8x32xi1>
    %180 = vector.shape_cast %177 : vector<2x8x8x1xf32> to vector<2x8x8x1xf32>
    %181 = vector.broadcast %180 : vector<2x8x8x1xf32> to vector<2x8x8x32xf32>
    %182 = vector.broadcast %cst_41 : f32 to vector<2x8x8x32xf32>
    %183 = arith.select %179, %181, %182 : vector<2x8x8x32xi1>, vector<2x8x8x32xf32>
    %184 = arith.addf %156, %183 : vector<2x8x8x32xf32>
    %185 = vector.shape_cast %71 : vector<2x8x32xf32> to vector<2x1x8x32xf32>
    %186 = vector.broadcast %185 : vector<2x1x8x32xf32> to vector<2x8x8x32xf32>
    %187 = arith.mulf %184, %186 : vector<2x8x8x32xf32>
    %cst_42 = arith.constant dense<0.000000e+00> : vector<2x8x32xf32>
    %188 = vector.multi_reduction <add>, %187, %cst_42 [2] : vector<2x8x8x32xf32> to vector<2x8x32xf32>
    %189 = vector.shape_cast %188 : vector<2x8x32xf32> to vector<16x32xf32>
    %190 = vector.extract_strided_slice %50 {offsets = [0, 96], sizes = [32, 32], strides = [1, 1]} : vector<32x128xbf16> to vector<32x32xbf16>
    %191 = arith.truncf %189 : vector<16x32xf32> to vector<16x32xbf16>
    %cst_43 = arith.constant dense<0.000000e+00> : vector<16x32xf32>
    %192 = tpu.matmul %191, %190, %cst_43 {dimension_numbers = #tpu.dot_dimension_numbers<[1], [0], [0], [1], [0, 0, 1, 1], [], []>} : vector<16x32xbf16>, vector<32x32xbf16>, vector<16x32xf32> -> vector<16x32xf32>
    %193 = vector.broadcast %58 : vector<1x32xf32> to vector<16x32xf32>
    %194 = arith.addf %192, %193 : vector<16x32xf32>
    %195 = arith.addf %27, %194 : vector<16x32xf32>
    %cst_44 = arith.constant dense<0.000000e+00> : vector<16xf32>
    %196 = vector.multi_reduction <add>, %195, %cst_44 [1] : vector<16x32xf32> to vector<16xf32>
    %197 = vector.shape_cast %196 : vector<16xf32> to vector<16x1xf32>
    %cst_45 = arith.constant 3.200000e+01 : f32
    %198 = vector.broadcast %cst_45 : f32 to vector<16x1xf32>
    %199 = arith.divf %197, %198 : vector<16x1xf32>
    %200 = vector.broadcast %199 : vector<16x1xf32> to vector<16x32xf32>
    %201 = arith.subf %195, %200 : vector<16x32xf32>
    %202 = arith.mulf %201, %201 : vector<16x32xf32>
    %cst_46 = arith.constant dense<0.000000e+00> : vector<16xf32>
    %203 = vector.multi_reduction <add>, %202, %cst_46 [1] : vector<16x32xf32> to vector<16xf32>
    %204 = vector.shape_cast %203 : vector<16xf32> to vector<16x1xf32>
    %cst_47 = arith.constant 3.200000e+01 : f32
    %205 = vector.broadcast %cst_47 : f32 to vector<16x1xf32>
    %206 = arith.divf %204, %205 : vector<16x1xf32>
    %cst_48 = arith.constant 9.99999974E-6 : f32
    %207 = vector.broadcast %cst_48 : f32 to vector<16x1xf32>
    %208 = arith.addf %206, %207 : vector<16x1xf32>
    %209 = math.rsqrt %208 : vector<16x1xf32>
    %210 = vector.broadcast %209 : vector<16x1xf32> to vector<16x32xf32>
    %211 = arith.mulf %201, %210 : vector<16x32xf32>
    %212 = vector.broadcast %61 : vector<1x32xf32> to vector<16x32xf32>
    %213 = arith.mulf %211, %212 : vector<16x32xf32>
    %214 = vector.broadcast %62 : vector<1x32xf32> to vector<16x32xf32>
    %215 = arith.addf %213, %214 : vector<16x32xf32>
    %216 = arith.truncf %215 : vector<16x32xf32> to vector<16x32xbf16>
    %cst_49 = arith.constant dense<0.000000e+00> : vector<16x128xf32>
    %217 = tpu.matmul %216, %52, %cst_49 {dimension_numbers = #tpu.dot_dimension_numbers<[1], [0], [0], [1], [0, 0, 1, 1], [], []>} : vector<16x32xbf16>, vector<32x128xbf16>, vector<16x128xf32> -> vector<16x128xf32>
    %218 = vector.broadcast %59 : vector<1x128xf32> to vector<16x128xf32>
    %219 = arith.addf %217, %218 : vector<16x128xf32>
    %cst_50 = arith.constant 0.000000e+00 : f32
    %220 = vector.broadcast %cst_50 : f32 to vector<16x128xf32>
    %221 = arith.maximumf %219, %220 : vector<16x128xf32>
    %222 = arith.truncf %221 : vector<16x128xf32> to vector<16x128xbf16>
    %cst_51 = arith.constant dense<0.000000e+00> : vector<16x32xf32>
    %223 = tpu.matmul %222, %54, %cst_51 {dimension_numbers = #tpu.dot_dimension_numbers<[1], [0], [0], [1], [0, 0, 1, 1], [], []>} : vector<16x128xbf16>, vector<128x32xbf16>, vector<16x32xf32> -> vector<16x32xf32>
    %224 = vector.broadcast %60 : vector<1x32xf32> to vector<16x32xf32>
    %225 = arith.addf %223, %224 : vector<16x32xf32>
    %226 = arith.addf %215, %225 : vector<16x32xf32>
    %cst_52 = arith.constant dense<0.000000e+00> : vector<16xf32>
    %227 = vector.multi_reduction <add>, %226, %cst_52 [1] : vector<16x32xf32> to vector<16xf32>
    %228 = vector.shape_cast %227 : vector<16xf32> to vector<16x1xf32>
    %cst_53 = arith.constant 3.200000e+01 : f32
    %229 = vector.broadcast %cst_53 : f32 to vector<16x1xf32>
    %230 = arith.divf %228, %229 : vector<16x1xf32>
    %231 = vector.broadcast %230 : vector<16x1xf32> to vector<16x32xf32>
    %232 = arith.subf %226, %231 : vector<16x32xf32>
    %233 = arith.mulf %232, %232 : vector<16x32xf32>
    %cst_54 = arith.constant dense<0.000000e+00> : vector<16xf32>
    %234 = vector.multi_reduction <add>, %233, %cst_54 [1] : vector<16x32xf32> to vector<16xf32>
    %235 = vector.shape_cast %234 : vector<16xf32> to vector<16x1xf32>
    %cst_55 = arith.constant 3.200000e+01 : f32
    %236 = vector.broadcast %cst_55 : f32 to vector<16x1xf32>
    %237 = arith.divf %235, %236 : vector<16x1xf32>
    %cst_56 = arith.constant 9.99999974E-6 : f32
    %238 = vector.broadcast %cst_56 : f32 to vector<16x1xf32>
    %239 = arith.addf %237, %238 : vector<16x1xf32>
    %240 = math.rsqrt %239 : vector<16x1xf32>
    %241 = vector.broadcast %240 : vector<16x1xf32> to vector<16x32xf32>
    %242 = arith.mulf %232, %241 : vector<16x32xf32>
    %243 = vector.broadcast %63 : vector<1x32xf32> to vector<16x32xf32>
    %244 = arith.mulf %242, %243 : vector<16x32xf32>
    %245 = vector.broadcast %64 : vector<1x32xf32> to vector<16x32xf32>
    %246 = arith.addf %244, %245 : vector<16x32xf32>
    %c1 = arith.constant 1 : index
    %c0_57 = arith.constant 0 : index
    %c0_58 = arith.constant 0 : index
    %247 = vector.load %arg3[%c1, %c0_57, %c0_58] : memref<2x32x128xbf16, #tpu.memory_space<vmem>>, vector<1x32x128xbf16>
    %248 = vector.shape_cast %247 : vector<1x32x128xbf16> to vector<32x128xbf16>
    %c1_59 = arith.constant 1 : index
    %c0_60 = arith.constant 0 : index
    %c0_61 = arith.constant 0 : index
    %249 = vector.load %arg4[%c1_59, %c0_60, %c0_61] : memref<2x32x128xbf16, #tpu.memory_space<vmem>>, vector<1x32x128xbf16>
    %250 = vector.shape_cast %249 : vector<1x32x128xbf16> to vector<32x128xbf16>
    %c1_62 = arith.constant 1 : index
    %c0_63 = arith.constant 0 : index
    %c0_64 = arith.constant 0 : index
    %251 = vector.load %arg5[%c1_62, %c0_63, %c0_64] : memref<2x128x32xbf16, #tpu.memory_space<vmem>>, vector<1x128x32xbf16>
    %252 = vector.shape_cast %251 : vector<1x128x32xbf16> to vector<128x32xbf16>
    %c1_65 = arith.constant 1 : index
    %c0_66 = arith.constant 0 : index
    %c0_67 = arith.constant 0 : index
    %253 = vector.load %arg6[%c1_65, %c0_66, %c0_67] : memref<2x8x128xf32, #tpu.memory_space<vmem>>, vector<1x8x128xf32>
    %254 = vector.shape_cast %253 : vector<1x8x128xf32> to vector<8x128xf32>
    %255 = vector.extract_strided_slice %254 {offsets = [0, 0], sizes = [1, 96], strides = [1, 1]} : vector<8x128xf32> to vector<1x96xf32>
    %256 = vector.extract_strided_slice %254 {offsets = [0, 96], sizes = [1, 32], strides = [1, 1]} : vector<8x128xf32> to vector<1x32xf32>
    %257 = vector.extract_strided_slice %254 {offsets = [1, 0], sizes = [1, 128], strides = [1, 1]} : vector<8x128xf32> to vector<1x128xf32>
    %258 = vector.extract_strided_slice %254 {offsets = [2, 0], sizes = [1, 32], strides = [1, 1]} : vector<8x128xf32> to vector<1x32xf32>
    %259 = vector.extract_strided_slice %254 {offsets = [3, 0], sizes = [1, 32], strides = [1, 1]} : vector<8x128xf32> to vector<1x32xf32>
    %260 = vector.extract_strided_slice %254 {offsets = [4, 0], sizes = [1, 32], strides = [1, 1]} : vector<8x128xf32> to vector<1x32xf32>
    %261 = vector.extract_strided_slice %254 {offsets = [5, 0], sizes = [1, 32], strides = [1, 1]} : vector<8x128xf32> to vector<1x32xf32>
    %262 = vector.extract_strided_slice %254 {offsets = [6, 0], sizes = [1, 32], strides = [1, 1]} : vector<8x128xf32> to vector<1x32xf32>
    %263 = vector.extract_strided_slice %248 {offsets = [0, 0], sizes = [32, 96], strides = [1, 1]} : vector<32x128xbf16> to vector<32x96xbf16>
    %264 = arith.truncf %246 : vector<16x32xf32> to vector<16x32xbf16>
    %cst_68 = arith.constant dense<0.000000e+00> : vector<16x96xf32>
    %265 = tpu.matmul %264, %263, %cst_68 {dimension_numbers = #tpu.dot_dimension_numbers<[1], [0], [0], [1], [0, 0, 1, 1], [], []>} : vector<16x32xbf16>, vector<32x96xbf16>, vector<16x96xf32> -> vector<16x96xf32>
    %266 = vector.broadcast %255 : vector<1x96xf32> to vector<16x96xf32>
    %267 = arith.addf %265, %266 : vector<16x96xf32>
    %268 = vector.shape_cast %267 : vector<16x96xf32> to vector<2x8x96xf32>
    %269 = vector.extract_strided_slice %268 {offsets = [0, 0, 64], sizes = [2, 8, 32], strides = [1, 1, 1]} : vector<2x8x96xf32> to vector<2x8x32xf32>
    %cst_69 = arith.constant 0.000000e+00 : f32
    %270 = vector.broadcast %cst_69 : f32 to vector<2x8x8x32xf32>
    %271 = vector.extract_strided_slice %268 {offsets = [0, 0, 0], sizes = [2, 8, 8], strides = [1, 1, 1]} : vector<2x8x96xf32> to vector<2x8x8xf32>
    %272 = vector.extract_strided_slice %268 {offsets = [0, 0, 32], sizes = [2, 8, 8], strides = [1, 1, 1]} : vector<2x8x96xf32> to vector<2x8x8xf32>
    %273 = vector.shape_cast %271 : vector<2x8x8xf32> to vector<2x8x1x8xf32>
    %274 = vector.shape_cast %272 : vector<2x8x8xf32> to vector<2x1x8x8xf32>
    %275 = vector.broadcast %273 : vector<2x8x1x8xf32> to vector<2x8x8x8xf32>
    %276 = vector.broadcast %274 : vector<2x1x8x8xf32> to vector<2x8x8x8xf32>
    %277 = arith.mulf %275, %276 : vector<2x8x8x8xf32>
    %cst_70 = arith.constant dense<0.000000e+00> : vector<2x8x8xf32>
    %278 = vector.multi_reduction <add>, %277, %cst_70 [3] : vector<2x8x8x8xf32> to vector<2x8x8xf32>
    %cst_71 = arith.constant 0.353553385 : f32
    %279 = vector.broadcast %cst_71 : f32 to vector<2x8x8xf32>
    %280 = arith.mulf %278, %279 : vector<2x8x8xf32>
    %cst_72 = arith.constant dense<0xFF800000> : vector<2x8xf32>
    %281 = vector.multi_reduction <maximumf>, %280, %cst_72 [2] : vector<2x8x8xf32> to vector<2x8xf32>
    %282 = vector.shape_cast %281 : vector<2x8xf32> to vector<2x8x1xf32>
    %283 = vector.broadcast %282 : vector<2x8x1xf32> to vector<2x8x8xf32>
    %284 = arith.subf %280, %283 : vector<2x8x8xf32>
    %285 = math.exp %284 : vector<2x8x8xf32>
    %cst_73 = arith.constant dense<0.000000e+00> : vector<2x8xf32>
    %286 = vector.multi_reduction <add>, %285, %cst_73 [2] : vector<2x8x8xf32> to vector<2x8xf32>
    %287 = vector.shape_cast %286 : vector<2x8xf32> to vector<2x8x1xf32>
    %288 = tpu.reciprocal %287 {approx = true} : vector<2x8x1xf32> -> vector<2x8x1xf32>
    %289 = vector.broadcast %288 : vector<2x8x1xf32> to vector<2x8x8xf32>
    %290 = arith.mulf %285, %289 : vector<2x8x8xf32>
    %291 = vector.shape_cast %290 : vector<2x8x8xf32> to vector<2x8x8x1xf32>
    %cst_74 = arith.constant 0.000000e+00 : f32
    %292 = vector.shape_cast %33 : vector<1x1x1x32xi1> to vector<1x1x1x32xi1>
    %293 = vector.broadcast %292 : vector<1x1x1x32xi1> to vector<2x8x8x32xi1>
    %294 = vector.shape_cast %291 : vector<2x8x8x1xf32> to vector<2x8x8x1xf32>
    %295 = vector.broadcast %294 : vector<2x8x8x1xf32> to vector<2x8x8x32xf32>
    %296 = vector.broadcast %cst_74 : f32 to vector<2x8x8x32xf32>
    %297 = arith.select %293, %295, %296 : vector<2x8x8x32xi1>, vector<2x8x8x32xf32>
    %298 = arith.addf %270, %297 : vector<2x8x8x32xf32>
    %299 = vector.extract_strided_slice %268 {offsets = [0, 0, 8], sizes = [2, 8, 8], strides = [1, 1, 1]} : vector<2x8x96xf32> to vector<2x8x8xf32>
    %300 = vector.extract_strided_slice %268 {offsets = [0, 0, 40], sizes = [2, 8, 8], strides = [1, 1, 1]} : vector<2x8x96xf32> to vector<2x8x8xf32>
    %301 = vector.shape_cast %299 : vector<2x8x8xf32> to vector<2x8x1x8xf32>
    %302 = vector.shape_cast %300 : vector<2x8x8xf32> to vector<2x1x8x8xf32>
    %303 = vector.broadcast %301 : vector<2x8x1x8xf32> to vector<2x8x8x8xf32>
    %304 = vector.broadcast %302 : vector<2x1x8x8xf32> to vector<2x8x8x8xf32>
    %305 = arith.mulf %303, %304 : vector<2x8x8x8xf32>
    %cst_75 = arith.constant dense<0.000000e+00> : vector<2x8x8xf32>
    %306 = vector.multi_reduction <add>, %305, %cst_75 [3] : vector<2x8x8x8xf32> to vector<2x8x8xf32>
    %cst_76 = arith.constant 0.353553385 : f32
    %307 = vector.broadcast %cst_76 : f32 to vector<2x8x8xf32>
    %308 = arith.mulf %306, %307 : vector<2x8x8xf32>
    %cst_77 = arith.constant dense<0xFF800000> : vector<2x8xf32>
    %309 = vector.multi_reduction <maximumf>, %308, %cst_77 [2] : vector<2x8x8xf32> to vector<2x8xf32>
    %310 = vector.shape_cast %309 : vector<2x8xf32> to vector<2x8x1xf32>
    %311 = vector.broadcast %310 : vector<2x8x1xf32> to vector<2x8x8xf32>
    %312 = arith.subf %308, %311 : vector<2x8x8xf32>
    %313 = math.exp %312 : vector<2x8x8xf32>
    %cst_78 = arith.constant dense<0.000000e+00> : vector<2x8xf32>
    %314 = vector.multi_reduction <add>, %313, %cst_78 [2] : vector<2x8x8xf32> to vector<2x8xf32>
    %315 = vector.shape_cast %314 : vector<2x8xf32> to vector<2x8x1xf32>
    %316 = tpu.reciprocal %315 {approx = true} : vector<2x8x1xf32> -> vector<2x8x1xf32>
    %317 = vector.broadcast %316 : vector<2x8x1xf32> to vector<2x8x8xf32>
    %318 = arith.mulf %313, %317 : vector<2x8x8xf32>
    %319 = vector.shape_cast %318 : vector<2x8x8xf32> to vector<2x8x8x1xf32>
    %cst_79 = arith.constant 0.000000e+00 : f32
    %320 = vector.shape_cast %38 : vector<1x1x1x32xi1> to vector<1x1x1x32xi1>
    %321 = vector.broadcast %320 : vector<1x1x1x32xi1> to vector<2x8x8x32xi1>
    %322 = vector.shape_cast %319 : vector<2x8x8x1xf32> to vector<2x8x8x1xf32>
    %323 = vector.broadcast %322 : vector<2x8x8x1xf32> to vector<2x8x8x32xf32>
    %324 = vector.broadcast %cst_79 : f32 to vector<2x8x8x32xf32>
    %325 = arith.select %321, %323, %324 : vector<2x8x8x32xi1>, vector<2x8x8x32xf32>
    %326 = arith.addf %298, %325 : vector<2x8x8x32xf32>
    %327 = vector.extract_strided_slice %268 {offsets = [0, 0, 16], sizes = [2, 8, 8], strides = [1, 1, 1]} : vector<2x8x96xf32> to vector<2x8x8xf32>
    %328 = vector.extract_strided_slice %268 {offsets = [0, 0, 48], sizes = [2, 8, 8], strides = [1, 1, 1]} : vector<2x8x96xf32> to vector<2x8x8xf32>
    %329 = vector.shape_cast %327 : vector<2x8x8xf32> to vector<2x8x1x8xf32>
    %330 = vector.shape_cast %328 : vector<2x8x8xf32> to vector<2x1x8x8xf32>
    %331 = vector.broadcast %329 : vector<2x8x1x8xf32> to vector<2x8x8x8xf32>
    %332 = vector.broadcast %330 : vector<2x1x8x8xf32> to vector<2x8x8x8xf32>
    %333 = arith.mulf %331, %332 : vector<2x8x8x8xf32>
    %cst_80 = arith.constant dense<0.000000e+00> : vector<2x8x8xf32>
    %334 = vector.multi_reduction <add>, %333, %cst_80 [3] : vector<2x8x8x8xf32> to vector<2x8x8xf32>
    %cst_81 = arith.constant 0.353553385 : f32
    %335 = vector.broadcast %cst_81 : f32 to vector<2x8x8xf32>
    %336 = arith.mulf %334, %335 : vector<2x8x8xf32>
    %cst_82 = arith.constant dense<0xFF800000> : vector<2x8xf32>
    %337 = vector.multi_reduction <maximumf>, %336, %cst_82 [2] : vector<2x8x8xf32> to vector<2x8xf32>
    %338 = vector.shape_cast %337 : vector<2x8xf32> to vector<2x8x1xf32>
    %339 = vector.broadcast %338 : vector<2x8x1xf32> to vector<2x8x8xf32>
    %340 = arith.subf %336, %339 : vector<2x8x8xf32>
    %341 = math.exp %340 : vector<2x8x8xf32>
    %cst_83 = arith.constant dense<0.000000e+00> : vector<2x8xf32>
    %342 = vector.multi_reduction <add>, %341, %cst_83 [2] : vector<2x8x8xf32> to vector<2x8xf32>
    %343 = vector.shape_cast %342 : vector<2x8xf32> to vector<2x8x1xf32>
    %344 = tpu.reciprocal %343 {approx = true} : vector<2x8x1xf32> -> vector<2x8x1xf32>
    %345 = vector.broadcast %344 : vector<2x8x1xf32> to vector<2x8x8xf32>
    %346 = arith.mulf %341, %345 : vector<2x8x8xf32>
    %347 = vector.shape_cast %346 : vector<2x8x8xf32> to vector<2x8x8x1xf32>
    %cst_84 = arith.constant 0.000000e+00 : f32
    %348 = vector.shape_cast %43 : vector<1x1x1x32xi1> to vector<1x1x1x32xi1>
    %349 = vector.broadcast %348 : vector<1x1x1x32xi1> to vector<2x8x8x32xi1>
    %350 = vector.shape_cast %347 : vector<2x8x8x1xf32> to vector<2x8x8x1xf32>
    %351 = vector.broadcast %350 : vector<2x8x8x1xf32> to vector<2x8x8x32xf32>
    %352 = vector.broadcast %cst_84 : f32 to vector<2x8x8x32xf32>
    %353 = arith.select %349, %351, %352 : vector<2x8x8x32xi1>, vector<2x8x8x32xf32>
    %354 = arith.addf %326, %353 : vector<2x8x8x32xf32>
    %355 = vector.extract_strided_slice %268 {offsets = [0, 0, 24], sizes = [2, 8, 8], strides = [1, 1, 1]} : vector<2x8x96xf32> to vector<2x8x8xf32>
    %356 = vector.extract_strided_slice %268 {offsets = [0, 0, 56], sizes = [2, 8, 8], strides = [1, 1, 1]} : vector<2x8x96xf32> to vector<2x8x8xf32>
    %357 = vector.shape_cast %355 : vector<2x8x8xf32> to vector<2x8x1x8xf32>
    %358 = vector.shape_cast %356 : vector<2x8x8xf32> to vector<2x1x8x8xf32>
    %359 = vector.broadcast %357 : vector<2x8x1x8xf32> to vector<2x8x8x8xf32>
    %360 = vector.broadcast %358 : vector<2x1x8x8xf32> to vector<2x8x8x8xf32>
    %361 = arith.mulf %359, %360 : vector<2x8x8x8xf32>
    %cst_85 = arith.constant dense<0.000000e+00> : vector<2x8x8xf32>
    %362 = vector.multi_reduction <add>, %361, %cst_85 [3] : vector<2x8x8x8xf32> to vector<2x8x8xf32>
    %cst_86 = arith.constant 0.353553385 : f32
    %363 = vector.broadcast %cst_86 : f32 to vector<2x8x8xf32>
    %364 = arith.mulf %362, %363 : vector<2x8x8xf32>
    %cst_87 = arith.constant dense<0xFF800000> : vector<2x8xf32>
    %365 = vector.multi_reduction <maximumf>, %364, %cst_87 [2] : vector<2x8x8xf32> to vector<2x8xf32>
    %366 = vector.shape_cast %365 : vector<2x8xf32> to vector<2x8x1xf32>
    %367 = vector.broadcast %366 : vector<2x8x1xf32> to vector<2x8x8xf32>
    %368 = arith.subf %364, %367 : vector<2x8x8xf32>
    %369 = math.exp %368 : vector<2x8x8xf32>
    %cst_88 = arith.constant dense<0.000000e+00> : vector<2x8xf32>
    %370 = vector.multi_reduction <add>, %369, %cst_88 [2] : vector<2x8x8xf32> to vector<2x8xf32>
    %371 = vector.shape_cast %370 : vector<2x8xf32> to vector<2x8x1xf32>
    %372 = tpu.reciprocal %371 {approx = true} : vector<2x8x1xf32> -> vector<2x8x1xf32>
    %373 = vector.broadcast %372 : vector<2x8x1xf32> to vector<2x8x8xf32>
    %374 = arith.mulf %369, %373 : vector<2x8x8xf32>
    %375 = vector.shape_cast %374 : vector<2x8x8xf32> to vector<2x8x8x1xf32>
    %cst_89 = arith.constant 0.000000e+00 : f32
    %376 = vector.shape_cast %48 : vector<1x1x1x32xi1> to vector<1x1x1x32xi1>
    %377 = vector.broadcast %376 : vector<1x1x1x32xi1> to vector<2x8x8x32xi1>
    %378 = vector.shape_cast %375 : vector<2x8x8x1xf32> to vector<2x8x8x1xf32>
    %379 = vector.broadcast %378 : vector<2x8x8x1xf32> to vector<2x8x8x32xf32>
    %380 = vector.broadcast %cst_89 : f32 to vector<2x8x8x32xf32>
    %381 = arith.select %377, %379, %380 : vector<2x8x8x32xi1>, vector<2x8x8x32xf32>
    %382 = arith.addf %354, %381 : vector<2x8x8x32xf32>
    %383 = vector.shape_cast %269 : vector<2x8x32xf32> to vector<2x1x8x32xf32>
    %384 = vector.broadcast %383 : vector<2x1x8x32xf32> to vector<2x8x8x32xf32>
    %385 = arith.mulf %382, %384 : vector<2x8x8x32xf32>
    %cst_90 = arith.constant dense<0.000000e+00> : vector<2x8x32xf32>
    %386 = vector.multi_reduction <add>, %385, %cst_90 [2] : vector<2x8x8x32xf32> to vector<2x8x32xf32>
    %387 = vector.shape_cast %386 : vector<2x8x32xf32> to vector<16x32xf32>
    %388 = vector.extract_strided_slice %248 {offsets = [0, 96], sizes = [32, 32], strides = [1, 1]} : vector<32x128xbf16> to vector<32x32xbf16>
    %389 = arith.truncf %387 : vector<16x32xf32> to vector<16x32xbf16>
    %cst_91 = arith.constant dense<0.000000e+00> : vector<16x32xf32>
    %390 = tpu.matmul %389, %388, %cst_91 {dimension_numbers = #tpu.dot_dimension_numbers<[1], [0], [0], [1], [0, 0, 1, 1], [], []>} : vector<16x32xbf16>, vector<32x32xbf16>, vector<16x32xf32> -> vector<16x32xf32>
    %391 = vector.broadcast %256 : vector<1x32xf32> to vector<16x32xf32>
    %392 = arith.addf %390, %391 : vector<16x32xf32>
    %393 = arith.addf %246, %392 : vector<16x32xf32>
    %cst_92 = arith.constant dense<0.000000e+00> : vector<16xf32>
    %394 = vector.multi_reduction <add>, %393, %cst_92 [1] : vector<16x32xf32> to vector<16xf32>
    %395 = vector.shape_cast %394 : vector<16xf32> to vector<16x1xf32>
    %cst_93 = arith.constant 3.200000e+01 : f32
    %396 = vector.broadcast %cst_93 : f32 to vector<16x1xf32>
    %397 = arith.divf %395, %396 : vector<16x1xf32>
    %398 = vector.broadcast %397 : vector<16x1xf32> to vector<16x32xf32>
    %399 = arith.subf %393, %398 : vector<16x32xf32>
    %400 = arith.mulf %399, %399 : vector<16x32xf32>
    %cst_94 = arith.constant dense<0.000000e+00> : vector<16xf32>
    %401 = vector.multi_reduction <add>, %400, %cst_94 [1] : vector<16x32xf32> to vector<16xf32>
    %402 = vector.shape_cast %401 : vector<16xf32> to vector<16x1xf32>
    %cst_95 = arith.constant 3.200000e+01 : f32
    %403 = vector.broadcast %cst_95 : f32 to vector<16x1xf32>
    %404 = arith.divf %402, %403 : vector<16x1xf32>
    %cst_96 = arith.constant 9.99999974E-6 : f32
    %405 = vector.broadcast %cst_96 : f32 to vector<16x1xf32>
    %406 = arith.addf %404, %405 : vector<16x1xf32>
    %407 = math.rsqrt %406 : vector<16x1xf32>
    %408 = vector.broadcast %407 : vector<16x1xf32> to vector<16x32xf32>
    %409 = arith.mulf %399, %408 : vector<16x32xf32>
    %410 = vector.broadcast %259 : vector<1x32xf32> to vector<16x32xf32>
    %411 = arith.mulf %409, %410 : vector<16x32xf32>
    %412 = vector.broadcast %260 : vector<1x32xf32> to vector<16x32xf32>
    %413 = arith.addf %411, %412 : vector<16x32xf32>
    %414 = arith.truncf %413 : vector<16x32xf32> to vector<16x32xbf16>
    %cst_97 = arith.constant dense<0.000000e+00> : vector<16x128xf32>
    %415 = tpu.matmul %414, %250, %cst_97 {dimension_numbers = #tpu.dot_dimension_numbers<[1], [0], [0], [1], [0, 0, 1, 1], [], []>} : vector<16x32xbf16>, vector<32x128xbf16>, vector<16x128xf32> -> vector<16x128xf32>
    %416 = vector.broadcast %257 : vector<1x128xf32> to vector<16x128xf32>
    %417 = arith.addf %415, %416 : vector<16x128xf32>
    %cst_98 = arith.constant 0.000000e+00 : f32
    %418 = vector.broadcast %cst_98 : f32 to vector<16x128xf32>
    %419 = arith.maximumf %417, %418 : vector<16x128xf32>
    %420 = arith.truncf %419 : vector<16x128xf32> to vector<16x128xbf16>
    %cst_99 = arith.constant dense<0.000000e+00> : vector<16x32xf32>
    %421 = tpu.matmul %420, %252, %cst_99 {dimension_numbers = #tpu.dot_dimension_numbers<[1], [0], [0], [1], [0, 0, 1, 1], [], []>} : vector<16x128xbf16>, vector<128x32xbf16>, vector<16x32xf32> -> vector<16x32xf32>
    %422 = vector.broadcast %258 : vector<1x32xf32> to vector<16x32xf32>
    %423 = arith.addf %421, %422 : vector<16x32xf32>
    %424 = arith.addf %413, %423 : vector<16x32xf32>
    %cst_100 = arith.constant dense<0.000000e+00> : vector<16xf32>
    %425 = vector.multi_reduction <add>, %424, %cst_100 [1] : vector<16x32xf32> to vector<16xf32>
    %426 = vector.shape_cast %425 : vector<16xf32> to vector<16x1xf32>
    %cst_101 = arith.constant 3.200000e+01 : f32
    %427 = vector.broadcast %cst_101 : f32 to vector<16x1xf32>
    %428 = arith.divf %426, %427 : vector<16x1xf32>
    %429 = vector.broadcast %428 : vector<16x1xf32> to vector<16x32xf32>
    %430 = arith.subf %424, %429 : vector<16x32xf32>
    %431 = arith.mulf %430, %430 : vector<16x32xf32>
    %cst_102 = arith.constant dense<0.000000e+00> : vector<16xf32>
    %432 = vector.multi_reduction <add>, %431, %cst_102 [1] : vector<16x32xf32> to vector<16xf32>
    %433 = vector.shape_cast %432 : vector<16xf32> to vector<16x1xf32>
    %cst_103 = arith.constant 3.200000e+01 : f32
    %434 = vector.broadcast %cst_103 : f32 to vector<16x1xf32>
    %435 = arith.divf %433, %434 : vector<16x1xf32>
    %cst_104 = arith.constant 9.99999974E-6 : f32
    %436 = vector.broadcast %cst_104 : f32 to vector<16x1xf32>
    %437 = arith.addf %435, %436 : vector<16x1xf32>
    %438 = math.rsqrt %437 : vector<16x1xf32>
    %439 = vector.broadcast %438 : vector<16x1xf32> to vector<16x32xf32>
    %440 = arith.mulf %430, %439 : vector<16x32xf32>
    %441 = vector.broadcast %261 : vector<1x32xf32> to vector<16x32xf32>
    %442 = arith.mulf %440, %441 : vector<16x32xf32>
    %443 = vector.broadcast %262 : vector<1x32xf32> to vector<16x32xf32>
    %444 = arith.addf %442, %443 : vector<16x32xf32>
    %445 = vector.shape_cast %444 : vector<16x32xf32> to vector<2x8x32xf32>
    %cst_105 = arith.constant dense<0.000000e+00> : vector<2x32xf32>
    %446 = vector.multi_reduction <add>, %445, %cst_105 [1] : vector<2x8x32xf32> to vector<2x32xf32>
    %cst_106 = arith.constant 1.250000e-01 : f32
    %447 = vector.broadcast %cst_106 : f32 to vector<2x32xf32>
    %448 = arith.mulf %446, %447 : vector<2x32xf32>
    %c0_107 = arith.constant 0 : index
    %c0_108 = arith.constant 0 : index
    %449 = vector.load %arg7[%c0_107, %c0_108] : memref<32x32xbf16, #tpu.memory_space<vmem>>, vector<32x32xbf16>
    %450 = arith.truncf %448 : vector<2x32xf32> to vector<2x32xbf16>
    %cst_109 = arith.constant dense<0.000000e+00> : vector<2x32xf32>
    %451 = tpu.matmul %450, %449, %cst_109 {dimension_numbers = #tpu.dot_dimension_numbers<[1], [0], [0], [1], [0, 0, 1, 1], [], []>} : vector<2x32xbf16>, vector<32x32xbf16>, vector<2x32xf32> -> vector<2x32xf32>
    %c0_110 = arith.constant 0 : index
    %c0_111 = arith.constant 0 : index
    %452 = vector.load %arg8[%c0_110, %c0_111] : memref<1x32xf32, #tpu.memory_space<vmem>>, vector<1x32xf32>
    %453 = vector.broadcast %452 : vector<1x32xf32> to vector<2x32xf32>
    %454 = arith.addf %451, %453 : vector<2x32xf32>
    %455 = tpu.iota {dimensions = array<i32: 1>} : vector<2x32xi32>
    %c16_i32_112 = arith.constant 16 : i32
    %456 = vector.broadcast %c16_i32_112 : i32 to vector<2x32xi32>
    %457 = arith.cmpi slt, %455, %456 : vector<2x32xi32>
    %cst_113 = arith.constant -1.000000e+01 : f32
    %cst_114 = arith.constant 1.000000e+01 : f32
    %458 = vector.broadcast %cst_113 : f32 to vector<2x32xf32>
    %459 = arith.maximumf %458, %454 : vector<2x32xf32>
    %460 = vector.broadcast %cst_114 : f32 to vector<2x32xf32>
    %461 = arith.minimumf %460, %459 : vector<2x32xf32>
    %462 = arith.select %457, %454, %461 : vector<2x32xi1>, vector<2x32xf32>
    %c0_115 = arith.constant 0 : index
    %c0_116 = arith.constant 0 : index
    %463 = vector.load %arg9[%c0_115, %c0_116] : memref<2x32xf32, #tpu.memory_space<vmem>>, vector<2x32xf32>
    tpu.vector_store %arg9[%c0_115, %c0_116], %462 {strides = array<i32>} : memref<2x32xf32, #tpu.memory_space<vmem>>, vector<2x32xf32>,
    return
  }
}

</mosaic_0001>

<llo_original>
// kernel: tpu_custom_call.1
$region0: #{tpu_custom_call.1}
  #allocation0 [shape = 'u32[]', space=smem, size = 0x4, offset = 0x4, fixed_abs, tag = 'smem constant byte address 0x4 - core index']
  #allocation1 [shape = 'u32[72,128]{1,0:T(1,128)}', space=vmem, size = 0x9000, scoped, tag = 'internal scratch']
  %s0 = inlined_call_operand.vmem [shape: f32[2,8,3], index: 0, kind: input, shape index: {}]
  %s1 = inlined_call_operand.vmem [shape: f32[3,32], index: 1, kind: input, shape index: {}]
  %s2 = inlined_call_operand.vmem [shape: f32[8,32], index: 2, kind: input, shape index: {}]
  %s3 = inlined_call_operand.vmem [shape: bf16[2,32,128], index: 3, kind: input, shape index: {}]
  %s4 = inlined_call_operand.vmem [shape: bf16[2,32,128], index: 4, kind: input, shape index: {}]
  %s5 = inlined_call_operand.vmem [shape: bf16[2,128,32], index: 5, kind: input, shape index: {}]
  %s6 = inlined_call_operand.vmem [shape: f32[2,8,128], index: 6, kind: input, shape index: {}]
  %s7 = inlined_call_operand.vmem [shape: bf16[32,32], index: 7, kind: input, shape index: {}]
  %s8 = inlined_call_operand.vmem [shape: f32[1,32], index: 8, kind: input, shape index: {}]
  %s9 = inlined_call_operand.hbm [shape: f32[2,32], index: 9, kind: output, shape index: {}]
  %s10 = sld [smem:[#allocation0]]
  $region46: #{tpu_custom_call.1} parent=0
    _
  %s12 = ssub.s32 1, %s10
  %s13 = scalar_select 0, %s12, %s10
  $region1: #{tpu_custom_call.1} parent=0
    #allocation2 [shape = 'u8[1024]{0}', space=vmem, size = 0x400, scoped, tag = 'output window, operand 0, single buffered']
    #allocation3 [shape = 's32[1]{0}', space=sflag, size = 0x4, scoped, tag = 'scoped memory for tpu_custom_call.1']
    %14 = vsyncpa [#allocation3], 0
    // Predicated region
    $region2: #{tpu_custom_call.1} parent=1 // pred_check
      _
    $region3: #{tpu_custom_call.1} parent=1 // pred_check_branch
      %16 = sbr.rel (0) target = $region5
    $region4: #{tpu_custom_call.1} parent=1 // pred_region
      _
    $region5: #{tpu_custom_call.1} parent=1 // pred_fallthru
      _
    // Predicated region
    $region6: #{tpu_custom_call.1} parent=1 // pred_check
      _
    $region7: #{tpu_custom_call.1} parent=1 // pred_check_branch
      %18 = sbr.rel (0) target = $region9
    $region8: #{tpu_custom_call.1} parent=1 // pred_region
      _
    $region9: #{tpu_custom_call.1} parent=1 // pred_fallthru
      _
    // Predicated region
    $region10: #{tpu_custom_call.1} parent=1 // pred_check
      _
    $region11: #{tpu_custom_call.1} parent=1 // pred_check_branch
      %20 = sbr.rel (0) target = $region13
    $region12: #{tpu_custom_call.1} parent=1 // pred_region
      _
    $region13: #{tpu_custom_call.1} parent=1 // pred_fallthru
      _
    // Predicated region
    $region14: #{tpu_custom_call.1} parent=1 // pred_check
      _
    $region15: #{tpu_custom_call.1} parent=1 // pred_check_branch
      %22 = sbr.rel (0) target = $region17
    $region16: #{tpu_custom_call.1} parent=1 // pred_region
      _
    $region17: #{tpu_custom_call.1} parent=1 // pred_fallthru
      _
    // Predicated region
    $region18: #{tpu_custom_call.1} parent=1 // pred_check
      _
    $region19: #{tpu_custom_call.1} parent=1 // pred_check_branch
      %24 = sbr.rel (0) target = $region21
    $region20: #{tpu_custom_call.1} parent=1 // pred_region
      _
    $region21: #{tpu_custom_call.1} parent=1 // pred_fallthru
      _
    // Predicated region
    $region22: #{tpu_custom_call.1} parent=1 // pred_check
      _
    $region23: #{tpu_custom_call.1} parent=1 // pred_check_branch
      %26 = sbr.rel (0) target = $region25
    $region24: #{tpu_custom_call.1} parent=1 // pred_region
      _
    $region25: #{tpu_custom_call.1} parent=1 // pred_fallthru
      _
    // Predicated region
    $region26: #{tpu_custom_call.1} parent=1 // pred_check
      _
    $region27: #{tpu_custom_call.1} parent=1 // pred_check_branch
      %28 = sbr.rel (0) target = $region29
    $region28: #{tpu_custom_call.1} parent=1 // pred_region
      _
    $region29: #{tpu_custom_call.1} parent=1 // pred_fallthru
      _
    // Predicated region
    $region30: #{tpu_custom_call.1} parent=1 // pred_check
      _
    $region31: #{tpu_custom_call.1} parent=1 // pred_check_branch
      %30 = sbr.rel (0) target = $region33
    $region32: #{tpu_custom_call.1} parent=1 // pred_region
      _
    $region33: #{tpu_custom_call.1} parent=1 // pred_fallthru
      _
    // Predicated region
    $region34: #{tpu_custom_call.1} parent=1 // pred_check
      _
    $region35: #{tpu_custom_call.1} parent=1 // pred_check_branch
      %32 = sbr.rel (0) target = $region37
    $region36: #{tpu_custom_call.1} parent=1 // pred_region
      _
    $region37: #{tpu_custom_call.1} parent=1 // pred_fallthru
      _
    %v34 = vld [vmem:[%s0] sm:$0xff]
    %v35 = vld [vmem:[%s0 + $0x8] sm:$0xff]
    %v36 = vld [vmem:[%s1] sm:$0x7]
    %v37 = vld [vmem:[%s2] sm:$0xff]
    %39 = vset.pattern.permute.xlu0 0
    %40 = vperm.xlu0 %39, %v34
    %v41 = vpop.permute.xlu0 %40
    %44 = vset.pattern.permute.xlu0 0
    %45 = vperm.xlu0 %44, %v35
    %v46 = vpop.permute.xlu0 %45
    %v48 = vperm.slane %v36, 0
    %v49 = vmul.f32 %v41, %v48
    %v50 = vmul.f32 %v46, %v48
    %v51 = vadd.f32 %v37, %v49
    %v52 = vadd.f32 %v37, %v50
    %53 = vset.pattern.permute.xlu0 1
    %54 = vperm.xlu0 %53, %v34
    %v55 = vpop.permute.xlu0 %54
    %57 = vset.pattern.permute.xlu0 1
    %58 = vperm.xlu0 %57, %v35
    %v59 = vpop.permute.xlu0 %58
    %v61 = vperm.slane %v36, 1
    %v62 = vmul.f32 %v55, %v61
    %v63 = vmul.f32 %v59, %v61
    %v64 = vadd.f32 %v51, %v62
    %v65 = vadd.f32 %v52, %v63
    %66 = vset.pattern.permute.xlu0 2
    %67 = vperm.xlu0 %66, %v34
    %v68 = vpop.permute.xlu0 %67
    %70 = vset.pattern.permute.xlu0 2
    %71 = vperm.xlu0 %70, %v35
    %v72 = vpop.permute.xlu0 %71
    %v74 = vperm.slane %v36, 2
    %v75 = vmul.f32 %v68, %v74
    %v76 = vmul.f32 %v72, %v74
    %v77 = vadd.f32 %v64, %v75
    %v78 = vadd.f32 %v65, %v76
    %v79 = vlaneseq
    %v80 = vand.u32 %v79, 127
    %vm81 = vcmp.ge.s32.totalorder %v80, 0
    %vm82 = vcmp.lt.s32.totalorder %v80, 8
    %vm83 = vmand %vm81, %vm82
    %vm84 = vcmp.ge.s32.totalorder %v80, 8
    %vm85 = vcmp.lt.s32.totalorder %v80, 16
    %vm86 = vmand %vm84, %vm85
    %vm87 = vcmp.ge.s32.totalorder %v80, 16
    %vm88 = vcmp.lt.s32.totalorder %v80, 24
    %vm89 = vmand %vm87, %vm88
    %vm90 = vcmp.ge.s32.totalorder %v80, 24
    %vm91 = vcmp.lt.s32.totalorder %v80, 32
    %vm92 = vmand %vm90, %vm91
    %v93 = vld [vmem:[%s3] sm:$0xf]
    %v94 = vld [vmem:[%s3 + $0x4] sm:$0xf]
    %v95 = vld [vmem:[%s3 + $0x8] sm:$0xf]
    %v96 = vld [vmem:[%s3 + $0xc] sm:$0xf]
    %v97 = vld [vmem:[%s4] sm:$0xf]
    %v98 = vld [vmem:[%s4 + $0x4] sm:$0xf]
    %v99 = vld [vmem:[%s4 + $0x8] sm:$0xf]
    %v100 = vld [vmem:[%s4 + $0xc] sm:$0xf]
    %v101 = vld [vmem:[%s5] sm:$0xf]
    %v102 = vld [vmem:[%s5 + $0x4] sm:$0xf]
    %v103 = vld [vmem:[%s5 + $0x8] sm:$0xf]
    %v104 = vld [vmem:[%s5 + $0xc] sm:$0xf]
    %v105 = vld [vmem:[%s5 + $0x10] sm:$0xf]
    %v106 = vld [vmem:[%s5 + $0x14] sm:$0xf]
    %v107 = vld [vmem:[%s5 + $0x18] sm:$0xf]
    %v108 = vld [vmem:[%s5 + $0x1c] sm:$0xf]
    %v109 = vld [vmem:[%s5 + $0x20] sm:$0xf]
    %v110 = vld [vmem:[%s5 + $0x24] sm:$0xf]
    %v111 = vld [vmem:[%s5 + $0x28] sm:$0xf]
    %v112 = vld [vmem:[%s5 + $0x2c] sm:$0xf]
    %v113 = vld [vmem:[%s5 + $0x30] sm:$0xf]
    %v114 = vld [vmem:[%s5 + $0x34] sm:$0xf]
    %v115 = vld [vmem:[%s5 + $0x38] sm:$0xf]
    %v116 = vld [vmem:[%s5 + $0x3c] sm:$0xf]
    %v117 = vld [vmem:[%s6] sm:$0xff]
    %v118 = vpack.c.bf16 %v78, %v77
    %v119 = vperm.slane %v117, 0
    %v124 = vunpack.c.l.b16 %v93
    %v125 = vunpack.c.l.b16 %v94
    %v126 = vunpack.c.l.b16 %v95
    %v127 = vunpack.c.l.b16 %v96
    %v128 = vpack.c.b16 %v125, %v124
    %v129 = vpack.c.b16 %v127, %v126
    %vm132 = vcmask 261120
    %v134 = vsel %vm132, %v118, 0
    %136 = vmatpush.bf16.msra.mxu0 0
    %137 = vmatpush.bf16.msra.mxu0 0
    %138 = vmatpush.bf16.msra.mxu0 0
    %139 = vmatpush.bf16.msra.mxu0 0
    %140 = vmatpush.bf16.msra.mxu0 0
    %141 = vmatpush.bf16.msra.mxu0 0
    %142 = vmatpush.bf16.msra.mxu0 %v129
    %143 = vmatpush.bf16.msra.mxu0 %v128
    %144 = vmatmul.bf16.gmra.mxu0 %v134
    %v145 = vpop.f32.mrf.mxu0
    %v146 = vadd.f32 %v119, %v145
    %v147 = vpop.f32.mrf.mxu0
    %v148 = vadd.f32 %v119, %v147
    %149 = vdwg.mxu0
    %v152 = vrot.slane %v146, 1
    %v153 = vrot.slane %v146, 2
    %v154 = vrot.slane %v146, 3
    %v155 = vrot.slane %v146, 4
    %v156 = vrot.slane %v146, 5
    %v157 = vrot.slane %v146, 6
    %v158 = vrot.slane %v146, 7
    %v159 = vrot.slane %v148, 1
    %v160 = vrot.slane %v148, 2
    %v161 = vrot.slane %v148, 3
    %v162 = vrot.slane %v148, 4
    %v163 = vrot.slane %v148, 5
    %v164 = vrot.slane %v148, 6
    %v165 = vrot.slane %v148, 7
    %v166 = vperm.slane %v146, 0
    %v167 = vperm.slane %v152, 0
    %v168 = vperm.slane %v153, 0
    %v169 = vperm.slane %v154, 0
    %v170 = vperm.slane %v155, 0
    %v171 = vperm.slane %v156, 0
    %v172 = vperm.slane %v157, 0
    %v173 = vperm.slane %v158, 0
    %v174 = vperm.slane %v148, 0
    %v175 = vperm.slane %v159, 0
    %v176 = vperm.slane %v160, 0
    %v177 = vperm.slane %v161, 0
    %v178 = vperm.slane %v162, 0
    %v179 = vperm.slane %v163, 0
    %v180 = vperm.slane %v164, 0
    %v181 = vperm.slane %v165, 0
    %198 = vrot.lane.b32.xlu0 %v146, 96
    %v199 = vpop.permute.xlu0 %198
    %200 = vrot.lane.b32.xlu0 %v148, 96
    %v201 = vpop.permute.xlu0 %200
    %v204 = vmul.f32 %v166, %v199
    %v205 = vmul.f32 %v167, %v199
    %v206 = vmul.f32 %v168, %v199
    %v207 = vmul.f32 %v169, %v199
    %v208 = vmul.f32 %v170, %v199
    %v209 = vmul.f32 %v171, %v199
    %v210 = vmul.f32 %v172, %v199
    %v211 = vmul.f32 %v173, %v199
    %v212 = vmul.f32 %v174, %v201
    %v213 = vmul.f32 %v175, %v201
    %v214 = vmul.f32 %v176, %v201
    %v215 = vmul.f32 %v177, %v201
    %v216 = vmul.f32 %v178, %v201
    %v217 = vmul.f32 %v179, %v201
    %v218 = vmul.f32 %v180, %v201
    %v219 = vmul.f32 %v181, %v201
    %vm220 = vcmask 64512
    %v221 = vsel %vm220, %v204, 0.0
    %222 = vadd.xlane.f32.xlu0 %v221
    %v223 = vpop.xlane.xlu0 %222
    %v224 = vsel %vm220, %v205, 0.0
    %225 = vadd.xlane.f32.xlu0 %v224
    %v226 = vpop.xlane.xlu0 %225
    %v227 = vsel %vm220, %v206, 0.0
    %228 = vadd.xlane.f32.xlu0 %v227
    %v229 = vpop.xlane.xlu0 %228
    %v230 = vsel %vm220, %v207, 0.0
    %231 = vadd.xlane.f32.xlu0 %v230
    %v232 = vpop.xlane.xlu0 %231
    %v233 = vsel %vm220, %v208, 0.0
    %234 = vadd.xlane.f32.xlu0 %v233
    %v235 = vpop.xlane.xlu0 %234
    %v236 = vsel %vm220, %v209, 0.0
    %237 = vadd.xlane.f32.xlu0 %v236
    %v238 = vpop.xlane.xlu0 %237
    %v239 = vsel %vm220, %v210, 0.0
    %240 = vadd.xlane.f32.xlu0 %v239
    %v241 = vpop.xlane.xlu0 %240
    %v242 = vsel %vm220, %v211, 0.0
    %243 = vadd.xlane.f32.xlu0 %v242
    %v244 = vpop.xlane.xlu0 %243
    %v245 = vsel %vm220, %v212, 0.0
    %246 = vadd.xlane.f32.xlu0 %v245
    %v247 = vpop.xlane.xlu0 %246
    %v248 = vsel %vm220, %v213, 0.0
    %249 = vadd.xlane.f32.xlu0 %v248
    %v250 = vpop.xlane.xlu0 %249
    %v251 = vsel %vm220, %v214, 0.0
    %252 = vadd.xlane.f32.xlu0 %v251
    %v253 = vpop.xlane.xlu0 %252
    %v254 = vsel %vm220, %v215, 0.0
    %255 = vadd.xlane.f32.xlu0 %v254
    %v256 = vpop.xlane.xlu0 %255
    %v257 = vsel %vm220, %v216, 0.0
    %258 = vadd.xlane.f32.xlu0 %v257
    %v259 = vpop.xlane.xlu0 %258
    %v260 = vsel %vm220, %v217, 0.0
    %261 = vadd.xlane.f32.xlu0 %v260
    %v262 = vpop.xlane.xlu0 %261
    %v263 = vsel %vm220, %v218, 0.0
    %264 = vadd.xlane.f32.xlu0 %v263
    %v265 = vpop.xlane.xlu0 %264
    %v266 = vsel %vm220, %v219, 0.0
    %267 = vadd.xlane.f32.xlu0 %v266
    %v268 = vpop.xlane.xlu0 %267
    %v269 = vmul.f32 %v223, 0.35355338
    %v270 = vmul.f32 %v226, 0.35355338
    %v271 = vmul.f32 %v229, 0.35355338
    %v272 = vmul.f32 %v232, 0.35355338
    %v273 = vmul.f32 %v235, 0.35355338
    %v274 = vmul.f32 %v238, 0.35355338
    %v275 = vmul.f32 %v241, 0.35355338
    %v276 = vmul.f32 %v244, 0.35355338
    %v277 = vmul.f32 %v247, 0.35355338
    %v278 = vmul.f32 %v250, 0.35355338
    %v279 = vmul.f32 %v253, 0.35355338
    %v280 = vmul.f32 %v256, 0.35355338
    %v281 = vmul.f32 %v259, 0.35355338
    %v282 = vmul.f32 %v262, 0.35355338
    %v283 = vmul.f32 %v265, 0.35355338
    %v284 = vmul.f32 %v268, 0.35355338
    %v301 = vperm.slane %v269, %v80
    %v302 = vperm.slane %v270, %v80
    %v303 = vperm.slane %v271, %v80
    %v304 = vperm.slane %v272, %v80
    %v305 = vperm.slane %v273, %v80
    %v306 = vperm.slane %v274, %v80
    %v307 = vperm.slane %v275, %v80
    %v308 = vperm.slane %v276, %v80
    %v309 = vperm.slane %v277, %v80
    %v310 = vperm.slane %v278, %v80
    %v311 = vperm.slane %v279, %v80
    %v312 = vperm.slane %v280, %v80
    %v313 = vperm.slane %v281, %v80
    %v314 = vperm.slane %v282, %v80
    %v315 = vperm.slane %v283, %v80
    %v316 = vperm.slane %v284, %v80
    %vm317 = vcmask 1041409
    %v318 = vsel %vm317, %v302, %v301
    %vm319 = vcmask 1042434
    %v320 = vsel %vm319, %v303, %v318
    %vm321 = vcmask 1043459
    %v322 = vsel %vm321, %v304, %v320
    %vm323 = vcmask 1044484
    %v324 = vsel %vm323, %v305, %v322
    %vm325 = vcmask 1045509
    %v326 = vsel %vm325, %v306, %v324
    %vm327 = vcmask 1046534
    %v328 = vsel %vm327, %v307, %v326
    %vm329 = vcmask 1047559
    %v330 = vsel %vm329, %v308, %v328
    %v331 = vsel %vm317, %v310, %v309
    %v332 = vsel %vm319, %v311, %v331
    %v333 = vsel %vm321, %v312, %v332
    %v334 = vsel %vm323, %v313, %v333
    %v335 = vsel %vm325, %v314, %v334
    %v336 = vsel %vm327, %v315, %v335
    %v337 = vsel %vm329, %v316, %v336
    %v340 = vsel %vm220, %v330, -inf
    %341 = vmax.xlane.f32.xlu0 %v340
    %v342 = vpop.xlane.xlu0 %341
    %v343 = vsel %vm220, %v337, -inf
    %344 = vmax.xlane.f32.xlu0 %v343
    %v345 = vpop.xlane.xlu0 %344
    %v348 = vperm.slane %v342, 0
    %v349 = vperm.slane %v342, 1
    %v350 = vperm.slane %v342, 2
    %v351 = vperm.slane %v342, 3
    %v352 = vperm.slane %v342, 4
    %v353 = vperm.slane %v342, 5
    %v354 = vperm.slane %v342, 6
    %v355 = vperm.slane %v342, 7
    %v356 = vperm.slane %v345, 0
    %v357 = vperm.slane %v345, 1
    %v358 = vperm.slane %v345, 2
    %v359 = vperm.slane %v345, 3
    %v360 = vperm.slane %v345, 4
    %v361 = vperm.slane %v345, 5
    %v362 = vperm.slane %v345, 6
    %v363 = vperm.slane %v345, 7
    %v380 = vsub.f32 %v269, %v348
    %v381 = vsub.f32 %v270, %v349
    %v382 = vsub.f32 %v271, %v350
    %v383 = vsub.f32 %v272, %v351
    %v384 = vsub.f32 %v273, %v352
    %v385 = vsub.f32 %v274, %v353
    %v386 = vsub.f32 %v275, %v354
    %v387 = vsub.f32 %v276, %v355
    %v388 = vsub.f32 %v277, %v356
    %v389 = vsub.f32 %v278, %v357
    %v390 = vsub.f32 %v279, %v358
    %v391 = vsub.f32 %v280, %v359
    %v392 = vsub.f32 %v281, %v360
    %v393 = vsub.f32 %v282, %v361
    %v394 = vsub.f32 %v283, %v362
    %v395 = vsub.f32 %v284, %v363
    %v396 = vmul.f32 %v380, 1.442695
    %v397 = vpow.pop %v396
    %v398 = vmul.f32 %v381, 1.442695
    %v399 = vpow.pop %v398
    %v400 = vmul.f32 %v382, 1.442695
    %v401 = vpow.pop %v400
    %v402 = vmul.f32 %v383, 1.442695
    %v403 = vpow.pop %v402
    %v404 = vmul.f32 %v384, 1.442695
    %v405 = vpow.pop %v404
    %v406 = vmul.f32 %v385, 1.442695
    %v407 = vpow.pop %v406
    %v408 = vmul.f32 %v386, 1.442695
    %v409 = vpow.pop %v408
    %v410 = vmul.f32 %v387, 1.442695
    %v411 = vpow.pop %v410
    %v412 = vmul.f32 %v388, 1.442695
    %v413 = vpow.pop %v412
    %v414 = vmul.f32 %v389, 1.442695
    %v415 = vpow.pop %v414
    %v416 = vmul.f32 %v390, 1.442695
    %v417 = vpow.pop %v416
    %v418 = vmul.f32 %v391, 1.442695
    %v419 = vpow.pop %v418
    %v420 = vmul.f32 %v392, 1.442695
    %v421 = vpow.pop %v420
    %v422 = vmul.f32 %v393, 1.442695
    %v423 = vpow.pop %v422
    %v424 = vmul.f32 %v394, 1.442695
    %v425 = vpow.pop %v424
    %v426 = vmul.f32 %v395, 1.442695
    %v427 = vpow.pop %v426
    %444 = vset.pattern.permute.xlu0 0
    %445 = vperm.xlu0 %444, %v397
    %v446 = vpop.permute.xlu0 %445
    %447 = vset.pattern.permute.xlu0 0
    %448 = vperm.xlu0 %447, %v399
    %v449 = vpop.permute.xlu0 %448
    %450 = vset.pattern.permute.xlu0 0
    %451 = vperm.xlu0 %450, %v401
    %v452 = vpop.permute.xlu0 %451
    %453 = vset.pattern.permute.xlu0 0
    %454 = vperm.xlu0 %453, %v403
    %v455 = vpop.permute.xlu0 %454
    %456 = vset.pattern.permute.xlu0 0
    %457 = vperm.xlu0 %456, %v405
    %v458 = vpop.permute.xlu0 %457
    %459 = vset.pattern.permute.xlu0 0
    %460 = vperm.xlu0 %459, %v407
    %v461 = vpop.permute.xlu0 %460
    %462 = vset.pattern.permute.xlu0 0
    %463 = vperm.xlu0 %462, %v409
    %v464 = vpop.permute.xlu0 %463
    %465 = vset.pattern.permute.xlu0 0
    %466 = vperm.xlu0 %465, %v411
    %v467 = vpop.permute.xlu0 %466
    %468 = vset.pattern.permute.xlu0 0
    %469 = vperm.xlu0 %468, %v413
    %v470 = vpop.permute.xlu0 %469
    %471 = vset.pattern.permute.xlu0 0
    %472 = vperm.xlu0 %471, %v415
    %v473 = vpop.permute.xlu0 %472
    %474 = vset.pattern.permute.xlu0 0
    %475 = vperm.xlu0 %474, %v417
    %v476 = vpop.permute.xlu0 %475
    %477 = vset.pattern.permute.xlu0 0
    %478 = vperm.xlu0 %477, %v419
    %v479 = vpop.permute.xlu0 %478
    %480 = vset.pattern.permute.xlu0 0
    %481 = vperm.xlu0 %480, %v421
    %v482 = vpop.permute.xlu0 %481
    %483 = vset.pattern.permute.xlu0 0
    %484 = vperm.xlu0 %483, %v423
    %v485 = vpop.permute.xlu0 %484
    %486 = vset.pattern.permute.xlu0 0
    %487 = vperm.xlu0 %486, %v425
    %v488 = vpop.permute.xlu0 %487
    %489 = vset.pattern.permute.xlu0 0
    %490 = vperm.xlu0 %489, %v427
    %v491 = vpop.permute.xlu0 %490
    %v492 = vperm.slane %v446, %v80
    %v493 = vperm.slane %v449, %v80
    %v494 = vperm.slane %v452, %v80
    %v495 = vperm.slane %v455, %v80
    %v496 = vperm.slane %v458, %v80
    %v497 = vperm.slane %v461, %v80
    %v498 = vperm.slane %v464, %v80
    %v499 = vperm.slane %v467, %v80
    %v500 = vperm.slane %v470, %v80
    %v501 = vperm.slane %v473, %v80
    %v502 = vperm.slane %v476, %v80
    %v503 = vperm.slane %v479, %v80
    %v504 = vperm.slane %v482, %v80
    %v505 = vperm.slane %v485, %v80
    %v506 = vperm.slane %v488, %v80
    %v507 = vperm.slane %v491, %v80
    %v508 = vsel %vm317, %v493, %v492
    %v509 = vsel %vm319, %v494, %v508
    %v510 = vsel %vm321, %v495, %v509
    %v511 = vsel %vm323, %v496, %v510
    %v512 = vsel %vm325, %v497, %v511
    %v513 = vsel %vm327, %v498, %v512
    %v514 = vsel %vm329, %v499, %v513
    %v515 = vsel %vm317, %v501, %v500
    %v516 = vsel %vm319, %v502, %v515
    %v517 = vsel %vm321, %v503, %v516
    %v518 = vsel %vm323, %v504, %v517
    %v519 = vsel %vm325, %v505, %v518
    %v520 = vsel %vm327, %v506, %v519
    %v521 = vsel %vm329, %v507, %v520
    %v524 = vsel %vm220, %v514, 0.0
    %525 = vadd.xlane.f32.xlu0 %v524
    %v526 = vpop.xlane.xlu0 %525
    %v527 = vsel %vm220, %v521, 0.0
    %528 = vadd.xlane.f32.xlu0 %v527
    %v529 = vpop.xlane.xlu0 %528
    %v530 = vrcp.pop %v526
    %v531 = vrcp.pop %v529
    %v534 = vperm.slane %v530, 0
    %v535 = vperm.slane %v530, 1
    %v536 = vperm.slane %v530, 2
    %v537 = vperm.slane %v530, 3
    %v538 = vperm.slane %v530, 4
    %v539 = vperm.slane %v530, 5
    %v540 = vperm.slane %v530, 6
    %v541 = vperm.slane %v530, 7
    %v542 = vperm.slane %v531, 0
    %v543 = vperm.slane %v531, 1
    %v544 = vperm.slane %v531, 2
    %v545 = vperm.slane %v531, 3
    %v546 = vperm.slane %v531, 4
    %v547 = vperm.slane %v531, 5
    %v548 = vperm.slane %v531, 6
    %v549 = vperm.slane %v531, 7
    %v566 = vmul.f32 %v397, %v534
    %v567 = vmul.f32 %v399, %v535
    %v568 = vmul.f32 %v401, %v536
    %v569 = vmul.f32 %v403, %v537
    %v570 = vmul.f32 %v405, %v538
    %v571 = vmul.f32 %v407, %v539
    %v572 = vmul.f32 %v409, %v540
    %v573 = vmul.f32 %v411, %v541
    %v574 = vmul.f32 %v413, %v542
    %v575 = vmul.f32 %v415, %v543
    %v576 = vmul.f32 %v417, %v544
    %v577 = vmul.f32 %v419, %v545
    %v578 = vmul.f32 %v421, %v546
    %v579 = vmul.f32 %v423, %v547
    %v580 = vmul.f32 %v425, %v548
    %v581 = vmul.f32 %v427, %v549
    %v582 = vsel %vm83, 1, 0
    %vm583 = vcmp.eq.s32.totalorder %v582, 1
    %585 = vset.pattern.permute.xlu0 0
    %586 = vperm.xlu0 %585, %v566
    %v587 = vpop.permute.xlu0 %586
    %590 = vset.pattern.permute.xlu0 0
    %591 = vperm.xlu0 %590, %v567
    %v592 = vpop.permute.xlu0 %591
    %595 = vset.pattern.permute.xlu0 0
    %596 = vperm.xlu0 %595, %v568
    %v597 = vpop.permute.xlu0 %596
    %600 = vset.pattern.permute.xlu0 0
    %601 = vperm.xlu0 %600, %v569
    %v602 = vpop.permute.xlu0 %601
    %605 = vset.pattern.permute.xlu0 0
    %606 = vperm.xlu0 %605, %v570
    %v607 = vpop.permute.xlu0 %606
    %610 = vset.pattern.permute.xlu0 0
    %611 = vperm.xlu0 %610, %v571
    %v612 = vpop.permute.xlu0 %611
    %615 = vset.pattern.permute.xlu0 0
    %616 = vperm.xlu0 %615, %v572
    %v617 = vpop.permute.xlu0 %616
    %620 = vset.pattern.permute.xlu0 0
    %621 = vperm.xlu0 %620, %v573
    %v622 = vpop.permute.xlu0 %621
    %625 = vset.pattern.permute.xlu0 0
    %626 = vperm.xlu0 %625, %v574
    %v627 = vpop.permute.xlu0 %626
    %630 = vset.pattern.permute.xlu0 0
    %631 = vperm.xlu0 %630, %v575
    %v632 = vpop.permute.xlu0 %631
    %635 = vset.pattern.permute.xlu0 0
    %636 = vperm.xlu0 %635, %v576
    %v637 = vpop.permute.xlu0 %636
    %640 = vset.pattern.permute.xlu0 0
    %641 = vperm.xlu0 %640, %v577
    %v642 = vpop.permute.xlu0 %641
    %645 = vset.pattern.permute.xlu0 0
    %646 = vperm.xlu0 %645, %v578
    %v647 = vpop.permute.xlu0 %646
    %650 = vset.pattern.permute.xlu0 0
    %651 = vperm.xlu0 %650, %v579
    %v652 = vpop.permute.xlu0 %651
    %655 = vset.pattern.permute.xlu0 0
    %656 = vperm.xlu0 %655, %v580
    %v657 = vpop.permute.xlu0 %656
    %660 = vset.pattern.permute.xlu0 0
    %661 = vperm.xlu0 %660, %v581
    %v662 = vpop.permute.xlu0 %661
    %v664 = vsel %vm583, %v587, 0.0
    %v665 = vsel %vm583, %v592, 0.0
    %v666 = vsel %vm583, %v597, 0.0
    %v667 = vsel %vm583, %v602, 0.0
    %v668 = vsel %vm583, %v607, 0.0
    %v669 = vsel %vm583, %v612, 0.0
    %v670 = vsel %vm583, %v617, 0.0
    %v671 = vsel %vm583, %v622, 0.0
    %v672 = vsel %vm583, %v627, 0.0
    %v673 = vsel %vm583, %v632, 0.0
    %v674 = vsel %vm583, %v637, 0.0
    %v675 = vsel %vm583, %v642, 0.0
    %v676 = vsel %vm583, %v647, 0.0
    %v677 = vsel %vm583, %v652, 0.0
    %v678 = vsel %vm583, %v657, 0.0
    %v679 = vsel %vm583, %v662, 0.0
    %v680 = vadd.f32 %v664, 0.0
    %v681 = vadd.f32 %v665, 0.0
    %v682 = vadd.f32 %v666, 0.0
    %v683 = vadd.f32 %v667, 0.0
    %v684 = vadd.f32 %v668, 0.0
    %v685 = vadd.f32 %v669, 0.0
    %v686 = vadd.f32 %v670, 0.0
    %v687 = vadd.f32 %v671, 0.0
    %v688 = vadd.f32 %v672, 0.0
    %v689 = vadd.f32 %v673, 0.0
    %v690 = vadd.f32 %v674, 0.0
    %v691 = vadd.f32 %v675, 0.0
    %v692 = vadd.f32 %v676, 0.0
    %v693 = vadd.f32 %v677, 0.0
    %v694 = vadd.f32 %v678, 0.0
    %v695 = vadd.f32 %v679, 0.0
    %712 = vrot.lane.b32.xlu0 %v204, 120
    %v713 = vpop.permute.xlu0 %712
    %714 = vrot.lane.b32.xlu0 %v205, 120
    %v715 = vpop.permute.xlu0 %714
    %716 = vrot.lane.b32.xlu0 %v206, 120
    %v717 = vpop.permute.xlu0 %716
    %718 = vrot.lane.b32.xlu0 %v207, 120
    %v719 = vpop.permute.xlu0 %718
    %720 = vrot.lane.b32.xlu0 %v208, 120
    %v721 = vpop.permute.xlu0 %720
    %722 = vrot.lane.b32.xlu0 %v209, 120
    %v723 = vpop.permute.xlu0 %722
    %724 = vrot.lane.b32.xlu0 %v210, 120
    %v725 = vpop.permute.xlu0 %724
    %726 = vrot.lane.b32.xlu0 %v211, 120
    %v727 = vpop.permute.xlu0 %726
    %728 = vrot.lane.b32.xlu0 %v212, 120
    %v729 = vpop.permute.xlu0 %728
    %730 = vrot.lane.b32.xlu0 %v213, 120
    %v731 = vpop.permute.xlu0 %730
    %732 = vrot.lane.b32.xlu0 %v214, 120
    %v733 = vpop.permute.xlu0 %732
    %734 = vrot.lane.b32.xlu0 %v215, 120
    %v735 = vpop.permute.xlu0 %734
    %736 = vrot.lane.b32.xlu0 %v216, 120
    %v737 = vpop.permute.xlu0 %736
    %738 = vrot.lane.b32.xlu0 %v217, 120
    %v739 = vpop.permute.xlu0 %738
    %740 = vrot.lane.b32.xlu0 %v218, 120
    %v741 = vpop.permute.xlu0 %740
    %742 = vrot.lane.b32.xlu0 %v219, 120
    %v743 = vpop.permute.xlu0 %742
    %v760 = vsel %vm220, %v713, 0.0
    %761 = vadd.xlane.f32.xlu0 %v760
    %v762 = vpop.xlane.xlu0 %761
    %v763 = vsel %vm220, %v715, 0.0
    %764 = vadd.xlane.f32.xlu0 %v763
    %v765 = vpop.xlane.xlu0 %764
    %v766 = vsel %vm220, %v717, 0.0
    %767 = vadd.xlane.f32.xlu0 %v766
    %v768 = vpop.xlane.xlu0 %767
    %v769 = vsel %vm220, %v719, 0.0
    %770 = vadd.xlane.f32.xlu0 %v769
    %v771 = vpop.xlane.xlu0 %770
    %v772 = vsel %vm220, %v721, 0.0
    %773 = vadd.xlane.f32.xlu0 %v772
    %v774 = vpop.xlane.xlu0 %773
    %v775 = vsel %vm220, %v723, 0.0
    %776 = vadd.xlane.f32.xlu0 %v775
    %v777 = vpop.xlane.xlu0 %776
    %v778 = vsel %vm220, %v725, 0.0
    %779 = vadd.xlane.f32.xlu0 %v778
    %v780 = vpop.xlane.xlu0 %779
    %v781 = vsel %vm220, %v727, 0.0
    %782 = vadd.xlane.f32.xlu0 %v781
    %v783 = vpop.xlane.xlu0 %782
    %v784 = vsel %vm220, %v729, 0.0
    %785 = vadd.xlane.f32.xlu0 %v784
    %v786 = vpop.xlane.xlu0 %785
    %v787 = vsel %vm220, %v731, 0.0
    %788 = vadd.xlane.f32.xlu0 %v787
    %v789 = vpop.xlane.xlu0 %788
    %v790 = vsel %vm220, %v733, 0.0
    %791 = vadd.xlane.f32.xlu0 %v790
    %v792 = vpop.xlane.xlu0 %791
    %v793 = vsel %vm220, %v735, 0.0
    %794 = vadd.xlane.f32.xlu0 %v793
    %v795 = vpop.xlane.xlu0 %794
    %v796 = vsel %vm220, %v737, 0.0
    %797 = vadd.xlane.f32.xlu0 %v796
    %v798 = vpop.xlane.xlu0 %797
    %v799 = vsel %vm220, %v739, 0.0
    %800 = vadd.xlane.f32.xlu0 %v799
    %v801 = vpop.xlane.xlu0 %800
    %v802 = vsel %vm220, %v741, 0.0
    %803 = vadd.xlane.f32.xlu0 %v802
    %v804 = vpop.xlane.xlu0 %803
    %v805 = vsel %vm220, %v743, 0.0
    %806 = vadd.xlane.f32.xlu0 %v805
    %v807 = vpop.xlane.xlu0 %806
    %v808 = vmul.f32 %v762, 0.35355338
    %v809 = vmul.f32 %v765, 0.35355338
    %v810 = vmul.f32 %v768, 0.35355338
    %v811 = vmul.f32 %v771, 0.35355338
    %v812 = vmul.f32 %v774, 0.35355338
    %v813 = vmul.f32 %v777, 0.35355338
    %v814 = vmul.f32 %v780, 0.35355338
    %v815 = vmul.f32 %v783, 0.35355338
    %v816 = vmul.f32 %v786, 0.35355338
    %v817 = vmul.f32 %v789, 0.35355338
    %v818 = vmul.f32 %v792, 0.35355338
    %v819 = vmul.f32 %v795, 0.35355338
    %v820 = vmul.f32 %v798, 0.35355338
    %v821 = vmul.f32 %v801, 0.35355338
    %v822 = vmul.f32 %v804, 0.35355338
    %v823 = vmul.f32 %v807, 0.35355338
    %v840 = vperm.slane %v808, %v80
    %v841 = vperm.slane %v809, %v80
    %v842 = vperm.slane %v810, %v80
    %v843 = vperm.slane %v811, %v80
    %v844 = vperm.slane %v812, %v80
    %v845 = vperm.slane %v813, %v80
    %v846 = vperm.slane %v814, %v80
    %v847 = vperm.slane %v815, %v80
    %v848 = vperm.slane %v816, %v80
    %v849 = vperm.slane %v817, %v80
    %v850 = vperm.slane %v818, %v80
    %v851 = vperm.slane %v819, %v80
    %v852 = vperm.slane %v820, %v80
    %v853 = vperm.slane %v821, %v80
    %v854 = vperm.slane %v822, %v80
    %v855 = vperm.slane %v823, %v80
    %v856 = vsel %vm317, %v841, %v840
    %v857 = vsel %vm319, %v842, %v856
    %v858 = vsel %vm321, %v843, %v857
    %v859 = vsel %vm323, %v844, %v858
    %v860 = vsel %vm325, %v845, %v859
    %v861 = vsel %vm327, %v846, %v860
    %v862 = vsel %vm329, %v847, %v861
    %v863 = vsel %vm317, %v849, %v848
    %v864 = vsel %vm319, %v850, %v863
    %v865 = vsel %vm321, %v851, %v864
    %v866 = vsel %vm323, %v852, %v865
    %v867 = vsel %vm325, %v853, %v866
    %v868 = vsel %vm327, %v854, %v867
    %v869 = vsel %vm329, %v855, %v868
    %v872 = vsel %vm220, %v862, -inf
    %873 = vmax.xlane.f32.xlu0 %v872
    %v874 = vpop.xlane.xlu0 %873
    %v875 = vsel %vm220, %v869, -inf
    %876 = vmax.xlane.f32.xlu0 %v875
    %v877 = vpop.xlane.xlu0 %876
    %v880 = vperm.slane %v874, 0
    %v881 = vperm.slane %v874, 1
    %v882 = vperm.slane %v874, 2
    %v883 = vperm.slane %v874, 3
    %v884 = vperm.slane %v874, 4
    %v885 = vperm.slane %v874, 5
    %v886 = vperm.slane %v874, 6
    %v887 = vperm.slane %v874, 7
    %v888 = vperm.slane %v877, 0
    %v889 = vperm.slane %v877, 1
    %v890 = vperm.slane %v877, 2
    %v891 = vperm.slane %v877, 3
    %v892 = vperm.slane %v877, 4
    %v893 = vperm.slane %v877, 5
    %v894 = vperm.slane %v877, 6
    %v895 = vperm.slane %v877, 7
    %v912 = vsub.f32 %v808, %v880
    %v913 = vsub.f32 %v809, %v881
    %v914 = vsub.f32 %v810, %v882
    %v915 = vsub.f32 %v811, %v883
    %v916 = vsub.f32 %v812, %v884
    %v917 = vsub.f32 %v813, %v885
    %v918 = vsub.f32 %v814, %v886
    %v919 = vsub.f32 %v815, %v887
    %v920 = vsub.f32 %v816, %v888
    %v921 = vsub.f32 %v817, %v889
    %v922 = vsub.f32 %v818, %v890
    %v923 = vsub.f32 %v819, %v891
    %v924 = vsub.f32 %v820, %v892
    %v925 = vsub.f32 %v821, %v893
    %v926 = vsub.f32 %v822, %v894
    %v927 = vsub.f32 %v823, %v895
    %v928 = vmul.f32 %v912, 1.442695
    %v929 = vpow.pop %v928
    %v930 = vmul.f32 %v913, 1.442695
    %v931 = vpow.pop %v930
    %v932 = vmul.f32 %v914, 1.442695
    %v933 = vpow.pop %v932
    %v934 = vmul.f32 %v915, 1.442695
    %v935 = vpow.pop %v934
    %v936 = vmul.f32 %v916, 1.442695
    %v937 = vpow.pop %v936
    %v938 = vmul.f32 %v917, 1.442695
    %v939 = vpow.pop %v938
    %v940 = vmul.f32 %v918, 1.442695
    %v941 = vpow.pop %v940
    %v942 = vmul.f32 %v919, 1.442695
    %v943 = vpow.pop %v942
    %v944 = vmul.f32 %v920, 1.442695
    %v945 = vpow.pop %v944
    %v946 = vmul.f32 %v921, 1.442695
    %v947 = vpow.pop %v946
    %v948 = vmul.f32 %v922, 1.442695
    %v949 = vpow.pop %v948
    %v950 = vmul.f32 %v923, 1.442695
    %v951 = vpow.pop %v950
    %v952 = vmul.f32 %v924, 1.442695
    %v953 = vpow.pop %v952
    %v954 = vmul.f32 %v925, 1.442695
    %v955 = vpow.pop %v954
    %v956 = vmul.f32 %v926, 1.442695
    %v957 = vpow.pop %v956
    %v958 = vmul.f32 %v927, 1.442695
    %v959 = vpow.pop %v958
    %976 = vset.pattern.permute.xlu0 0
    %977 = vperm.xlu0 %976, %v929
    %v978 = vpop.permute.xlu0 %977
    %979 = vset.pattern.permute.xlu0 0
    %980 = vperm.xlu0 %979, %v931
    %v981 = vpop.permute.xlu0 %980
    %982 = vset.pattern.permute.xlu0 0
    %983 = vperm.xlu0 %982, %v933
    %v984 = vpop.permute.xlu0 %983
    %985 = vset.pattern.permute.xlu0 0
    %986 = vperm.xlu0 %985, %v935
    %v987 = vpop.permute.xlu0 %986
    %988 = vset.pattern.permute.xlu0 0
    %989 = vperm.xlu0 %988, %v937
    %v990 = vpop.permute.xlu0 %989
    %991 = vset.pattern.permute.xlu0 0
    %992 = vperm.xlu0 %991, %v939
    %v993 = vpop.permute.xlu0 %992
    %994 = vset.pattern.permute.xlu0 0
    %995 = vperm.xlu0 %994, %v941
    %v996 = vpop.permute.xlu0 %995
    %997 = vset.pattern.permute.xlu0 0
    %998 = vperm.xlu0 %997, %v943
    %v999 = vpop.permute.xlu0 %998
    %1000 = vset.pattern.permute.xlu0 0
    %1001 = vperm.xlu0 %1000, %v945
    %v1002 = vpop.permute.xlu0 %1001
    %1003 = vset.pattern.permute.xlu0 0
    %1004 = vperm.xlu0 %1003, %v947
    %v1005 = vpop.permute.xlu0 %1004
    %1006 = vset.pattern.permute.xlu0 0
    %1007 = vperm.xlu0 %1006, %v949
    %v1008 = vpop.permute.xlu0 %1007
    %1009 = vset.pattern.permute.xlu0 0
    %1010 = vperm.xlu0 %1009, %v951
    %v1011 = vpop.permute.xlu0 %1010
    %1012 = vset.pattern.permute.xlu0 0
    %1013 = vperm.xlu0 %1012, %v953
    %v1014 = vpop.permute.xlu0 %1013
    %1015 = vset.pattern.permute.xlu0 0
    %1016 = vperm.xlu0 %1015, %v955
    %v1017 = vpop.permute.xlu0 %1016
    %1018 = vset.pattern.permute.xlu0 0
    %1019 = vperm.xlu0 %1018, %v957
    %v1020 = vpop.permute.xlu0 %1019
    %1021 = vset.pattern.permute.xlu0 0
    %1022 = vperm.xlu0 %1021, %v959
    %v1023 = vpop.permute.xlu0 %1022
    %v1024 = vperm.slane %v978, %v80
    %v1025 = vperm.slane %v981, %v80
    %v1026 = vperm.slane %v984, %v80
    %v1027 = vperm.slane %v987, %v80
    %v1028 = vperm.slane %v990, %v80
    %v1029 = vperm.slane %v993, %v80
    %v1030 = vperm.slane %v996, %v80
    %v1031 = vperm.slane %v999, %v80
    %v1032 = vperm.slane %v1002, %v80
    %v1033 = vperm.slane %v1005, %v80
    %v1034 = vperm.slane %v1008, %v80
    %v1035 = vperm.slane %v1011, %v80
    %v1036 = vperm.slane %v1014, %v80
    %v1037 = vperm.slane %v1017, %v80
    %v1038 = vperm.slane %v1020, %v80
    %v1039 = vperm.slane %v1023, %v80
    %v1040 = vsel %vm317, %v1025, %v1024
    %v1041 = vsel %vm319, %v1026, %v1040
    %v1042 = vsel %vm321, %v1027, %v1041
    %v1043 = vsel %vm323, %v1028, %v1042
    %v1044 = vsel %vm325, %v1029, %v1043
    %v1045 = vsel %vm327, %v1030, %v1044
    %v1046 = vsel %vm329, %v1031, %v1045
    %v1047 = vsel %vm317, %v1033, %v1032
    %v1048 = vsel %vm319, %v1034, %v1047
    %v1049 = vsel %vm321, %v1035, %v1048
    %v1050 = vsel %vm323, %v1036, %v1049
    %v1051 = vsel %vm325, %v1037, %v1050
    %v1052 = vsel %vm327, %v1038, %v1051
    %v1053 = vsel %vm329, %v1039, %v1052
    %v1056 = vsel %vm220, %v1046, 0.0
    %1057 = vadd.xlane.f32.xlu0 %v1056
    %v1058 = vpop.xlane.xlu0 %1057
    %v1059 = vsel %vm220, %v1053, 0.0
    %1060 = vadd.xlane.f32.xlu0 %v1059
    %v1061 = vpop.xlane.xlu0 %1060
    %v1062 = vrcp.pop %v1058
    %v1063 = vrcp.pop %v1061
    %v1066 = vperm.slane %v1062, 0
    %v1067 = vperm.slane %v1062, 1
    %v1068 = vperm.slane %v1062, 2
    %v1069 = vperm.slane %v1062, 3
    %v1070 = vperm.slane %v1062, 4
    %v1071 = vperm.slane %v1062, 5
    %v1072 = vperm.slane %v1062, 6
    %v1073 = vperm.slane %v1062, 7
    %v1074 = vperm.slane %v1063, 0
    %v1075 = vperm.slane %v1063, 1
    %v1076 = vperm.slane %v1063, 2
    %v1077 = vperm.slane %v1063, 3
    %v1078 = vperm.slane %v1063, 4
    %v1079 = vperm.slane %v1063, 5
    %v1080 = vperm.slane %v1063, 6
    %v1081 = vperm.slane %v1063, 7
    %v1098 = vmul.f32 %v929, %v1066
    %v1099 = vmul.f32 %v931, %v1067
    %v1100 = vmul.f32 %v933, %v1068
    %v1101 = vmul.f32 %v935, %v1069
    %v1102 = vmul.f32 %v937, %v1070
    %v1103 = vmul.f32 %v939, %v1071
    %v1104 = vmul.f32 %v941, %v1072
    %v1105 = vmul.f32 %v943, %v1073
    %v1106 = vmul.f32 %v945, %v1074
    %v1107 = vmul.f32 %v947, %v1075
    %v1108 = vmul.f32 %v949, %v1076
    %v1109 = vmul.f32 %v951, %v1077
    %v1110 = vmul.f32 %v953, %v1078
    %v1111 = vmul.f32 %v955, %v1079
    %v1112 = vmul.f32 %v957, %v1080
    %v1113 = vmul.f32 %v959, %v1081
    %v1114 = vsel %vm86, 1, 0
    %vm1115 = vcmp.eq.s32.totalorder %v1114, 1
    %1117 = vset.pattern.permute.xlu0 0
    %1118 = vperm.xlu0 %1117, %v1098
    %v1119 = vpop.permute.xlu0 %1118
    %1122 = vset.pattern.permute.xlu0 0
    %1123 = vperm.xlu0 %1122, %v1099
    %v1124 = vpop.permute.xlu0 %1123
    %1127 = vset.pattern.permute.xlu0 0
    %1128 = vperm.xlu0 %1127, %v1100
    %v1129 = vpop.permute.xlu0 %1128
    %1132 = vset.pattern.permute.xlu0 0
    %1133 = vperm.xlu0 %1132, %v1101
    %v1134 = vpop.permute.xlu0 %1133
    %1137 = vset.pattern.permute.xlu0 0
    %1138 = vperm.xlu0 %1137, %v1102
    %v1139 = vpop.permute.xlu0 %1138
    %1142 = vset.pattern.permute.xlu0 0
    %1143 = vperm.xlu0 %1142, %v1103
    %v1144 = vpop.permute.xlu0 %1143
    %1147 = vset.pattern.permute.xlu0 0
    %1148 = vperm.xlu0 %1147, %v1104
    %v1149 = vpop.permute.xlu0 %1148
    %1152 = vset.pattern.permute.xlu0 0
    %1153 = vperm.xlu0 %1152, %v1105
    %v1154 = vpop.permute.xlu0 %1153
    %1157 = vset.pattern.permute.xlu0 0
    %1158 = vperm.xlu0 %1157, %v1106
    %v1159 = vpop.permute.xlu0 %1158
    %1162 = vset.pattern.permute.xlu0 0
    %1163 = vperm.xlu0 %1162, %v1107
    %v1164 = vpop.permute.xlu0 %1163
    %1167 = vset.pattern.permute.xlu0 0
    %1168 = vperm.xlu0 %1167, %v1108
    %v1169 = vpop.permute.xlu0 %1168
    %1172 = vset.pattern.permute.xlu0 0
    %1173 = vperm.xlu0 %1172, %v1109
    %v1174 = vpop.permute.xlu0 %1173
    %1177 = vset.pattern.permute.xlu0 0
    %1178 = vperm.xlu0 %1177, %v1110
    %v1179 = vpop.permute.xlu0 %1178
    %1182 = vset.pattern.permute.xlu0 0
    %1183 = vperm.xlu0 %1182, %v1111
    %v1184 = vpop.permute.xlu0 %1183
    %1187 = vset.pattern.permute.xlu0 0
    %1188 = vperm.xlu0 %1187, %v1112
    %v1189 = vpop.permute.xlu0 %1188
    %1192 = vset.pattern.permute.xlu0 0
    %1193 = vperm.xlu0 %1192, %v1113
    %v1194 = vpop.permute.xlu0 %1193
    %v1196 = vsel %vm1115, %v1119, 0.0
    %v1197 = vsel %vm1115, %v1124, 0.0
    %v1198 = vsel %vm1115, %v1129, 0.0
    %v1199 = vsel %vm1115, %v1134, 0.0
    %v1200 = vsel %vm1115, %v1139, 0.0
    %v1201 = vsel %vm1115, %v1144, 0.0
    %v1202 = vsel %vm1115, %v1149, 0.0
    %v1203 = vsel %vm1115, %v1154, 0.0
    %v1204 = vsel %vm1115, %v1159, 0.0
    %v1205 = vsel %vm1115, %v1164, 0.0
    %v1206 = vsel %vm1115, %v1169, 0.0
    %v1207 = vsel %vm1115, %v1174, 0.0
    %v1208 = vsel %vm1115, %v1179, 0.0
    %v1209 = vsel %vm1115, %v1184, 0.0
    %v1210 = vsel %vm1115, %v1189, 0.0
    %v1211 = vsel %vm1115, %v1194, 0.0
    %v1212 = vadd.f32 %v680, %v1196
    %v1213 = vadd.f32 %v681, %v1197
    %v1214 = vadd.f32 %v682, %v1198
    %v1215 = vadd.f32 %v683, %v1199
    %v1216 = vadd.f32 %v684, %v1200
    %v1217 = vadd.f32 %v685, %v1201
    %v1218 = vadd.f32 %v686, %v1202
    %v1219 = vadd.f32 %v687, %v1203
    %v1220 = vadd.f32 %v688, %v1204
    %v1221 = vadd.f32 %v689, %v1205
    %v1222 = vadd.f32 %v690, %v1206
    %v1223 = vadd.f32 %v691, %v1207
    %v1224 = vadd.f32 %v692, %v1208
    %v1225 = vadd.f32 %v693, %v1209
    %v1226 = vadd.f32 %v694, %v1210
    %v1227 = vadd.f32 %v695, %v1211
    %1228 = vrot.lane.b32.xlu0 %v204, 112
    %v1229 = vpop.permute.xlu0 %1228
    %1230 = vrot.lane.b32.xlu0 %v205, 112
    %v1231 = vpop.permute.xlu0 %1230
    %1232 = vrot.lane.b32.xlu0 %v206, 112
    %v1233 = vpop.permute.xlu0 %1232
    %1234 = vrot.lane.b32.xlu0 %v207, 112
    %v1235 = vpop.permute.xlu0 %1234
    %1236 = vrot.lane.b32.xlu0 %v208, 112
    %v1237 = vpop.permute.xlu0 %1236
    %1238 = vrot.lane.b32.xlu0 %v209, 112
    %v1239 = vpop.permute.xlu0 %1238
    %1240 = vrot.lane.b32.xlu0 %v210, 112
    %v1241 = vpop.permute.xlu0 %1240
    %1242 = vrot.lane.b32.xlu0 %v211, 112
    %v1243 = vpop.permute.xlu0 %1242
    %1244 = vrot.lane.b32.xlu0 %v212, 112
    %v1245 = vpop.permute.xlu0 %1244
    %1246 = vrot.lane.b32.xlu0 %v213, 112
    %v1247 = vpop.permute.xlu0 %1246
    %1248 = vrot.lane.b32.xlu0 %v214, 112
    %v1249 = vpop.permute.xlu0 %1248
    %1250 = vrot.lane.b32.xlu0 %v215, 112
    %v1251 = vpop.permute.xlu0 %1250
    %1252 = vrot.lane.b32.xlu0 %v216, 112
    %v1253 = vpop.permute.xlu0 %1252
    %1254 = vrot.lane.b32.xlu0 %v217, 112
    %v1255 = vpop.permute.xlu0 %1254
    %1256 = vrot.lane.b32.xlu0 %v218, 112
    %v1257 = vpop.permute.xlu0 %1256
    %1258 = vrot.lane.b32.xlu0 %v219, 112
    %v1259 = vpop.permute.xlu0 %1258
    %v1276 = vsel %vm220, %v1229, 0.0
    %1277 = vadd.xlane.f32.xlu0 %v1276
    %v1278 = vpop.xlane.xlu0 %1277
    %v1279 = vsel %vm220, %v1231, 0.0
    %1280 = vadd.xlane.f32.xlu0 %v1279
    %v1281 = vpop.xlane.xlu0 %1280
    %v1282 = vsel %vm220, %v1233, 0.0
    %1283 = vadd.xlane.f32.xlu0 %v1282
    %v1284 = vpop.xlane.xlu0 %1283
    %v1285 = vsel %vm220, %v1235, 0.0
    %1286 = vadd.xlane.f32.xlu0 %v1285
    %v1287 = vpop.xlane.xlu0 %1286
    %v1288 = vsel %vm220, %v1237, 0.0
    %1289 = vadd.xlane.f32.xlu0 %v1288
    %v1290 = vpop.xlane.xlu0 %1289
    %v1291 = vsel %vm220, %v1239, 0.0
    %1292 = vadd.xlane.f32.xlu0 %v1291
    %v1293 = vpop.xlane.xlu0 %1292
    %v1294 = vsel %vm220, %v1241, 0.0
    %1295 = vadd.xlane.f32.xlu0 %v1294
    %v1296 = vpop.xlane.xlu0 %1295
    %v1297 = vsel %vm220, %v1243, 0.0
    %1298 = vadd.xlane.f32.xlu0 %v1297
    %v1299 = vpop.xlane.xlu0 %1298
    %v1300 = vsel %vm220, %v1245, 0.0
    %1301 = vadd.xlane.f32.xlu0 %v1300
    %v1302 = vpop.xlane.xlu0 %1301
    %v1303 = vsel %vm220, %v1247, 0.0
    %1304 = vadd.xlane.f32.xlu0 %v1303
    %v1305 = vpop.xlane.xlu0 %1304
    %v1306 = vsel %vm220, %v1249, 0.0
    %1307 = vadd.xlane.f32.xlu0 %v1306
    %v1308 = vpop.xlane.xlu0 %1307
    %v1309 = vsel %vm220, %v1251, 0.0
    %1310 = vadd.xlane.f32.xlu0 %v1309
    %v1311 = vpop.xlane.xlu0 %1310
    %v1312 = vsel %vm220, %v1253, 0.0
    %1313 = vadd.xlane.f32.xlu0 %v1312
    %v1314 = vpop.xlane.xlu0 %1313
    %v1315 = vsel %vm220, %v1255, 0.0
    %1316 = vadd.xlane.f32.xlu0 %v1315
    %v1317 = vpop.xlane.xlu0 %1316
    %v1318 = vsel %vm220, %v1257, 0.0
    %1319 = vadd.xlane.f32.xlu0 %v1318
    %v1320 = vpop.xlane.xlu0 %1319
    %v1321 = vsel %vm220, %v1259, 0.0
    %1322 = vadd.xlane.f32.xlu0 %v1321
    %v1323 = vpop.xlane.xlu0 %1322
    %v1324 = vmul.f32 %v1278, 0.35355338
    %v1325 = vmul.f32 %v1281, 0.35355338
    %v1326 = vmul.f32 %v1284, 0.35355338
    %v1327 = vmul.f32 %v1287, 0.35355338
    %v1328 = vmul.f32 %v1290, 0.35355338
    %v1329 = vmul.f32 %v1293, 0.35355338
    %v1330 = vmul.f32 %v1296, 0.35355338
    %v1331 = vmul.f32 %v1299, 0.35355338
    %v1332 = vmul.f32 %v1302, 0.35355338
    %v1333 = vmul.f32 %v1305, 0.35355338
    %v1334 = vmul.f32 %v1308, 0.35355338
    %v1335 = vmul.f32 %v1311, 0.35355338
    %v1336 = vmul.f32 %v1314, 0.35355338
    %v1337 = vmul.f32 %v1317, 0.35355338
    %v1338 = vmul.f32 %v1320, 0.35355338
    %v1339 = vmul.f32 %v1323, 0.35355338
    %v1356 = vperm.slane %v1324, %v80
    %v1357 = vperm.slane %v1325, %v80
    %v1358 = vperm.slane %v1326, %v80
    %v1359 = vperm.slane %v1327, %v80
    %v1360 = vperm.slane %v1328, %v80
    %v1361 = vperm.slane %v1329, %v80
    %v1362 = vperm.slane %v1330, %v80
    %v1363 = vperm.slane %v1331, %v80
    %v1364 = vperm.slane %v1332, %v80
    %v1365 = vperm.slane %v1333, %v80
    %v1366 = vperm.slane %v1334, %v80
    %v1367 = vperm.slane %v1335, %v80
    %v1368 = vperm.slane %v1336, %v80
    %v1369 = vperm.slane %v1337, %v80
    %v1370 = vperm.slane %v1338, %v80
    %v1371 = vperm.slane %v1339, %v80
    %v1372 = vsel %vm317, %v1357, %v1356
    %v1373 = vsel %vm319, %v1358, %v1372
    %v1374 = vsel %vm321, %v1359, %v1373
    %v1375 = vsel %vm323, %v1360, %v1374
    %v1376 = vsel %vm325, %v1361, %v1375
    %v1377 = vsel %vm327, %v1362, %v1376
    %v1378 = vsel %vm329, %v1363, %v1377
    %v1379 = vsel %vm317, %v1365, %v1364
    %v1380 = vsel %vm319, %v1366, %v1379
    %v1381 = vsel %vm321, %v1367, %v1380
    %v1382 = vsel %vm323, %v1368, %v1381
    %v1383 = vsel %vm325, %v1369, %v1382
    %v1384 = vsel %vm327, %v1370, %v1383
    %v1385 = vsel %vm329, %v1371, %v1384
    %v1388 = vsel %vm220, %v1378, -inf
    %1389 = vmax.xlane.f32.xlu0 %v1388
    %v1390 = vpop.xlane.xlu0 %1389
    %v1391 = vsel %vm220, %v1385, -inf
    %1392 = vmax.xlane.f32.xlu0 %v1391
    %v1393 = vpop.xlane.xlu0 %1392
    %v1396 = vperm.slane %v1390, 0
    %v1397 = vperm.slane %v1390, 1
    %v1398 = vperm.slane %v1390, 2
    %v1399 = vperm.slane %v1390, 3
    %v1400 = vperm.slane %v1390, 4
    %v1401 = vperm.slane %v1390, 5
    %v1402 = vperm.slane %v1390, 6
    %v1403 = vperm.slane %v1390, 7
    %v1404 = vperm.slane %v1393, 0
    %v1405 = vperm.slane %v1393, 1
    %v1406 = vperm.slane %v1393, 2
    %v1407 = vperm.slane %v1393, 3
    %v1408 = vperm.slane %v1393, 4
    %v1409 = vperm.slane %v1393, 5
    %v1410 = vperm.slane %v1393, 6
    %v1411 = vperm.slane %v1393, 7
    %v1428 = vsub.f32 %v1324, %v1396
    %v1429 = vsub.f32 %v1325, %v1397
    %v1430 = vsub.f32 %v1326, %v1398
    %v1431 = vsub.f32 %v1327, %v1399
    %v1432 = vsub.f32 %v1328, %v1400
    %v1433 = vsub.f32 %v1329, %v1401
    %v1434 = vsub.f32 %v1330, %v1402
    %v1435 = vsub.f32 %v1331, %v1403
    %v1436 = vsub.f32 %v1332, %v1404
    %v1437 = vsub.f32 %v1333, %v1405
    %v1438 = vsub.f32 %v1334, %v1406
    %v1439 = vsub.f32 %v1335, %v1407
    %v1440 = vsub.f32 %v1336, %v1408
    %v1441 = vsub.f32 %v1337, %v1409
    %v1442 = vsub.f32 %v1338, %v1410
    %v1443 = vsub.f32 %v1339, %v1411
    %v1444 = vmul.f32 %v1428, 1.442695
    %v1445 = vpow.pop %v1444
    %v1446 = vmul.f32 %v1429, 1.442695
    %v1447 = vpow.pop %v1446
    %v1448 = vmul.f32 %v1430, 1.442695
    %v1449 = vpow.pop %v1448
    %v1450 = vmul.f32 %v1431, 1.442695
    %v1451 = vpow.pop %v1450
    %v1452 = vmul.f32 %v1432, 1.442695
    %v1453 = vpow.pop %v1452
    %v1454 = vmul.f32 %v1433, 1.442695
    %v1455 = vpow.pop %v1454
    %v1456 = vmul.f32 %v1434, 1.442695
    %v1457 = vpow.pop %v1456
    %v1458 = vmul.f32 %v1435, 1.442695
    %v1459 = vpow.pop %v1458
    %v1460 = vmul.f32 %v1436, 1.442695
    %v1461 = vpow.pop %v1460
    %v1462 = vmul.f32 %v1437, 1.442695
    %v1463 = vpow.pop %v1462
    %v1464 = vmul.f32 %v1438, 1.442695
    %v1465 = vpow.pop %v1464
    %v1466 = vmul.f32 %v1439, 1.442695
    %v1467 = vpow.pop %v1466
    %v1468 = vmul.f32 %v1440, 1.442695
    %v1469 = vpow.pop %v1468
    %v1470 = vmul.f32 %v1441, 1.442695
    %v1471 = vpow.pop %v1470
    %v1472 = vmul.f32 %v1442, 1.442695
    %v1473 = vpow.pop %v1472
    %v1474 = vmul.f32 %v1443, 1.442695
    %v1475 = vpow.pop %v1474
    %1492 = vset.pattern.permute.xlu0 0
    %1493 = vperm.xlu0 %1492, %v1445
    %v1494 = vpop.permute.xlu0 %1493
    %1495 = vset.pattern.permute.xlu0 0
    %1496 = vperm.xlu0 %1495, %v1447
    %v1497 = vpop.permute.xlu0 %1496
    %1498 = vset.pattern.permute.xlu0 0
    %1499 = vperm.xlu0 %1498, %v1449
    %v1500 = vpop.permute.xlu0 %1499
    %1501 = vset.pattern.permute.xlu0 0
    %1502 = vperm.xlu0 %1501, %v1451
    %v1503 = vpop.permute.xlu0 %1502
    %1504 = vset.pattern.permute.xlu0 0
    %1505 = vperm.xlu0 %1504, %v1453
    %v1506 = vpop.permute.xlu0 %1505
    %1507 = vset.pattern.permute.xlu0 0
    %1508 = vperm.xlu0 %1507, %v1455
    %v1509 = vpop.permute.xlu0 %1508
    %1510 = vset.pattern.permute.xlu0 0
    %1511 = vperm.xlu0 %1510, %v1457
    %v1512 = vpop.permute.xlu0 %1511
    %1513 = vset.pattern.permute.xlu0 0
    %1514 = vperm.xlu0 %1513, %v1459
    %v1515 = vpop.permute.xlu0 %1514
    %1516 = vset.pattern.permute.xlu0 0
    %1517 = vperm.xlu0 %1516, %v1461
    %v1518 = vpop.permute.xlu0 %1517
    %1519 = vset.pattern.permute.xlu0 0
    %1520 = vperm.xlu0 %1519, %v1463
    %v1521 = vpop.permute.xlu0 %1520
    %1522 = vset.pattern.permute.xlu0 0
    %1523 = vperm.xlu0 %1522, %v1465
    %v1524 = vpop.permute.xlu0 %1523
    %1525 = vset.pattern.permute.xlu0 0
    %1526 = vperm.xlu0 %1525, %v1467
    %v1527 = vpop.permute.xlu0 %1526
    %1528 = vset.pattern.permute.xlu0 0
    %1529 = vperm.xlu0 %1528, %v1469
    %v1530 = vpop.permute.xlu0 %1529
    %1531 = vset.pattern.permute.xlu0 0
    %1532 = vperm.xlu0 %1531, %v1471
    %v1533 = vpop.permute.xlu0 %1532
    %1534 = vset.pattern.permute.xlu0 0
    %1535 = vperm.xlu0 %1534, %v1473
    %v1536 = vpop.permute.xlu0 %1535
    %1537 = vset.pattern.permute.xlu0 0
    %1538 = vperm.xlu0 %1537, %v1475
    %v1539 = vpop.permute.xlu0 %1538
    %v1540 = vperm.slane %v1494, %v80
    %v1541 = vperm.slane %v1497, %v80
    %v1542 = vperm.slane %v1500, %v80
    %v1543 = vperm.slane %v1503, %v80
    %v1544 = vperm.slane %v1506, %v80
    %v1545 = vperm.slane %v1509, %v80
    %v1546 = vperm.slane %v1512, %v80
    %v1547 = vperm.slane %v1515, %v80
    %v1548 = vperm.slane %v1518, %v80
    %v1549 = vperm.slane %v1521, %v80
    %v1550 = vperm.slane %v1524, %v80
    %v1551 = vperm.slane %v1527, %v80
    %v1552 = vperm.slane %v1530, %v80
    %v1553 = vperm.slane %v1533, %v80
    %v1554 = vperm.slane %v1536, %v80
    %v1555 = vperm.slane %v1539, %v80
    %v1556 = vsel %vm317, %v1541, %v1540
    %v1557 = vsel %vm319, %v1542, %v1556
    %v1558 = vsel %vm321, %v1543, %v1557
    %v1559 = vsel %vm323, %v1544, %v1558
    %v1560 = vsel %vm325, %v1545, %v1559
    %v1561 = vsel %vm327, %v1546, %v1560
    %v1562 = vsel %vm329, %v1547, %v1561
    %v1563 = vsel %vm317, %v1549, %v1548
    %v1564 = vsel %vm319, %v1550, %v1563
    %v1565 = vsel %vm321, %v1551, %v1564
    %v1566 = vsel %vm323, %v1552, %v1565
    %v1567 = vsel %vm325, %v1553, %v1566
    %v1568 = vsel %vm327, %v1554, %v1567
    %v1569 = vsel %vm329, %v1555, %v1568
    %v1572 = vsel %vm220, %v1562, 0.0
    %1573 = vadd.xlane.f32.xlu0 %v1572
    %v1574 = vpop.xlane.xlu0 %1573
    %v1575 = vsel %vm220, %v1569, 0.0
    %1576 = vadd.xlane.f32.xlu0 %v1575
    %v1577 = vpop.xlane.xlu0 %1576
    %v1578 = vrcp.pop %v1574
    %v1579 = vrcp.pop %v1577
    %v1582 = vperm.slane %v1578, 0
    %v1583 = vperm.slane %v1578, 1
    %v1584 = vperm.slane %v1578, 2
    %v1585 = vperm.slane %v1578, 3
    %v1586 = vperm.slane %v1578, 4
    %v1587 = vperm.slane %v1578, 5
    %v1588 = vperm.slane %v1578, 6
    %v1589 = vperm.slane %v1578, 7
    %v1590 = vperm.slane %v1579, 0
    %v1591 = vperm.slane %v1579, 1
    %v1592 = vperm.slane %v1579, 2
    %v1593 = vperm.slane %v1579, 3
    %v1594 = vperm.slane %v1579, 4
    %v1595 = vperm.slane %v1579, 5
    %v1596 = vperm.slane %v1579, 6
    %v1597 = vperm.slane %v1579, 7
    %v1614 = vmul.f32 %v1445, %v1582
    %v1615 = vmul.f32 %v1447, %v1583
    %v1616 = vmul.f32 %v1449, %v1584
    %v1617 = vmul.f32 %v1451, %v1585
    %v1618 = vmul.f32 %v1453, %v1586
    %v1619 = vmul.f32 %v1455, %v1587
    %v1620 = vmul.f32 %v1457, %v1588
    %v1621 = vmul.f32 %v1459, %v1589
    %v1622 = vmul.f32 %v1461, %v1590
    %v1623 = vmul.f32 %v1463, %v1591
    %v1624 = vmul.f32 %v1465, %v1592
    %v1625 = vmul.f32 %v1467, %v1593
    %v1626 = vmul.f32 %v1469, %v1594
    %v1627 = vmul.f32 %v1471, %v1595
    %v1628 = vmul.f32 %v1473, %v1596
    %v1629 = vmul.f32 %v1475, %v1597
    %v1630 = vsel %vm89, 1, 0
    %vm1631 = vcmp.eq.s32.totalorder %v1630, 1
    %1633 = vset.pattern.permute.xlu0 0
    %1634 = vperm.xlu0 %1633, %v1614
    %v1635 = vpop.permute.xlu0 %1634
    %1638 = vset.pattern.permute.xlu0 0
    %1639 = vperm.xlu0 %1638, %v1615
    %v1640 = vpop.permute.xlu0 %1639
    %1643 = vset.pattern.permute.xlu0 0
    %1644 = vperm.xlu0 %1643, %v1616
    %v1645 = vpop.permute.xlu0 %1644
    %1648 = vset.pattern.permute.xlu0 0
    %1649 = vperm.xlu0 %1648, %v1617
    %v1650 = vpop.permute.xlu0 %1649
    %1653 = vset.pattern.permute.xlu0 0
    %1654 = vperm.xlu0 %1653, %v1618
    %v1655 = vpop.permute.xlu0 %1654
    %1658 = vset.pattern.permute.xlu0 0
    %1659 = vperm.xlu0 %1658, %v1619
    %v1660 = vpop.permute.xlu0 %1659
    %1663 = vset.pattern.permute.xlu0 0
    %1664 = vperm.xlu0 %1663, %v1620
    %v1665 = vpop.permute.xlu0 %1664
    %1668 = vset.pattern.permute.xlu0 0
    %1669 = vperm.xlu0 %1668, %v1621
    %v1670 = vpop.permute.xlu0 %1669
    %1673 = vset.pattern.permute.xlu0 0
    %1674 = vperm.xlu0 %1673, %v1622
    %v1675 = vpop.permute.xlu0 %1674
    %1678 = vset.pattern.permute.xlu0 0
    %1679 = vperm.xlu0 %1678, %v1623
    %v1680 = vpop.permute.xlu0 %1679
    %1683 = vset.pattern.permute.xlu0 0
    %1684 = vperm.xlu0 %1683, %v1624
    %v1685 = vpop.permute.xlu0 %1684
    %1688 = vset.pattern.permute.xlu0 0
    %1689 = vperm.xlu0 %1688, %v1625
    %v1690 = vpop.permute.xlu0 %1689
    %1693 = vset.pattern.permute.xlu0 0
    %1694 = vperm.xlu0 %1693, %v1626
    %v1695 = vpop.permute.xlu0 %1694
    %1698 = vset.pattern.permute.xlu0 0
    %1699 = vperm.xlu0 %1698, %v1627
    %v1700 = vpop.permute.xlu0 %1699
    %1703 = vset.pattern.permute.xlu0 0
    %1704 = vperm.xlu0 %1703, %v1628
    %v1705 = vpop.permute.xlu0 %1704
    %1708 = vset.pattern.permute.xlu0 0
    %1709 = vperm.xlu0 %1708, %v1629
    %v1710 = vpop.permute.xlu0 %1709
    %v1712 = vsel %vm1631, %v1635, 0.0
    %v1713 = vsel %vm1631, %v1640, 0.0
    %v1714 = vsel %vm1631, %v1645, 0.0
    %v1715 = vsel %vm1631, %v1650, 0.0
    %v1716 = vsel %vm1631, %v1655, 0.0
    %v1717 = vsel %vm1631, %v1660, 0.0
    %v1718 = vsel %vm1631, %v1665, 0.0
    %v1719 = vsel %vm1631, %v1670, 0.0
    %v1720 = vsel %vm1631, %v1675, 0.0
    %v1721 = vsel %vm1631, %v1680, 0.0
    %v1722 = vsel %vm1631, %v1685, 0.0
    %v1723 = vsel %vm1631, %v1690, 0.0
    %v1724 = vsel %vm1631, %v1695, 0.0
    %v1725 = vsel %vm1631, %v1700, 0.0
    %v1726 = vsel %vm1631, %v1705, 0.0
    %v1727 = vsel %vm1631, %v1710, 0.0
    %v1728 = vadd.f32 %v1212, %v1712
    %v1729 = vadd.f32 %v1213, %v1713
    %v1730 = vadd.f32 %v1214, %v1714
    %v1731 = vadd.f32 %v1215, %v1715
    %v1732 = vadd.f32 %v1216, %v1716
    %v1733 = vadd.f32 %v1217, %v1717
    %v1734 = vadd.f32 %v1218, %v1718
    %v1735 = vadd.f32 %v1219, %v1719
    %v1736 = vadd.f32 %v1220, %v1720
    %v1737 = vadd.f32 %v1221, %v1721
    %v1738 = vadd.f32 %v1222, %v1722
    %v1739 = vadd.f32 %v1223, %v1723
    %v1740 = vadd.f32 %v1224, %v1724
    %v1741 = vadd.f32 %v1225, %v1725
    %v1742 = vadd.f32 %v1226, %v1726
    %v1743 = vadd.f32 %v1227, %v1727
    %1744 = vrot.lane.b32.xlu0 %v204, 104
    %v1745 = vpop.permute.xlu0 %1744
    %1746 = vrot.lane.b32.xlu0 %v205, 104
    %v1747 = vpop.permute.xlu0 %1746
    %1748 = vrot.lane.b32.xlu0 %v206, 104
    %v1749 = vpop.permute.xlu0 %1748
    %1750 = vrot.lane.b32.xlu0 %v207, 104
    %v1751 = vpop.permute.xlu0 %1750
    %1752 = vrot.lane.b32.xlu0 %v208, 104
    %v1753 = vpop.permute.xlu0 %1752
    %1754 = vrot.lane.b32.xlu0 %v209, 104
    %v1755 = vpop.permute.xlu0 %1754
    %1756 = vrot.lane.b32.xlu0 %v210, 104
    %v1757 = vpop.permute.xlu0 %1756
    %1758 = vrot.lane.b32.xlu0 %v211, 104
    %v1759 = vpop.permute.xlu0 %1758
    %1760 = vrot.lane.b32.xlu0 %v212, 104
    %v1761 = vpop.permute.xlu0 %1760
    %1762 = vrot.lane.b32.xlu0 %v213, 104
    %v1763 = vpop.permute.xlu0 %1762
    %1764 = vrot.lane.b32.xlu0 %v214, 104
    %v1765 = vpop.permute.xlu0 %1764
    %1766 = vrot.lane.b32.xlu0 %v215, 104
    %v1767 = vpop.permute.xlu0 %1766
    %1768 = vrot.lane.b32.xlu0 %v216, 104
    %v1769 = vpop.permute.xlu0 %1768
    %1770 = vrot.lane.b32.xlu0 %v217, 104
    %v1771 = vpop.permute.xlu0 %1770
    %1772 = vrot.lane.b32.xlu0 %v218, 104
    %v1773 = vpop.permute.xlu0 %1772
    %1774 = vrot.lane.b32.xlu0 %v219, 104
    %v1775 = vpop.permute.xlu0 %1774
    %v1792 = vsel %vm220, %v1745, 0.0
    %1793 = vadd.xlane.f32.xlu0 %v1792
    %v1794 = vpop.xlane.xlu0 %1793
    %v1795 = vsel %vm220, %v1747, 0.0
    %1796 = vadd.xlane.f32.xlu0 %v1795
    %v1797 = vpop.xlane.xlu0 %1796
    %v1798 = vsel %vm220, %v1749, 0.0
    %1799 = vadd.xlane.f32.xlu0 %v1798
    %v1800 = vpop.xlane.xlu0 %1799
    %v1801 = vsel %vm220, %v1751, 0.0
    %1802 = vadd.xlane.f32.xlu0 %v1801
    %v1803 = vpop.xlane.xlu0 %1802
    %v1804 = vsel %vm220, %v1753, 0.0
    %1805 = vadd.xlane.f32.xlu0 %v1804
    %v1806 = vpop.xlane.xlu0 %1805
    %v1807 = vsel %vm220, %v1755, 0.0
    %1808 = vadd.xlane.f32.xlu0 %v1807
    %v1809 = vpop.xlane.xlu0 %1808
    %v1810 = vsel %vm220, %v1757, 0.0
    %1811 = vadd.xlane.f32.xlu0 %v1810
    %v1812 = vpop.xlane.xlu0 %1811
    %v1813 = vsel %vm220, %v1759, 0.0
    %1814 = vadd.xlane.f32.xlu0 %v1813
    %v1815 = vpop.xlane.xlu0 %1814
    %v1816 = vsel %vm220, %v1761, 0.0
    %1817 = vadd.xlane.f32.xlu0 %v1816
    %v1818 = vpop.xlane.xlu0 %1817
    %v1819 = vsel %vm220, %v1763, 0.0
    %1820 = vadd.xlane.f32.xlu0 %v1819
    %v1821 = vpop.xlane.xlu0 %1820
    %v1822 = vsel %vm220, %v1765, 0.0
    %1823 = vadd.xlane.f32.xlu0 %v1822
    %v1824 = vpop.xlane.xlu0 %1823
    %v1825 = vsel %vm220, %v1767, 0.0
    %1826 = vadd.xlane.f32.xlu0 %v1825
    %v1827 = vpop.xlane.xlu0 %1826
    %v1828 = vsel %vm220, %v1769, 0.0
    %1829 = vadd.xlane.f32.xlu0 %v1828
    %v1830 = vpop.xlane.xlu0 %1829
    %v1831 = vsel %vm220, %v1771, 0.0
    %1832 = vadd.xlane.f32.xlu0 %v1831
    %v1833 = vpop.xlane.xlu0 %1832
    %v1834 = vsel %vm220, %v1773, 0.0
    %1835 = vadd.xlane.f32.xlu0 %v1834
    %v1836 = vpop.xlane.xlu0 %1835
    %v1837 = vsel %vm220, %v1775, 0.0
    %1838 = vadd.xlane.f32.xlu0 %v1837
    %v1839 = vpop.xlane.xlu0 %1838
    %v1840 = vmul.f32 %v1794, 0.35355338
    %v1841 = vmul.f32 %v1797, 0.35355338
    %v1842 = vmul.f32 %v1800, 0.35355338
    %v1843 = vmul.f32 %v1803, 0.35355338
    %v1844 = vmul.f32 %v1806, 0.35355338
    %v1845 = vmul.f32 %v1809, 0.35355338
    %v1846 = vmul.f32 %v1812, 0.35355338
    %v1847 = vmul.f32 %v1815, 0.35355338
    %v1848 = vmul.f32 %v1818, 0.35355338
    %v1849 = vmul.f32 %v1821, 0.35355338
    %v1850 = vmul.f32 %v1824, 0.35355338
    %v1851 = vmul.f32 %v1827, 0.35355338
    %v1852 = vmul.f32 %v1830, 0.35355338
    %v1853 = vmul.f32 %v1833, 0.35355338
    %v1854 = vmul.f32 %v1836, 0.35355338
    %v1855 = vmul.f32 %v1839, 0.35355338
    %v1872 = vperm.slane %v1840, %v80
    %v1873 = vperm.slane %v1841, %v80
    %v1874 = vperm.slane %v1842, %v80
    %v1875 = vperm.slane %v1843, %v80
    %v1876 = vperm.slane %v1844, %v80
    %v1877 = vperm.slane %v1845, %v80
    %v1878 = vperm.slane %v1846, %v80
    %v1879 = vperm.slane %v1847, %v80
    %v1880 = vperm.slane %v1848, %v80
    %v1881 = vperm.slane %v1849, %v80
    %v1882 = vperm.slane %v1850, %v80
    %v1883 = vperm.slane %v1851, %v80
    %v1884 = vperm.slane %v1852, %v80
    %v1885 = vperm.slane %v1853, %v80
    %v1886 = vperm.slane %v1854, %v80
    %v1887 = vperm.slane %v1855, %v80
    %v1888 = vsel %vm317, %v1873, %v1872
    %v1889 = vsel %vm319, %v1874, %v1888
    %v1890 = vsel %vm321, %v1875, %v1889
    %v1891 = vsel %vm323, %v1876, %v1890
    %v1892 = vsel %vm325, %v1877, %v1891
    %v1893 = vsel %vm327, %v1878, %v1892
    %v1894 = vsel %vm329, %v1879, %v1893
    %v1895 = vsel %vm317, %v1881, %v1880
    %v1896 = vsel %vm319, %v1882, %v1895
    %v1897 = vsel %vm321, %v1883, %v1896
    %v1898 = vsel %vm323, %v1884, %v1897
    %v1899 = vsel %vm325, %v1885, %v1898
    %v1900 = vsel %vm327, %v1886, %v1899
    %v1901 = vsel %vm329, %v1887, %v1900
    %v1904 = vsel %vm220, %v1894, -inf
    %1905 = vmax.xlane.f32.xlu0 %v1904
    %v1906 = vpop.xlane.xlu0 %1905
    %v1907 = vsel %vm220, %v1901, -inf
    %1908 = vmax.xlane.f32.xlu0 %v1907
    %v1909 = vpop.xlane.xlu0 %1908
    %v1912 = vperm.slane %v1906, 0
    %v1913 = vperm.slane %v1906, 1
    %v1914 = vperm.slane %v1906, 2
    %v1915 = vperm.slane %v1906, 3
    %v1916 = vperm.slane %v1906, 4
    %v1917 = vperm.slane %v1906, 5
    %v1918 = vperm.slane %v1906, 6
    %v1919 = vperm.slane %v1906, 7
    %v1920 = vperm.slane %v1909, 0
    %v1921 = vperm.slane %v1909, 1
    %v1922 = vperm.slane %v1909, 2
    %v1923 = vperm.slane %v1909, 3
    %v1924 = vperm.slane %v1909, 4
    %v1925 = vperm.slane %v1909, 5
    %v1926 = vperm.slane %v1909, 6
    %v1927 = vperm.slane %v1909, 7
    %v1944 = vsub.f32 %v1840, %v1912
    %v1945 = vsub.f32 %v1841, %v1913
    %v1946 = vsub.f32 %v1842, %v1914
    %v1947 = vsub.f32 %v1843, %v1915
    %v1948 = vsub.f32 %v1844, %v1916
    %v1949 = vsub.f32 %v1845, %v1917
    %v1950 = vsub.f32 %v1846, %v1918
    %v1951 = vsub.f32 %v1847, %v1919
    %v1952 = vsub.f32 %v1848, %v1920
    %v1953 = vsub.f32 %v1849, %v1921
    %v1954 = vsub.f32 %v1850, %v1922
    %v1955 = vsub.f32 %v1851, %v1923
    %v1956 = vsub.f32 %v1852, %v1924
    %v1957 = vsub.f32 %v1853, %v1925
    %v1958 = vsub.f32 %v1854, %v1926
    %v1959 = vsub.f32 %v1855, %v1927
    %v1960 = vmul.f32 %v1944, 1.442695
    %v1961 = vpow.pop %v1960
    %v1962 = vmul.f32 %v1945, 1.442695
    %v1963 = vpow.pop %v1962
    %v1964 = vmul.f32 %v1946, 1.442695
    %v1965 = vpow.pop %v1964
    %v1966 = vmul.f32 %v1947, 1.442695
    %v1967 = vpow.pop %v1966
    %v1968 = vmul.f32 %v1948, 1.442695
    %v1969 = vpow.pop %v1968
    %v1970 = vmul.f32 %v1949, 1.442695
    %v1971 = vpow.pop %v1970
    %v1972 = vmul.f32 %v1950, 1.442695
    %v1973 = vpow.pop %v1972
    %v1974 = vmul.f32 %v1951, 1.442695
    %v1975 = vpow.pop %v1974
    %v1976 = vmul.f32 %v1952, 1.442695
    %v1977 = vpow.pop %v1976
    %v1978 = vmul.f32 %v1953, 1.442695
    %v1979 = vpow.pop %v1978
    %v1980 = vmul.f32 %v1954, 1.442695
    %v1981 = vpow.pop %v1980
    %v1982 = vmul.f32 %v1955, 1.442695
    %v1983 = vpow.pop %v1982
    %v1984 = vmul.f32 %v1956, 1.442695
    %v1985 = vpow.pop %v1984
    %v1986 = vmul.f32 %v1957, 1.442695
    %v1987 = vpow.pop %v1986
    %v1988 = vmul.f32 %v1958, 1.442695
    %v1989 = vpow.pop %v1988
    %v1990 = vmul.f32 %v1959, 1.442695
    %v1991 = vpow.pop %v1990
    %2008 = vset.pattern.permute.xlu0 0
    %2009 = vperm.xlu0 %2008, %v1961
    %v2010 = vpop.permute.xlu0 %2009
    %2011 = vset.pattern.permute.xlu0 0
    %2012 = vperm.xlu0 %2011, %v1963
    %v2013 = vpop.permute.xlu0 %2012
    %2014 = vset.pattern.permute.xlu0 0
    %2015 = vperm.xlu0 %2014, %v1965
    %v2016 = vpop.permute.xlu0 %2015
    %2017 = vset.pattern.permute.xlu0 0
    %2018 = vperm.xlu0 %2017, %v1967
    %v2019 = vpop.permute.xlu0 %2018
    %2020 = vset.pattern.permute.xlu0 0
    %2021 = vperm.xlu0 %2020, %v1969
    %v2022 = vpop.permute.xlu0 %2021
    %2023 = vset.pattern.permute.xlu0 0
    %2024 = vperm.xlu0 %2023, %v1971
    %v2025 = vpop.permute.xlu0 %2024
    %2026 = vset.pattern.permute.xlu0 0
    %2027 = vperm.xlu0 %2026, %v1973
    %v2028 = vpop.permute.xlu0 %2027
    %2029 = vset.pattern.permute.xlu0 0
    %2030 = vperm.xlu0 %2029, %v1975
    %v2031 = vpop.permute.xlu0 %2030
    %2032 = vset.pattern.permute.xlu0 0
    %2033 = vperm.xlu0 %2032, %v1977
    %v2034 = vpop.permute.xlu0 %2033
    %2035 = vset.pattern.permute.xlu0 0
    %2036 = vperm.xlu0 %2035, %v1979
    %v2037 = vpop.permute.xlu0 %2036
    %2038 = vset.pattern.permute.xlu0 0
    %2039 = vperm.xlu0 %2038, %v1981
    %v2040 = vpop.permute.xlu0 %2039
    %2041 = vset.pattern.permute.xlu0 0
    %2042 = vperm.xlu0 %2041, %v1983
    %v2043 = vpop.permute.xlu0 %2042
    %2044 = vset.pattern.permute.xlu0 0
    %2045 = vperm.xlu0 %2044, %v1985
    %v2046 = vpop.permute.xlu0 %2045
    %2047 = vset.pattern.permute.xlu0 0
    %2048 = vperm.xlu0 %2047, %v1987
    %v2049 = vpop.permute.xlu0 %2048
    %2050 = vset.pattern.permute.xlu0 0
    %2051 = vperm.xlu0 %2050, %v1989
    %v2052 = vpop.permute.xlu0 %2051
    %2053 = vset.pattern.permute.xlu0 0
    %2054 = vperm.xlu0 %2053, %v1991
    %v2055 = vpop.permute.xlu0 %2054
    %v2056 = vperm.slane %v2010, %v80
    %v2057 = vperm.slane %v2013, %v80
    %v2058 = vperm.slane %v2016, %v80
    %v2059 = vperm.slane %v2019, %v80
    %v2060 = vperm.slane %v2022, %v80
    %v2061 = vperm.slane %v2025, %v80
    %v2062 = vperm.slane %v2028, %v80
    %v2063 = vperm.slane %v2031, %v80
    %v2064 = vperm.slane %v2034, %v80
    %v2065 = vperm.slane %v2037, %v80
    %v2066 = vperm.slane %v2040, %v80
    %v2067 = vperm.slane %v2043, %v80
    %v2068 = vperm.slane %v2046, %v80
    %v2069 = vperm.slane %v2049, %v80
    %v2070 = vperm.slane %v2052, %v80
    %v2071 = vperm.slane %v2055, %v80
    %v2072 = vsel %vm317, %v2057, %v2056
    %v2073 = vsel %vm319, %v2058, %v2072
    %v2074 = vsel %vm321, %v2059, %v2073
    %v2075 = vsel %vm323, %v2060, %v2074
    %v2076 = vsel %vm325, %v2061, %v2075
    %v2077 = vsel %vm327, %v2062, %v2076
    %v2078 = vsel %vm329, %v2063, %v2077
    %v2079 = vsel %vm317, %v2065, %v2064
    %v2080 = vsel %vm319, %v2066, %v2079
    %v2081 = vsel %vm321, %v2067, %v2080
    %v2082 = vsel %vm323, %v2068, %v2081
    %v2083 = vsel %vm325, %v2069, %v2082
    %v2084 = vsel %vm327, %v2070, %v2083
    %v2085 = vsel %vm329, %v2071, %v2084
    %v2088 = vsel %vm220, %v2078, 0.0
    %2089 = vadd.xlane.f32.xlu0 %v2088
    %v2090 = vpop.xlane.xlu0 %2089
    %v2091 = vsel %vm220, %v2085, 0.0
    %2092 = vadd.xlane.f32.xlu0 %v2091
    %v2093 = vpop.xlane.xlu0 %2092
    %v2094 = vrcp.pop %v2090
    %v2095 = vrcp.pop %v2093
    %v2098 = vperm.slane %v2094, 0
    %v2099 = vperm.slane %v2094, 1
    %v2100 = vperm.slane %v2094, 2
    %v2101 = vperm.slane %v2094, 3
    %v2102 = vperm.slane %v2094, 4
    %v2103 = vperm.slane %v2094, 5
    %v2104 = vperm.slane %v2094, 6
    %v2105 = vperm.slane %v2094, 7
    %v2106 = vperm.slane %v2095, 0
    %v2107 = vperm.slane %v2095, 1
    %v2108 = vperm.slane %v2095, 2
    %v2109 = vperm.slane %v2095, 3
    %v2110 = vperm.slane %v2095, 4
    %v2111 = vperm.slane %v2095, 5
    %v2112 = vperm.slane %v2095, 6
    %v2113 = vperm.slane %v2095, 7
    %v2130 = vmul.f32 %v1961, %v2098
    %v2131 = vmul.f32 %v1963, %v2099
    %v2132 = vmul.f32 %v1965, %v2100
    %v2133 = vmul.f32 %v1967, %v2101
    %v2134 = vmul.f32 %v1969, %v2102
    %v2135 = vmul.f32 %v1971, %v2103
    %v2136 = vmul.f32 %v1973, %v2104
    %v2137 = vmul.f32 %v1975, %v2105
    %v2138 = vmul.f32 %v1977, %v2106
    %v2139 = vmul.f32 %v1979, %v2107
    %v2140 = vmul.f32 %v1981, %v2108
    %v2141 = vmul.f32 %v1983, %v2109
    %v2142 = vmul.f32 %v1985, %v2110
    %v2143 = vmul.f32 %v1987, %v2111
    %v2144 = vmul.f32 %v1989, %v2112
    %v2145 = vmul.f32 %v1991, %v2113
    %v2146 = vsel %vm92, 1, 0
    %vm2147 = vcmp.eq.s32.totalorder %v2146, 1
    %2149 = vset.pattern.permute.xlu0 0
    %2150 = vperm.xlu0 %2149, %v2130
    %v2151 = vpop.permute.xlu0 %2150
    %2154 = vset.pattern.permute.xlu0 0
    %2155 = vperm.xlu0 %2154, %v2131
    %v2156 = vpop.permute.xlu0 %2155
    %2159 = vset.pattern.permute.xlu0 0
    %2160 = vperm.xlu0 %2159, %v2132
    %v2161 = vpop.permute.xlu0 %2160
    %2164 = vset.pattern.permute.xlu0 0
    %2165 = vperm.xlu0 %2164, %v2133
    %v2166 = vpop.permute.xlu0 %2165
    %2169 = vset.pattern.permute.xlu0 0
    %2170 = vperm.xlu0 %2169, %v2134
    %v2171 = vpop.permute.xlu0 %2170
    %2174 = vset.pattern.permute.xlu0 0
    %2175 = vperm.xlu0 %2174, %v2135
    %v2176 = vpop.permute.xlu0 %2175
    %2179 = vset.pattern.permute.xlu0 0
    %2180 = vperm.xlu0 %2179, %v2136
    %v2181 = vpop.permute.xlu0 %2180
    %2184 = vset.pattern.permute.xlu0 0
    %2185 = vperm.xlu0 %2184, %v2137
    %v2186 = vpop.permute.xlu0 %2185
    %2189 = vset.pattern.permute.xlu0 0
    %2190 = vperm.xlu0 %2189, %v2138
    %v2191 = vpop.permute.xlu0 %2190
    %2194 = vset.pattern.permute.xlu0 0
    %2195 = vperm.xlu0 %2194, %v2139
    %v2196 = vpop.permute.xlu0 %2195
    %2199 = vset.pattern.permute.xlu0 0
    %2200 = vperm.xlu0 %2199, %v2140
    %v2201 = vpop.permute.xlu0 %2200
    %2204 = vset.pattern.permute.xlu0 0
    %2205 = vperm.xlu0 %2204, %v2141
    %v2206 = vpop.permute.xlu0 %2205
    %2209 = vset.pattern.permute.xlu0 0
    %2210 = vperm.xlu0 %2209, %v2142
    %v2211 = vpop.permute.xlu0 %2210
    %2214 = vset.pattern.permute.xlu0 0
    %2215 = vperm.xlu0 %2214, %v2143
    %v2216 = vpop.permute.xlu0 %2215
    %2219 = vset.pattern.permute.xlu0 0
    %2220 = vperm.xlu0 %2219, %v2144
    %v2221 = vpop.permute.xlu0 %2220
    %2224 = vset.pattern.permute.xlu0 0
    %2225 = vperm.xlu0 %2224, %v2145
    %v2226 = vpop.permute.xlu0 %2225
    %v2228 = vsel %vm2147, %v2151, 0.0
    %v2229 = vsel %vm2147, %v2156, 0.0
    %v2230 = vsel %vm2147, %v2161, 0.0
    %v2231 = vsel %vm2147, %v2166, 0.0
    %v2232 = vsel %vm2147, %v2171, 0.0
    %v2233 = vsel %vm2147, %v2176, 0.0
    %v2234 = vsel %vm2147, %v2181, 0.0
    %v2235 = vsel %vm2147, %v2186, 0.0
    %v2236 = vsel %vm2147, %v2191, 0.0
    %v2237 = vsel %vm2147, %v2196, 0.0
    %v2238 = vsel %vm2147, %v2201, 0.0
    %v2239 = vsel %vm2147, %v2206, 0.0
    %v2240 = vsel %vm2147, %v2211, 0.0
    %v2241 = vsel %vm2147, %v2216, 0.0
    %v2242 = vsel %vm2147, %v2221, 0.0
    %v2243 = vsel %vm2147, %v2226, 0.0
    %v2244 = vadd.f32 %v1728, %v2228
    %v2245 = vadd.f32 %v1729, %v2229
    %v2246 = vadd.f32 %v1730, %v2230
    %v2247 = vadd.f32 %v1731, %v2231
    %v2248 = vadd.f32 %v1732, %v2232
    %v2249 = vadd.f32 %v1733, %v2233
    %v2250 = vadd.f32 %v1734, %v2234
    %v2251 = vadd.f32 %v1735, %v2235
    %v2252 = vadd.f32 %v1736, %v2236
    %v2253 = vadd.f32 %v1737, %v2237
    %v2254 = vadd.f32 %v1738, %v2238
    %v2255 = vadd.f32 %v1739, %v2239
    %v2256 = vadd.f32 %v1740, %v2240
    %v2257 = vadd.f32 %v1741, %v2241
    %v2258 = vadd.f32 %v1742, %v2242
    %v2259 = vadd.f32 %v1743, %v2243
    %2260 = vrot.lane.b32.xlu0 %v146, 64
    %v2261 = vpop.permute.xlu0 %2260
    %2262 = vrot.lane.b32.xlu0 %v148, 64
    %v2263 = vpop.permute.xlu0 %2262
    %v2266 = vmul.f32 %v2244, %v2261
    %v2267 = vmul.f32 %v2245, %v2261
    %v2268 = vmul.f32 %v2246, %v2261
    %v2269 = vmul.f32 %v2247, %v2261
    %v2270 = vmul.f32 %v2248, %v2261
    %v2271 = vmul.f32 %v2249, %v2261
    %v2272 = vmul.f32 %v2250, %v2261
    %v2273 = vmul.f32 %v2251, %v2261
    %v2274 = vmul.f32 %v2252, %v2263
    %v2275 = vmul.f32 %v2253, %v2263
    %v2276 = vmul.f32 %v2254, %v2263
    %v2277 = vmul.f32 %v2255, %v2263
    %v2278 = vmul.f32 %v2256, %v2263
    %v2279 = vmul.f32 %v2257, %v2263
    %v2280 = vmul.f32 %v2258, %v2263
    %v2281 = vmul.f32 %v2259, %v2263
    %v2282 = vsel %vm132, %v2266, 0.0
    %v2283 = vrot.slane %v2282, 4
    %v2284 = vadd.f32 %v2282, %v2283
    %v2285 = vrot.slane %v2284, 2
    %v2286 = vadd.f32 %v2284, %v2285
    %v2287 = vrot.slane %v2286, 1
    %v2288 = vadd.f32 %v2286, %v2287
    %v2289 = vsel %vm132, %v2267, 0.0
    %v2290 = vrot.slane %v2289, 4
    %v2291 = vadd.f32 %v2289, %v2290
    %v2292 = vrot.slane %v2291, 2
    %v2293 = vadd.f32 %v2291, %v2292
    %v2294 = vrot.slane %v2293, 1
    %v2295 = vadd.f32 %v2293, %v2294
    %v2296 = vsel %vm132, %v2268, 0.0
    %v2297 = vrot.slane %v2296, 4
    %v2298 = vadd.f32 %v2296, %v2297
    %v2299 = vrot.slane %v2298, 2
    %v2300 = vadd.f32 %v2298, %v2299
    %v2301 = vrot.slane %v2300, 1
    %v2302 = vadd.f32 %v2300, %v2301
    %v2303 = vsel %vm132, %v2269, 0.0
    %v2304 = vrot.slane %v2303, 4
    %v2305 = vadd.f32 %v2303, %v2304
    %v2306 = vrot.slane %v2305, 2
    %v2307 = vadd.f32 %v2305, %v2306
    %v2308 = vrot.slane %v2307, 1
    %v2309 = vadd.f32 %v2307, %v2308
    %v2310 = vsel %vm132, %v2270, 0.0
    %v2311 = vrot.slane %v2310, 4
    %v2312 = vadd.f32 %v2310, %v2311
    %v2313 = vrot.slane %v2312, 2
    %v2314 = vadd.f32 %v2312, %v2313
    %v2315 = vrot.slane %v2314, 1
    %v2316 = vadd.f32 %v2314, %v2315
    %v2317 = vsel %vm132, %v2271, 0.0
    %v2318 = vrot.slane %v2317, 4
    %v2319 = vadd.f32 %v2317, %v2318
    %v2320 = vrot.slane %v2319, 2
    %v2321 = vadd.f32 %v2319, %v2320
    %v2322 = vrot.slane %v2321, 1
    %v2323 = vadd.f32 %v2321, %v2322
    %v2324 = vsel %vm132, %v2272, 0.0
    %v2325 = vrot.slane %v2324, 4
    %v2326 = vadd.f32 %v2324, %v2325
    %v2327 = vrot.slane %v2326, 2
    %v2328 = vadd.f32 %v2326, %v2327
    %v2329 = vrot.slane %v2328, 1
    %v2330 = vadd.f32 %v2328, %v2329
    %v2331 = vsel %vm132, %v2273, 0.0
    %v2332 = vrot.slane %v2331, 4
    %v2333 = vadd.f32 %v2331, %v2332
    %v2334 = vrot.slane %v2333, 2
    %v2335 = vadd.f32 %v2333, %v2334
    %v2336 = vrot.slane %v2335, 1
    %v2337 = vadd.f32 %v2335, %v2336
    %v2338 = vsel %vm132, %v2274, 0.0
    %v2339 = vrot.slane %v2338, 4
    %v2340 = vadd.f32 %v2338, %v2339
    %v2341 = vrot.slane %v2340, 2
    %v2342 = vadd.f32 %v2340, %v2341
    %v2343 = vrot.slane %v2342, 1
    %v2344 = vadd.f32 %v2342, %v2343
    %v2345 = vsel %vm132, %v2275, 0.0
    %v2346 = vrot.slane %v2345, 4
    %v2347 = vadd.f32 %v2345, %v2346
    %v2348 = vrot.slane %v2347, 2
    %v2349 = vadd.f32 %v2347, %v2348
    %v2350 = vrot.slane %v2349, 1
    %v2351 = vadd.f32 %v2349, %v2350
    %v2352 = vsel %vm132, %v2276, 0.0
    %v2353 = vrot.slane %v2352, 4
    %v2354 = vadd.f32 %v2352, %v2353
    %v2355 = vrot.slane %v2354, 2
    %v2356 = vadd.f32 %v2354, %v2355
    %v2357 = vrot.slane %v2356, 1
    %v2358 = vadd.f32 %v2356, %v2357
    %v2359 = vsel %vm132, %v2277, 0.0
    %v2360 = vrot.slane %v2359, 4
    %v2361 = vadd.f32 %v2359, %v2360
    %v2362 = vrot.slane %v2361, 2
    %v2363 = vadd.f32 %v2361, %v2362
    %v2364 = vrot.slane %v2363, 1
    %v2365 = vadd.f32 %v2363, %v2364
    %v2366 = vsel %vm132, %v2278, 0.0
    %v2367 = vrot.slane %v2366, 4
    %v2368 = vadd.f32 %v2366, %v2367
    %v2369 = vrot.slane %v2368, 2
    %v2370 = vadd.f32 %v2368, %v2369
    %v2371 = vrot.slane %v2370, 1
    %v2372 = vadd.f32 %v2370, %v2371
    %v2373 = vsel %vm132, %v2279, 0.0
    %v2374 = vrot.slane %v2373, 4
    %v2375 = vadd.f32 %v2373, %v2374
    %v2376 = vrot.slane %v2375, 2
    %v2377 = vadd.f32 %v2375, %v2376
    %v2378 = vrot.slane %v2377, 1
    %v2379 = vadd.f32 %v2377, %v2378
    %v2380 = vsel %vm132, %v2280, 0.0
    %v2381 = vrot.slane %v2380, 4
    %v2382 = vadd.f32 %v2380, %v2381
    %v2383 = vrot.slane %v2382, 2
    %v2384 = vadd.f32 %v2382, %v2383
    %v2385 = vrot.slane %v2384, 1
    %v2386 = vadd.f32 %v2384, %v2385
    %v2387 = vsel %vm132, %v2281, 0.0
    %v2388 = vrot.slane %v2387, 4
    %v2389 = vadd.f32 %v2387, %v2388
    %v2390 = vrot.slane %v2389, 2
    %v2391 = vadd.f32 %v2389, %v2390
    %v2392 = vrot.slane %v2391, 1
    %v2393 = vadd.f32 %v2391, %v2392
    %v2394 = vpack.c.bf16 %v2288, %v2288
    %v2395 = vpack.c.bf16 %v2295, %v2295
    %v2396 = vpack.c.bf16 %v2302, %v2302
    %v2397 = vpack.c.bf16 %v2309, %v2309
    %v2398 = vpack.c.bf16 %v2316, %v2316
    %v2399 = vpack.c.bf16 %v2323, %v2323
    %v2400 = vpack.c.bf16 %v2330, %v2330
    %v2401 = vpack.c.bf16 %v2337, %v2337
    %v2402 = vpack.c.bf16 %v2344, %v2344
    %v2403 = vpack.c.bf16 %v2351, %v2351
    %v2404 = vpack.c.bf16 %v2358, %v2358
    %v2405 = vpack.c.bf16 %v2365, %v2365
    %v2406 = vpack.c.bf16 %v2372, %v2372
    %v2407 = vpack.c.bf16 %v2379, %v2379
    %v2408 = vpack.c.bf16 %v2386, %v2386
    %v2409 = vpack.c.bf16 %v2393, %v2393
    %v2426 = vunpack.c.l.b16 %v2394
    %v2427 = vunpack.c.l.b16 %v2395
    %v2428 = vunpack.c.l.b16 %v2396
    %v2429 = vunpack.c.l.b16 %v2397
    %v2430 = vunpack.c.l.b16 %v2398
    %v2431 = vunpack.c.l.b16 %v2399
    %v2432 = vunpack.c.l.b16 %v2400
    %v2433 = vunpack.c.l.b16 %v2401
    %v2434 = vunpack.c.l.b16 %v2402
    %v2435 = vunpack.c.l.b16 %v2403
    %v2436 = vunpack.c.l.b16 %v2404
    %v2437 = vunpack.c.l.b16 %v2405
    %v2438 = vunpack.c.l.b16 %v2406
    %v2439 = vunpack.c.l.b16 %v2407
    %v2440 = vunpack.c.l.b16 %v2408
    %v2441 = vunpack.c.l.b16 %v2409
    %v2442 = vsel %vm317, %v2427, %v2426
    %v2443 = vsel %vm319, %v2428, %v2442
    %v2444 = vsel %vm321, %v2429, %v2443
    %v2445 = vsel %vm323, %v2430, %v2444
    %v2446 = vsel %vm325, %v2431, %v2445
    %v2447 = vsel %vm327, %v2432, %v2446
    %v2448 = vsel %vm329, %v2433, %v2447
    %v2449 = vsel %vm317, %v2435, %v2434
    %v2450 = vsel %vm319, %v2436, %v2449
    %v2451 = vsel %vm321, %v2437, %v2450
    %v2452 = vsel %vm323, %v2438, %v2451
    %v2453 = vsel %vm325, %v2439, %v2452
    %v2454 = vsel %vm327, %v2440, %v2453
    %v2455 = vsel %vm329, %v2441, %v2454
    %v2456 = vpack.c.b16 %v2455, %v2448
    %2457 = vrot.lane.b32.xlu0 %v128, 32
    %v2458 = vpop.permute.xlu0 %2457
    %2459 = vrot.lane.b32.xlu0 %v129, 32
    %v2460 = vpop.permute.xlu0 %2459
    %2464 = vrot.lane.b32.xlu0 %v119, 32
    %v2465 = vpop.permute.xlu0 %2464
    %v2468 = vsel %vm132, %v2456, 0
    %2470 = vmatpush.bf16.msra.mxu0 0
    %2471 = vmatpush.bf16.msra.mxu0 0
    %2472 = vmatpush.bf16.msra.mxu0 0
    %2473 = vmatpush.bf16.msra.mxu0 0
    %2474 = vmatpush.bf16.msra.mxu0 0
    %2475 = vmatpush.bf16.msra.mxu0 0
    %2476 = vmatpush.bf16.msra.mxu0 %v2460
    %2477 = vmatpush.bf16.msra.mxu0 %v2458
    %2478 = vmatmul.bf16.gmra.mxu0 %v2468
    %v2479 = vpop.f32.mrf.mxu0
    %v2480 = vadd.f32 %v2465, %v2479
    %v2481 = vpop.f32.mrf.mxu0
    %v2482 = vadd.f32 %v2465, %v2481
    %2483 = vdwg.mxu0
    %v2484 = vadd.f32 %v77, %v2480
    %v2485 = vadd.f32 %v78, %v2482
    %v2486 = vsel %vm132, %v2484, 0.0
    %2487 = vadd.xlane.f32.xlu0 %v2486
    %v2488 = vpop.xlane.xlu0 %2487
    %v2489 = vsel %vm132, %v2485, 0.0
    %2490 = vadd.xlane.f32.xlu0 %v2489
    %v2491 = vpop.xlane.xlu0 %2490
    %v2492 = vrcp.pop 32.0
    %v2493 = vmul.f32 32.0, %v2492
    %v2494 = vsub.f32 1.0, %v2493
    %v2495 = vmul.f32 %v2492, %v2494
    %v2496 = vadd.f32 %v2492, %v2495
    %vm2497 = vweird.f32 %v2492
    %v2498 = vsel %vm2497, %v2492, %v2496
    %v2499 = vmul.f32 %v2488, %v2498
    %v2500 = vmul.f32 %v2491, %v2498
    %v2501 = vsub.f32 %v2484, %v2499
    %v2502 = vsub.f32 %v2485, %v2500
    %v2503 = vmul.f32 %v2501, %v2501
    %v2504 = vmul.f32 %v2502, %v2502
    %v2505 = vsel %vm132, %v2503, 0.0
    %2506 = vadd.xlane.f32.xlu0 %v2505
    %v2507 = vpop.xlane.xlu0 %2506
    %v2508 = vsel %vm132, %v2504, 0.0
    %2509 = vadd.xlane.f32.xlu0 %v2508
    %v2510 = vpop.xlane.xlu0 %2509
    %v2511 = vmul.f32 %v2507, %v2498
    %v2512 = vmul.f32 %v2510, %v2498
    %v2513 = vadd.f32 %v2511, 1e-05
    %v2514 = vadd.f32 %v2512, 1e-05
    %v2515 = vrsqrt.pop %v2513
    %v2516 = vmul.f32 %v2515, %v2513
    %v2517 = vmul.f32 %v2516, %v2515
    %v2518 = vmul.f32 0.5, %v2517
    %v2519 = vsub.f32 1.5, %v2518
    %v2520 = vmul.f32 %v2515, %v2519
    %vm2521 = vweird.f32 %v2513
    %vm2522 = vweird.f32 %v2515
    %vm2523 = vmor %vm2521, %vm2522
    %v2524 = vsel %vm2523, %v2515, %v2520
    %v2525 = vrsqrt.pop %v2514
    %v2526 = vmul.f32 %v2525, %v2514
    %v2527 = vmul.f32 %v2526, %v2525
    %v2528 = vmul.f32 0.5, %v2527
    %v2529 = vsub.f32 1.5, %v2528
    %v2530 = vmul.f32 %v2525, %v2529
    %vm2531 = vweird.f32 %v2514
    %vm2532 = vweird.f32 %v2525
    %vm2533 = vmor %vm2531, %vm2532
    %v2534 = vsel %vm2533, %v2525, %v2530
    %v2535 = vmul.f32 %v2501, %v2524
    %v2536 = vmul.f32 %v2502, %v2534
    %v2537 = vperm.slane %v117, 3
    %v2538 = vmul.f32 %v2535, %v2537
    %v2539 = vmul.f32 %v2536, %v2537
    %v2540 = vperm.slane %v117, 4
    %v2541 = vadd.f32 %v2538, %v2540
    %v2542 = vadd.f32 %v2539, %v2540
    %v2543 = vpack.c.bf16 %v2542, %v2541
    %v2544 = vperm.slane %v117, 1
    %v2549 = vunpack.c.l.b16 %v97
    %v2550 = vunpack.c.l.b16 %v98
    %v2551 = vunpack.c.l.b16 %v99
    %v2552 = vunpack.c.l.b16 %v100
    %v2553 = vpack.c.b16 %v2550, %v2549
    %v2554 = vpack.c.b16 %v2552, %v2551
    %v2558 = vsel %vm132, %v2543, 0
    %2560 = vmatpush.bf16.msra.mxu0 0
    %2561 = vmatpush.bf16.msra.mxu0 0
    %2562 = vmatpush.bf16.msra.mxu0 0
    %2563 = vmatpush.bf16.msra.mxu0 0
    %2564 = vmatpush.bf16.msra.mxu0 0
    %2565 = vmatpush.bf16.msra.mxu0 0
    %2566 = vmatpush.bf16.msra.mxu0 %v2554
    %2567 = vmatpush.bf16.msra.mxu0 %v2553
    %2568 = vmatmul.bf16.gmra.mxu0 %v2558
    %v2569 = vpop.f32.mrf.mxu0
    %v2570 = vadd.f32 %v2544, %v2569
    %v2571 = vpop.f32.mrf.mxu0
    %v2572 = vadd.f32 %v2544, %v2571
    %2573 = vdwg.mxu0
    %v2574 = vmax.f32 %v2570, 0.0
    %v2575 = vmax.f32 %v2572, 0.0
    %v2576 = vpack.c.bf16 %v2575, %v2574
    %v2577 = vperm.slane %v117, 2
    %v2594 = vunpack.c.l.b16 %v101
    %v2595 = vunpack.c.l.b16 %v102
    %v2596 = vunpack.c.l.b16 %v103
    %v2597 = vunpack.c.l.b16 %v104
    %v2598 = vunpack.c.l.b16 %v105
    %v2599 = vunpack.c.l.b16 %v106
    %v2600 = vunpack.c.l.b16 %v107
    %v2601 = vunpack.c.l.b16 %v108
    %v2602 = vunpack.c.l.b16 %v109
    %v2603 = vunpack.c.l.b16 %v110
    %v2604 = vunpack.c.l.b16 %v111
    %v2605 = vunpack.c.l.b16 %v112
    %v2606 = vunpack.c.l.b16 %v113
    %v2607 = vunpack.c.l.b16 %v114
    %v2608 = vunpack.c.l.b16 %v115
    %v2609 = vunpack.c.l.b16 %v116
    %v2610 = vpack.c.b16 %v2595, %v2594
    %v2611 = vpack.c.b16 %v2597, %v2596
    %v2612 = vpack.c.b16 %v2599, %v2598
    %v2613 = vpack.c.b16 %v2601, %v2600
    %v2614 = vpack.c.b16 %v2603, %v2602
    %v2615 = vpack.c.b16 %v2605, %v2604
    %v2616 = vpack.c.b16 %v2607, %v2606
    %v2617 = vpack.c.b16 %v2609, %v2608
    %2626 = vmatpush.bf16.msra.mxu0 %v2617
    %2627 = vmatpush.bf16.msra.mxu0 %v2616
    %2628 = vmatpush.bf16.msra.mxu0 %v2615
    %2629 = vmatpush.bf16.msra.mxu0 %v2614
    %2630 = vmatpush.bf16.msra.mxu0 %v2613
    %2631 = vmatpush.bf16.msra.mxu0 %v2612
    %2632 = vmatpush.bf16.msra.mxu0 %v2611
    %2633 = vmatpush.bf16.msra.mxu0 %v2610
    %2634 = vmatmul.bf16.gmra.mxu0 %v2576
    %v2635 = vpop.f32.mrf.mxu0
    %v2636 = vadd.f32 %v2577, %v2635
    %v2637 = vpop.f32.mrf.mxu0
    %v2638 = vadd.f32 %v2577, %v2637
    %2639 = vdwg.mxu0
    %v2640 = vadd.f32 %v2541, %v2636
    %v2641 = vadd.f32 %v2542, %v2638
    %v2642 = vsel %vm132, %v2640, 0.0
    %2643 = vadd.xlane.f32.xlu0 %v2642
    %v2644 = vpop.xlane.xlu0 %2643
    %v2645 = vsel %vm132, %v2641, 0.0
    %2646 = vadd.xlane.f32.xlu0 %v2645
    %v2647 = vpop.xlane.xlu0 %2646
    %v2648 = vmul.f32 %v2644, %v2498
    %v2649 = vmul.f32 %v2647, %v2498
    %v2650 = vsub.f32 %v2640, %v2648
    %v2651 = vsub.f32 %v2641, %v2649
    %v2652 = vmul.f32 %v2650, %v2650
    %v2653 = vmul.f32 %v2651, %v2651
    %v2654 = vsel %vm132, %v2652, 0.0
    %2655 = vadd.xlane.f32.xlu0 %v2654
    %v2656 = vpop.xlane.xlu0 %2655
    %v2657 = vsel %vm132, %v2653, 0.0
    %2658 = vadd.xlane.f32.xlu0 %v2657
    %v2659 = vpop.xlane.xlu0 %2658
    %v2660 = vmul.f32 %v2656, %v2498
    %v2661 = vmul.f32 %v2659, %v2498
    %v2662 = vadd.f32 %v2660, 1e-05
    %v2663 = vadd.f32 %v2661, 1e-05
    %v2664 = vrsqrt.pop %v2662
    %v2665 = vmul.f32 %v2664, %v2662
    %v2666 = vmul.f32 %v2665, %v2664
    %v2667 = vmul.f32 0.5, %v2666
    %v2668 = vsub.f32 1.5, %v2667
    %v2669 = vmul.f32 %v2664, %v2668
    %vm2670 = vweird.f32 %v2662
    %vm2671 = vweird.f32 %v2664
    %vm2672 = vmor %vm2670, %vm2671
    %v2673 = vsel %vm2672, %v2664, %v2669
    %v2674 = vrsqrt.pop %v2663
    %v2675 = vmul.f32 %v2674, %v2663
    %v2676 = vmul.f32 %v2675, %v2674
    %v2677 = vmul.f32 0.5, %v2676
    %v2678 = vsub.f32 1.5, %v2677
    %v2679 = vmul.f32 %v2674, %v2678
    %vm2680 = vweird.f32 %v2663
    %vm2681 = vweird.f32 %v2674
    %vm2682 = vmor %vm2680, %vm2681
    %v2683 = vsel %vm2682, %v2674, %v2679
    %v2684 = vmul.f32 %v2650, %v2673
    %v2685 = vmul.f32 %v2651, %v2683
    %v2686 = vperm.slane %v117, 5
    %v2687 = vmul.f32 %v2684, %v2686
    %v2688 = vmul.f32 %v2685, %v2686
    %v2689 = vperm.slane %v117, 6
    %v2690 = vadd.f32 %v2687, %v2689
    %v2691 = vadd.f32 %v2688, %v2689
    %s2692 = scalar_lea.vmem %s3, 16
    %v2693 = vld [vmem:[%s2692] sm:$0xf]
    %v2694 = vld [vmem:[%s2692 + $0x4] sm:$0xf]
    %v2695 = vld [vmem:[%s2692 + $0x8] sm:$0xf]
    %v2696 = vld [vmem:[%s2692 + $0xc] sm:$0xf]
    %s2697 = scalar_lea.vmem %s4, 16
    %v2698 = vld [vmem:[%s2697] sm:$0xf]
    %v2699 = vld [vmem:[%s2697 + $0x4] sm:$0xf]
    %v2700 = vld [vmem:[%s2697 + $0x8] sm:$0xf]
    %v2701 = vld [vmem:[%s2697 + $0xc] sm:$0xf]
    %s2702 = scalar_lea.vmem %s5, 64
    %v2703 = vld [vmem:[%s2702] sm:$0xf]
    %v2704 = vld [vmem:[%s2702 + $0x4] sm:$0xf]
    %v2705 = vld [vmem:[%s2702 + $0x8] sm:$0xf]
    %v2706 = vld [vmem:[%s2702 + $0xc] sm:$0xf]
    %v2707 = vld [vmem:[%s2702 + $0x10] sm:$0xf]
    %v2708 = vld [vmem:[%s2702 + $0x14] sm:$0xf]
    %v2709 = vld [vmem:[%s2702 + $0x18] sm:$0xf]
    %v2710 = vld [vmem:[%s2702 + $0x1c] sm:$0xf]
    %v2711 = vld [vmem:[%s2702 + $0x20] sm:$0xf]
    %v2712 = vld [vmem:[%s2702 + $0x24] sm:$0xf]
    %v2713 = vld [vmem:[%s2702 + $0x28] sm:$0xf]
    %v2714 = vld [vmem:[%s2702 + $0x2c] sm:$0xf]
    %v2715 = vld [vmem:[%s2702 + $0x30] sm:$0xf]
    %v2716 = vld [vmem:[%s2702 + $0x34] sm:$0xf]
    %v2717 = vld [vmem:[%s2702 + $0x38] sm:$0xf]
    %v2718 = vld [vmem:[%s2702 + $0x3c] sm:$0xf]
    %s2719 = scalar_lea.vmem %s6, 8
    %v2720 = vld [vmem:[%s2719] sm:$0xff]
    %v2721 = vpack.c.bf16 %v2691, %v2690
    %v2722 = vperm.slane %v2720, 0
    %v2727 = vunpack.c.l.b16 %v2693
    %v2728 = vunpack.c.l.b16 %v2694
    %v2729 = vunpack.c.l.b16 %v2695
    %v2730 = vunpack.c.l.b16 %v2696
    %v2731 = vpack.c.b16 %v2728, %v2727
    %v2732 = vpack.c.b16 %v2730, %v2729
    %v2736 = vsel %vm132, %v2721, 0
    %2738 = vmatpush.bf16.msra.mxu0 0
    %2739 = vmatpush.bf16.msra.mxu0 0
    %2740 = vmatpush.bf16.msra.mxu0 0
    %2741 = vmatpush.bf16.msra.mxu0 0
    %2742 = vmatpush.bf16.msra.mxu0 0
    %2743 = vmatpush.bf16.msra.mxu0 0
    %2744 = vmatpush.bf16.msra.mxu0 %v2732
    %2745 = vmatpush.bf16.msra.mxu0 %v2731
    %2746 = vmatmul.bf16.gmra.mxu0 %v2736
    %v2747 = vpop.f32.mrf.mxu0
    %v2748 = vadd.f32 %v2722, %v2747
    %v2749 = vpop.f32.mrf.mxu0
    %v2750 = vadd.f32 %v2722, %v2749
    %2751 = vdwg.mxu0
    %v2754 = vrot.slane %v2748, 1
    %v2755 = vrot.slane %v2748, 2
    %v2756 = vrot.slane %v2748, 3
    %v2757 = vrot.slane %v2748, 4
    %v2758 = vrot.slane %v2748, 5
    %v2759 = vrot.slane %v2748, 6
    %v2760 = vrot.slane %v2748, 7
    %v2761 = vrot.slane %v2750, 1
    %v2762 = vrot.slane %v2750, 2
    %v2763 = vrot.slane %v2750, 3
    %v2764 = vrot.slane %v2750, 4
    %v2765 = vrot.slane %v2750, 5
    %v2766 = vrot.slane %v2750, 6
    %v2767 = vrot.slane %v2750, 7
    %v2768 = vperm.slane %v2748, 0
    %v2769 = vperm.slane %v2754, 0
    %v2770 = vperm.slane %v2755, 0
    %v2771 = vperm.slane %v2756, 0
    %v2772 = vperm.slane %v2757, 0
    %v2773 = vperm.slane %v2758, 0
    %v2774 = vperm.slane %v2759, 0
    %v2775 = vperm.slane %v2760, 0
    %v2776 = vperm.slane %v2750, 0
    %v2777 = vperm.slane %v2761, 0
    %v2778 = vperm.slane %v2762, 0
    %v2779 = vperm.slane %v2763, 0
    %v2780 = vperm.slane %v2764, 0
    %v2781 = vperm.slane %v2765, 0
    %v2782 = vperm.slane %v2766, 0
    %v2783 = vperm.slane %v2767, 0
    %2800 = vrot.lane.b32.xlu0 %v2748, 96
    %v2801 = vpop.permute.xlu0 %2800
    %2802 = vrot.lane.b32.xlu0 %v2750, 96
    %v2803 = vpop.permute.xlu0 %2802
    %v2806 = vmul.f32 %v2768, %v2801
    %v2807 = vmul.f32 %v2769, %v2801
    %v2808 = vmul.f32 %v2770, %v2801
    %v2809 = vmul.f32 %v2771, %v2801
    %v2810 = vmul.f32 %v2772, %v2801
    %v2811 = vmul.f32 %v2773, %v2801
    %v2812 = vmul.f32 %v2774, %v2801
    %v2813 = vmul.f32 %v2775, %v2801
    %v2814 = vmul.f32 %v2776, %v2803
    %v2815 = vmul.f32 %v2777, %v2803
    %v2816 = vmul.f32 %v2778, %v2803
    %v2817 = vmul.f32 %v2779, %v2803
    %v2818 = vmul.f32 %v2780, %v2803
    %v2819 = vmul.f32 %v2781, %v2803
    %v2820 = vmul.f32 %v2782, %v2803
    %v2821 = vmul.f32 %v2783, %v2803
    %v2822 = vsel %vm220, %v2806, 0.0
    %2823 = vadd.xlane.f32.xlu0 %v2822
    %v2824 = vpop.xlane.xlu0 %2823
    %v2825 = vsel %vm220, %v2807, 0.0
    %2826 = vadd.xlane.f32.xlu0 %v2825
    %v2827 = vpop.xlane.xlu0 %2826
    %v2828 = vsel %vm220, %v2808, 0.0
    %2829 = vadd.xlane.f32.xlu0 %v2828
    %v2830 = vpop.xlane.xlu0 %2829
    %v2831 = vsel %vm220, %v2809, 0.0
    %2832 = vadd.xlane.f32.xlu0 %v2831
    %v2833 = vpop.xlane.xlu0 %2832
    %v2834 = vsel %vm220, %v2810, 0.0
    %2835 = vadd.xlane.f32.xlu0 %v2834
    %v2836 = vpop.xlane.xlu0 %2835
    %v2837 = vsel %vm220, %v2811, 0.0
    %2838 = vadd.xlane.f32.xlu0 %v2837
    %v2839 = vpop.xlane.xlu0 %2838
    %v2840 = vsel %vm220, %v2812, 0.0
    %2841 = vadd.xlane.f32.xlu0 %v2840
    %v2842 = vpop.xlane.xlu0 %2841
    %v2843 = vsel %vm220, %v2813, 0.0
    %2844 = vadd.xlane.f32.xlu0 %v2843
    %v2845 = vpop.xlane.xlu0 %2844
    %v2846 = vsel %vm220, %v2814, 0.0
    %2847 = vadd.xlane.f32.xlu0 %v2846
    %v2848 = vpop.xlane.xlu0 %2847
    %v2849 = vsel %vm220, %v2815, 0.0
    %2850 = vadd.xlane.f32.xlu0 %v2849
    %v2851 = vpop.xlane.xlu0 %2850
    %v2852 = vsel %vm220, %v2816, 0.0
    %2853 = vadd.xlane.f32.xlu0 %v2852
    %v2854 = vpop.xlane.xlu0 %2853
    %v2855 = vsel %vm220, %v2817, 0.0
    %2856 = vadd.xlane.f32.xlu0 %v2855
    %v2857 = vpop.xlane.xlu0 %2856
    %v2858 = vsel %vm220, %v2818, 0.0
    %2859 = vadd.xlane.f32.xlu0 %v2858
    %v2860 = vpop.xlane.xlu0 %2859
    %v2861 = vsel %vm220, %v2819, 0.0
    %2862 = vadd.xlane.f32.xlu0 %v2861
    %v2863 = vpop.xlane.xlu0 %2862
    %v2864 = vsel %vm220, %v2820, 0.0
    %2865 = vadd.xlane.f32.xlu0 %v2864
    %v2866 = vpop.xlane.xlu0 %2865
    %v2867 = vsel %vm220, %v2821, 0.0
    %2868 = vadd.xlane.f32.xlu0 %v2867
    %v2869 = vpop.xlane.xlu0 %2868
    %v2870 = vmul.f32 %v2824, 0.35355338
    %v2871 = vmul.f32 %v2827, 0.35355338
    %v2872 = vmul.f32 %v2830, 0.35355338
    %v2873 = vmul.f32 %v2833, 0.35355338
    %v2874 = vmul.f32 %v2836, 0.35355338
    %v2875 = vmul.f32 %v2839, 0.35355338
    %v2876 = vmul.f32 %v2842, 0.35355338
    %v2877 = vmul.f32 %v2845, 0.35355338
    %v2878 = vmul.f32 %v2848, 0.35355338
    %v2879 = vmul.f32 %v2851, 0.35355338
    %v2880 = vmul.f32 %v2854, 0.35355338
    %v2881 = vmul.f32 %v2857, 0.35355338
    %v2882 = vmul.f32 %v2860, 0.35355338
    %v2883 = vmul.f32 %v2863, 0.35355338
    %v2884 = vmul.f32 %v2866, 0.35355338
    %v2885 = vmul.f32 %v2869, 0.35355338
    %v2902 = vperm.slane %v2870, %v80
    %v2903 = vperm.slane %v2871, %v80
    %v2904 = vperm.slane %v2872, %v80
    %v2905 = vperm.slane %v2873, %v80
    %v2906 = vperm.slane %v2874, %v80
    %v2907 = vperm.slane %v2875, %v80
    %v2908 = vperm.slane %v2876, %v80
    %v2909 = vperm.slane %v2877, %v80
    %v2910 = vperm.slane %v2878, %v80
    %v2911 = vperm.slane %v2879, %v80
    %v2912 = vperm.slane %v2880, %v80
    %v2913 = vperm.slane %v2881, %v80
    %v2914 = vperm.slane %v2882, %v80
    %v2915 = vperm.slane %v2883, %v80
    %v2916 = vperm.slane %v2884, %v80
    %v2917 = vperm.slane %v2885, %v80
    %v2918 = vsel %vm317, %v2903, %v2902
    %v2919 = vsel %vm319, %v2904, %v2918
    %v2920 = vsel %vm321, %v2905, %v2919
    %v2921 = vsel %vm323, %v2906, %v2920
    %v2922 = vsel %vm325, %v2907, %v2921
    %v2923 = vsel %vm327, %v2908, %v2922
    %v2924 = vsel %vm329, %v2909, %v2923
    %v2925 = vsel %vm317, %v2911, %v2910
    %v2926 = vsel %vm319, %v2912, %v2925
    %v2927 = vsel %vm321, %v2913, %v2926
    %v2928 = vsel %vm323, %v2914, %v2927
    %v2929 = vsel %vm325, %v2915, %v2928
    %v2930 = vsel %vm327, %v2916, %v2929
    %v2931 = vsel %vm329, %v2917, %v2930
    %v2934 = vsel %vm220, %v2924, -inf
    %2935 = vmax.xlane.f32.xlu0 %v2934
    %v2936 = vpop.xlane.xlu0 %2935
    %v2937 = vsel %vm220, %v2931, -inf
    %2938 = vmax.xlane.f32.xlu0 %v2937
    %v2939 = vpop.xlane.xlu0 %2938
    %v2942 = vperm.slane %v2936, 0
    %v2943 = vperm.slane %v2936, 1
    %v2944 = vperm.slane %v2936, 2
    %v2945 = vperm.slane %v2936, 3
    %v2946 = vperm.slane %v2936, 4
    %v2947 = vperm.slane %v2936, 5
    %v2948 = vperm.slane %v2936, 6
    %v2949 = vperm.slane %v2936, 7
    %v2950 = vperm.slane %v2939, 0
    %v2951 = vperm.slane %v2939, 1
    %v2952 = vperm.slane %v2939, 2
    %v2953 = vperm.slane %v2939, 3
    %v2954 = vperm.slane %v2939, 4
    %v2955 = vperm.slane %v2939, 5
    %v2956 = vperm.slane %v2939, 6
    %v2957 = vperm.slane %v2939, 7
    %v2974 = vsub.f32 %v2870, %v2942
    %v2975 = vsub.f32 %v2871, %v2943
    %v2976 = vsub.f32 %v2872, %v2944
    %v2977 = vsub.f32 %v2873, %v2945
    %v2978 = vsub.f32 %v2874, %v2946
    %v2979 = vsub.f32 %v2875, %v2947
    %v2980 = vsub.f32 %v2876, %v2948
    %v2981 = vsub.f32 %v2877, %v2949
    %v2982 = vsub.f32 %v2878, %v2950
    %v2983 = vsub.f32 %v2879, %v2951
    %v2984 = vsub.f32 %v2880, %v2952
    %v2985 = vsub.f32 %v2881, %v2953
    %v2986 = vsub.f32 %v2882, %v2954
    %v2987 = vsub.f32 %v2883, %v2955
    %v2988 = vsub.f32 %v2884, %v2956
    %v2989 = vsub.f32 %v2885, %v2957
    %v2990 = vmul.f32 %v2974, 1.442695
    %v2991 = vpow.pop %v2990
    %v2992 = vmul.f32 %v2975, 1.442695
    %v2993 = vpow.pop %v2992
    %v2994 = vmul.f32 %v2976, 1.442695
    %v2995 = vpow.pop %v2994
    %v2996 = vmul.f32 %v2977, 1.442695
    %v2997 = vpow.pop %v2996
    %v2998 = vmul.f32 %v2978, 1.442695
    %v2999 = vpow.pop %v2998
    %v3000 = vmul.f32 %v2979, 1.442695
    %v3001 = vpow.pop %v3000
    %v3002 = vmul.f32 %v2980, 1.442695
    %v3003 = vpow.pop %v3002
    %v3004 = vmul.f32 %v2981, 1.442695
    %v3005 = vpow.pop %v3004
    %v3006 = vmul.f32 %v2982, 1.442695
    %v3007 = vpow.pop %v3006
    %v3008 = vmul.f32 %v2983, 1.442695
    %v3009 = vpow.pop %v3008
    %v3010 = vmul.f32 %v2984, 1.442695
    %v3011 = vpow.pop %v3010
    %v3012 = vmul.f32 %v2985, 1.442695
    %v3013 = vpow.pop %v3012
    %v3014 = vmul.f32 %v2986, 1.442695
    %v3015 = vpow.pop %v3014
    %v3016 = vmul.f32 %v2987, 1.442695
    %v3017 = vpow.pop %v3016
    %v3018 = vmul.f32 %v2988, 1.442695
    %v3019 = vpow.pop %v3018
    %v3020 = vmul.f32 %v2989, 1.442695
    %v3021 = vpow.pop %v3020
    %3038 = vset.pattern.permute.xlu0 0
    %3039 = vperm.xlu0 %3038, %v2991
    %v3040 = vpop.permute.xlu0 %3039
    %3041 = vset.pattern.permute.xlu0 0
    %3042 = vperm.xlu0 %3041, %v2993
    %v3043 = vpop.permute.xlu0 %3042
    %3044 = vset.pattern.permute.xlu0 0
    %3045 = vperm.xlu0 %3044, %v2995
    %v3046 = vpop.permute.xlu0 %3045
    %3047 = vset.pattern.permute.xlu0 0
    %3048 = vperm.xlu0 %3047, %v2997
    %v3049 = vpop.permute.xlu0 %3048
    %3050 = vset.pattern.permute.xlu0 0
    %3051 = vperm.xlu0 %3050, %v2999
    %v3052 = vpop.permute.xlu0 %3051
    %3053 = vset.pattern.permute.xlu0 0
    %3054 = vperm.xlu0 %3053, %v3001
    %v3055 = vpop.permute.xlu0 %3054
    %3056 = vset.pattern.permute.xlu0 0
    %3057 = vperm.xlu0 %3056, %v3003
    %v3058 = vpop.permute.xlu0 %3057
    %3059 = vset.pattern.permute.xlu0 0
    %3060 = vperm.xlu0 %3059, %v3005
    %v3061 = vpop.permute.xlu0 %3060
    %3062 = vset.pattern.permute.xlu0 0
    %3063 = vperm.xlu0 %3062, %v3007
    %v3064 = vpop.permute.xlu0 %3063
    %3065 = vset.pattern.permute.xlu0 0
    %3066 = vperm.xlu0 %3065, %v3009
    %v3067 = vpop.permute.xlu0 %3066
    %3068 = vset.pattern.permute.xlu0 0
    %3069 = vperm.xlu0 %3068, %v3011
    %v3070 = vpop.permute.xlu0 %3069
    %3071 = vset.pattern.permute.xlu0 0
    %3072 = vperm.xlu0 %3071, %v3013
    %v3073 = vpop.permute.xlu0 %3072
    %3074 = vset.pattern.permute.xlu0 0
    %3075 = vperm.xlu0 %3074, %v3015
    %v3076 = vpop.permute.xlu0 %3075
    %3077 = vset.pattern.permute.xlu0 0
    %3078 = vperm.xlu0 %3077, %v3017
    %v3079 = vpop.permute.xlu0 %3078
    %3080 = vset.pattern.permute.xlu0 0
    %3081 = vperm.xlu0 %3080, %v3019
    %v3082 = vpop.permute.xlu0 %3081
    %3083 = vset.pattern.permute.xlu0 0
    %3084 = vperm.xlu0 %3083, %v3021
    %v3085 = vpop.permute.xlu0 %3084
    %v3086 = vperm.slane %v3040, %v80
    %v3087 = vperm.slane %v3043, %v80
    %v3088 = vperm.slane %v3046, %v80
    %v3089 = vperm.slane %v3049, %v80
    %v3090 = vperm.slane %v3052, %v80
    %v3091 = vperm.slane %v3055, %v80
    %v3092 = vperm.slane %v3058, %v80
    %v3093 = vperm.slane %v3061, %v80
    %v3094 = vperm.slane %v3064, %v80
    %v3095 = vperm.slane %v3067, %v80
    %v3096 = vperm.slane %v3070, %v80
    %v3097 = vperm.slane %v3073, %v80
    %v3098 = vperm.slane %v3076, %v80
    %v3099 = vperm.slane %v3079, %v80
    %v3100 = vperm.slane %v3082, %v80
    %v3101 = vperm.slane %v3085, %v80
    %v3102 = vsel %vm317, %v3087, %v3086
    %v3103 = vsel %vm319, %v3088, %v3102
    %v3104 = vsel %vm321, %v3089, %v3103
    %v3105 = vsel %vm323, %v3090, %v3104
    %v3106 = vsel %vm325, %v3091, %v3105
    %v3107 = vsel %vm327, %v3092, %v3106
    %v3108 = vsel %vm329, %v3093, %v3107
    %v3109 = vsel %vm317, %v3095, %v3094
    %v3110 = vsel %vm319, %v3096, %v3109
    %v3111 = vsel %vm321, %v3097, %v3110
    %v3112 = vsel %vm323, %v3098, %v3111
    %v3113 = vsel %vm325, %v3099, %v3112
    %v3114 = vsel %vm327, %v3100, %v3113
    %v3115 = vsel %vm329, %v3101, %v3114
    %v3118 = vsel %vm220, %v3108, 0.0
    %3119 = vadd.xlane.f32.xlu0 %v3118
    %v3120 = vpop.xlane.xlu0 %3119
    %v3121 = vsel %vm220, %v3115, 0.0
    %3122 = vadd.xlane.f32.xlu0 %v3121
    %v3123 = vpop.xlane.xlu0 %3122
    %v3124 = vrcp.pop %v3120
    %v3125 = vrcp.pop %v3123
    %v3128 = vperm.slane %v3124, 0
    %v3129 = vperm.slane %v3124, 1
    %v3130 = vperm.slane %v3124, 2
    %v3131 = vperm.slane %v3124, 3
    %v3132 = vperm.slane %v3124, 4
    %v3133 = vperm.slane %v3124, 5
    %v3134 = vperm.slane %v3124, 6
    %v3135 = vperm.slane %v3124, 7
    %v3136 = vperm.slane %v3125, 0
    %v3137 = vperm.slane %v3125, 1
    %v3138 = vperm.slane %v3125, 2
    %v3139 = vperm.slane %v3125, 3
    %v3140 = vperm.slane %v3125, 4
    %v3141 = vperm.slane %v3125, 5
    %v3142 = vperm.slane %v3125, 6
    %v3143 = vperm.slane %v3125, 7
    %v3160 = vmul.f32 %v2991, %v3128
    %v3161 = vmul.f32 %v2993, %v3129
    %v3162 = vmul.f32 %v2995, %v3130
    %v3163 = vmul.f32 %v2997, %v3131
    %v3164 = vmul.f32 %v2999, %v3132
    %v3165 = vmul.f32 %v3001, %v3133
    %v3166 = vmul.f32 %v3003, %v3134
    %v3167 = vmul.f32 %v3005, %v3135
    %v3168 = vmul.f32 %v3007, %v3136
    %v3169 = vmul.f32 %v3009, %v3137
    %v3170 = vmul.f32 %v3011, %v3138
    %v3171 = vmul.f32 %v3013, %v3139
    %v3172 = vmul.f32 %v3015, %v3140
    %v3173 = vmul.f32 %v3017, %v3141
    %v3174 = vmul.f32 %v3019, %v3142
    %v3175 = vmul.f32 %v3021, %v3143
    %3177 = vset.pattern.permute.xlu0 0
    %3178 = vperm.xlu0 %3177, %v3160
    %v3179 = vpop.permute.xlu0 %3178
    %3182 = vset.pattern.permute.xlu0 0
    %3183 = vperm.xlu0 %3182, %v3161
    %v3184 = vpop.permute.xlu0 %3183
    %3187 = vset.pattern.permute.xlu0 0
    %3188 = vperm.xlu0 %3187, %v3162
    %v3189 = vpop.permute.xlu0 %3188
    %3192 = vset.pattern.permute.xlu0 0
    %3193 = vperm.xlu0 %3192, %v3163
    %v3194 = vpop.permute.xlu0 %3193
    %3197 = vset.pattern.permute.xlu0 0
    %3198 = vperm.xlu0 %3197, %v3164
    %v3199 = vpop.permute.xlu0 %3198
    %3202 = vset.pattern.permute.xlu0 0
    %3203 = vperm.xlu0 %3202, %v3165
    %v3204 = vpop.permute.xlu0 %3203
    %3207 = vset.pattern.permute.xlu0 0
    %3208 = vperm.xlu0 %3207, %v3166
    %v3209 = vpop.permute.xlu0 %3208
    %3212 = vset.pattern.permute.xlu0 0
    %3213 = vperm.xlu0 %3212, %v3167
    %v3214 = vpop.permute.xlu0 %3213
    %3217 = vset.pattern.permute.xlu0 0
    %3218 = vperm.xlu0 %3217, %v3168
    %v3219 = vpop.permute.xlu0 %3218
    %3222 = vset.pattern.permute.xlu0 0
    %3223 = vperm.xlu0 %3222, %v3169
    %v3224 = vpop.permute.xlu0 %3223
    %3227 = vset.pattern.permute.xlu0 0
    %3228 = vperm.xlu0 %3227, %v3170
    %v3229 = vpop.permute.xlu0 %3228
    %3232 = vset.pattern.permute.xlu0 0
    %3233 = vperm.xlu0 %3232, %v3171
    %v3234 = vpop.permute.xlu0 %3233
    %3237 = vset.pattern.permute.xlu0 0
    %3238 = vperm.xlu0 %3237, %v3172
    %v3239 = vpop.permute.xlu0 %3238
    %3242 = vset.pattern.permute.xlu0 0
    %3243 = vperm.xlu0 %3242, %v3173
    %v3244 = vpop.permute.xlu0 %3243
    %3247 = vset.pattern.permute.xlu0 0
    %3248 = vperm.xlu0 %3247, %v3174
    %v3249 = vpop.permute.xlu0 %3248
    %3252 = vset.pattern.permute.xlu0 0
    %3253 = vperm.xlu0 %3252, %v3175
    %v3254 = vpop.permute.xlu0 %3253
    %v3256 = vsel %vm583, %v3179, 0.0
    %v3257 = vsel %vm583, %v3184, 0.0
    %v3258 = vsel %vm583, %v3189, 0.0
    %v3259 = vsel %vm583, %v3194, 0.0
    %v3260 = vsel %vm583, %v3199, 0.0
    %v3261 = vsel %vm583, %v3204, 0.0
    %v3262 = vsel %vm583, %v3209, 0.0
    %v3263 = vsel %vm583, %v3214, 0.0
    %v3264 = vsel %vm583, %v3219, 0.0
    %v3265 = vsel %vm583, %v3224, 0.0
    %v3266 = vsel %vm583, %v3229, 0.0
    %v3267 = vsel %vm583, %v3234, 0.0
    %v3268 = vsel %vm583, %v3239, 0.0
    %v3269 = vsel %vm583, %v3244, 0.0
    %v3270 = vsel %vm583, %v3249, 0.0
    %v3271 = vsel %vm583, %v3254, 0.0
    %v3272 = vadd.f32 %v3256, 0.0
    %v3273 = vadd.f32 %v3257, 0.0
    %v3274 = vadd.f32 %v3258, 0.0
    %v3275 = vadd.f32 %v3259, 0.0
    %v3276 = vadd.f32 %v3260, 0.0
    %v3277 = vadd.f32 %v3261, 0.0
    %v3278 = vadd.f32 %v3262, 0.0
    %v3279 = vadd.f32 %v3263, 0.0
    %v3280 = vadd.f32 %v3264, 0.0
    %v3281 = vadd.f32 %v3265, 0.0
    %v3282 = vadd.f32 %v3266, 0.0
    %v3283 = vadd.f32 %v3267, 0.0
    %v3284 = vadd.f32 %v3268, 0.0
    %v3285 = vadd.f32 %v3269, 0.0
    %v3286 = vadd.f32 %v3270, 0.0
    %v3287 = vadd.f32 %v3271, 0.0
    %3304 = vrot.lane.b32.xlu0 %v2806, 120
    %v3305 = vpop.permute.xlu0 %3304
    %3306 = vrot.lane.b32.xlu0 %v2807, 120
    %v3307 = vpop.permute.xlu0 %3306
    %3308 = vrot.lane.b32.xlu0 %v2808, 120
    %v3309 = vpop.permute.xlu0 %3308
    %3310 = vrot.lane.b32.xlu0 %v2809, 120
    %v3311 = vpop.permute.xlu0 %3310
    %3312 = vrot.lane.b32.xlu0 %v2810, 120
    %v3313 = vpop.permute.xlu0 %3312
    %3314 = vrot.lane.b32.xlu0 %v2811, 120
    %v3315 = vpop.permute.xlu0 %3314
    %3316 = vrot.lane.b32.xlu0 %v2812, 120
    %v3317 = vpop.permute.xlu0 %3316
    %3318 = vrot.lane.b32.xlu0 %v2813, 120
    %v3319 = vpop.permute.xlu0 %3318
    %3320 = vrot.lane.b32.xlu0 %v2814, 120
    %v3321 = vpop.permute.xlu0 %3320
    %3322 = vrot.lane.b32.xlu0 %v2815, 120
    %v3323 = vpop.permute.xlu0 %3322
    %3324 = vrot.lane.b32.xlu0 %v2816, 120
    %v3325 = vpop.permute.xlu0 %3324
    %3326 = vrot.lane.b32.xlu0 %v2817, 120
    %v3327 = vpop.permute.xlu0 %3326
    %3328 = vrot.lane.b32.xlu0 %v2818, 120
    %v3329 = vpop.permute.xlu0 %3328
    %3330 = vrot.lane.b32.xlu0 %v2819, 120
    %v3331 = vpop.permute.xlu0 %3330
    %3332 = vrot.lane.b32.xlu0 %v2820, 120
    %v3333 = vpop.permute.xlu0 %3332
    %3334 = vrot.lane.b32.xlu0 %v2821, 120
    %v3335 = vpop.permute.xlu0 %3334
    %v3352 = vsel %vm220, %v3305, 0.0
    %3353 = vadd.xlane.f32.xlu0 %v3352
    %v3354 = vpop.xlane.xlu0 %3353
    %v3355 = vsel %vm220, %v3307, 0.0
    %3356 = vadd.xlane.f32.xlu0 %v3355
    %v3357 = vpop.xlane.xlu0 %3356
    %v3358 = vsel %vm220, %v3309, 0.0
    %3359 = vadd.xlane.f32.xlu0 %v3358
    %v3360 = vpop.xlane.xlu0 %3359
    %v3361 = vsel %vm220, %v3311, 0.0
    %3362 = vadd.xlane.f32.xlu0 %v3361
    %v3363 = vpop.xlane.xlu0 %3362
    %v3364 = vsel %vm220, %v3313, 0.0
    %3365 = vadd.xlane.f32.xlu0 %v3364
    %v3366 = vpop.xlane.xlu0 %3365
    %v3367 = vsel %vm220, %v3315, 0.0
    %3368 = vadd.xlane.f32.xlu0 %v3367
    %v3369 = vpop.xlane.xlu0 %3368
    %v3370 = vsel %vm220, %v3317, 0.0
    %3371 = vadd.xlane.f32.xlu0 %v3370
    %v3372 = vpop.xlane.xlu0 %3371
    %v3373 = vsel %vm220, %v3319, 0.0
    %3374 = vadd.xlane.f32.xlu0 %v3373
    %v3375 = vpop.xlane.xlu0 %3374
    %v3376 = vsel %vm220, %v3321, 0.0
    %3377 = vadd.xlane.f32.xlu0 %v3376
    %v3378 = vpop.xlane.xlu0 %3377
    %v3379 = vsel %vm220, %v3323, 0.0
    %3380 = vadd.xlane.f32.xlu0 %v3379
    %v3381 = vpop.xlane.xlu0 %3380
    %v3382 = vsel %vm220, %v3325, 0.0
    %3383 = vadd.xlane.f32.xlu0 %v3382
    %v3384 = vpop.xlane.xlu0 %3383
    %v3385 = vsel %vm220, %v3327, 0.0
    %3386 = vadd.xlane.f32.xlu0 %v3385
    %v3387 = vpop.xlane.xlu0 %3386
    %v3388 = vsel %vm220, %v3329, 0.0
    %3389 = vadd.xlane.f32.xlu0 %v3388
    %v3390 = vpop.xlane.xlu0 %3389
    %v3391 = vsel %vm220, %v3331, 0.0
    %3392 = vadd.xlane.f32.xlu0 %v3391
    %v3393 = vpop.xlane.xlu0 %3392
    %v3394 = vsel %vm220, %v3333, 0.0
    %3395 = vadd.xlane.f32.xlu0 %v3394
    %v3396 = vpop.xlane.xlu0 %3395
    %v3397 = vsel %vm220, %v3335, 0.0
    %3398 = vadd.xlane.f32.xlu0 %v3397
    %v3399 = vpop.xlane.xlu0 %3398
    %v3400 = vmul.f32 %v3354, 0.35355338
    %v3401 = vmul.f32 %v3357, 0.35355338
    %v3402 = vmul.f32 %v3360, 0.35355338
    %v3403 = vmul.f32 %v3363, 0.35355338
    %v3404 = vmul.f32 %v3366, 0.35355338
    %v3405 = vmul.f32 %v3369, 0.35355338
    %v3406 = vmul.f32 %v3372, 0.35355338
    %v3407 = vmul.f32 %v3375, 0.35355338
    %v3408 = vmul.f32 %v3378, 0.35355338
    %v3409 = vmul.f32 %v3381, 0.35355338
    %v3410 = vmul.f32 %v3384, 0.35355338
    %v3411 = vmul.f32 %v3387, 0.35355338
    %v3412 = vmul.f32 %v3390, 0.35355338
    %v3413 = vmul.f32 %v3393, 0.35355338
    %v3414 = vmul.f32 %v3396, 0.35355338
    %v3415 = vmul.f32 %v3399, 0.35355338
    %v3432 = vperm.slane %v3400, %v80
    %v3433 = vperm.slane %v3401, %v80
    %v3434 = vperm.slane %v3402, %v80
    %v3435 = vperm.slane %v3403, %v80
    %v3436 = vperm.slane %v3404, %v80
    %v3437 = vperm.slane %v3405, %v80
    %v3438 = vperm.slane %v3406, %v80
    %v3439 = vperm.slane %v3407, %v80
    %v3440 = vperm.slane %v3408, %v80
    %v3441 = vperm.slane %v3409, %v80
    %v3442 = vperm.slane %v3410, %v80
    %v3443 = vperm.slane %v3411, %v80
    %v3444 = vperm.slane %v3412, %v80
    %v3445 = vperm.slane %v3413, %v80
    %v3446 = vperm.slane %v3414, %v80
    %v3447 = vperm.slane %v3415, %v80
    %v3448 = vsel %vm317, %v3433, %v3432
    %v3449 = vsel %vm319, %v3434, %v3448
    %v3450 = vsel %vm321, %v3435, %v3449
    %v3451 = vsel %vm323, %v3436, %v3450
    %v3452 = vsel %vm325, %v3437, %v3451
    %v3453 = vsel %vm327, %v3438, %v3452
    %v3454 = vsel %vm329, %v3439, %v3453
    %v3455 = vsel %vm317, %v3441, %v3440
    %v3456 = vsel %vm319, %v3442, %v3455
    %v3457 = vsel %vm321, %v3443, %v3456
    %v3458 = vsel %vm323, %v3444, %v3457
    %v3459 = vsel %vm325, %v3445, %v3458
    %v3460 = vsel %vm327, %v3446, %v3459
    %v3461 = vsel %vm329, %v3447, %v3460
    %v3464 = vsel %vm220, %v3454, -inf
    %3465 = vmax.xlane.f32.xlu0 %v3464
    %v3466 = vpop.xlane.xlu0 %3465
    %v3467 = vsel %vm220, %v3461, -inf
    %3468 = vmax.xlane.f32.xlu0 %v3467
    %v3469 = vpop.xlane.xlu0 %3468
    %v3472 = vperm.slane %v3466, 0
    %v3473 = vperm.slane %v3466, 1
    %v3474 = vperm.slane %v3466, 2
    %v3475 = vperm.slane %v3466, 3
    %v3476 = vperm.slane %v3466, 4
    %v3477 = vperm.slane %v3466, 5
    %v3478 = vperm.slane %v3466, 6
    %v3479 = vperm.slane %v3466, 7
    %v3480 = vperm.slane %v3469, 0
    %v3481 = vperm.slane %v3469, 1
    %v3482 = vperm.slane %v3469, 2
    %v3483 = vperm.slane %v3469, 3
    %v3484 = vperm.slane %v3469, 4
    %v3485 = vperm.slane %v3469, 5
    %v3486 = vperm.slane %v3469, 6
    %v3487 = vperm.slane %v3469, 7
    %v3504 = vsub.f32 %v3400, %v3472
    %v3505 = vsub.f32 %v3401, %v3473
    %v3506 = vsub.f32 %v3402, %v3474
    %v3507 = vsub.f32 %v3403, %v3475
    %v3508 = vsub.f32 %v3404, %v3476
    %v3509 = vsub.f32 %v3405, %v3477
    %v3510 = vsub.f32 %v3406, %v3478
    %v3511 = vsub.f32 %v3407, %v3479
    %v3512 = vsub.f32 %v3408, %v3480
    %v3513 = vsub.f32 %v3409, %v3481
    %v3514 = vsub.f32 %v3410, %v3482
    %v3515 = vsub.f32 %v3411, %v3483
    %v3516 = vsub.f32 %v3412, %v3484
    %v3517 = vsub.f32 %v3413, %v3485
    %v3518 = vsub.f32 %v3414, %v3486
    %v3519 = vsub.f32 %v3415, %v3487
    %v3520 = vmul.f32 %v3504, 1.442695
    %v3521 = vpow.pop %v3520
    %v3522 = vmul.f32 %v3505, 1.442695
    %v3523 = vpow.pop %v3522
    %v3524 = vmul.f32 %v3506, 1.442695
    %v3525 = vpow.pop %v3524
    %v3526 = vmul.f32 %v3507, 1.442695
    %v3527 = vpow.pop %v3526
    %v3528 = vmul.f32 %v3508, 1.442695
    %v3529 = vpow.pop %v3528
    %v3530 = vmul.f32 %v3509, 1.442695
    %v3531 = vpow.pop %v3530
    %v3532 = vmul.f32 %v3510, 1.442695
    %v3533 = vpow.pop %v3532
    %v3534 = vmul.f32 %v3511, 1.442695
    %v3535 = vpow.pop %v3534
    %v3536 = vmul.f32 %v3512, 1.442695
    %v3537 = vpow.pop %v3536
    %v3538 = vmul.f32 %v3513, 1.442695
    %v3539 = vpow.pop %v3538
    %v3540 = vmul.f32 %v3514, 1.442695
    %v3541 = vpow.pop %v3540
    %v3542 = vmul.f32 %v3515, 1.442695
    %v3543 = vpow.pop %v3542
    %v3544 = vmul.f32 %v3516, 1.442695
    %v3545 = vpow.pop %v3544
    %v3546 = vmul.f32 %v3517, 1.442695
    %v3547 = vpow.pop %v3546
    %v3548 = vmul.f32 %v3518, 1.442695
    %v3549 = vpow.pop %v3548
    %v3550 = vmul.f32 %v3519, 1.442695
    %v3551 = vpow.pop %v3550
    %3568 = vset.pattern.permute.xlu0 0
    %3569 = vperm.xlu0 %3568, %v3521
    %v3570 = vpop.permute.xlu0 %3569
    %3571 = vset.pattern.permute.xlu0 0
    %3572 = vperm.xlu0 %3571, %v3523
    %v3573 = vpop.permute.xlu0 %3572
    %3574 = vset.pattern.permute.xlu0 0
    %3575 = vperm.xlu0 %3574, %v3525
    %v3576 = vpop.permute.xlu0 %3575
    %3577 = vset.pattern.permute.xlu0 0
    %3578 = vperm.xlu0 %3577, %v3527
    %v3579 = vpop.permute.xlu0 %3578
    %3580 = vset.pattern.permute.xlu0 0
    %3581 = vperm.xlu0 %3580, %v3529
    %v3582 = vpop.permute.xlu0 %3581
    %3583 = vset.pattern.permute.xlu0 0
    %3584 = vperm.xlu0 %3583, %v3531
    %v3585 = vpop.permute.xlu0 %3584
    %3586 = vset.pattern.permute.xlu0 0
    %3587 = vperm.xlu0 %3586, %v3533
    %v3588 = vpop.permute.xlu0 %3587
    %3589 = vset.pattern.permute.xlu0 0
    %3590 = vperm.xlu0 %3589, %v3535
    %v3591 = vpop.permute.xlu0 %3590
    %3592 = vset.pattern.permute.xlu0 0
    %3593 = vperm.xlu0 %3592, %v3537
    %v3594 = vpop.permute.xlu0 %3593
    %3595 = vset.pattern.permute.xlu0 0
    %3596 = vperm.xlu0 %3595, %v3539
    %v3597 = vpop.permute.xlu0 %3596
    %3598 = vset.pattern.permute.xlu0 0
    %3599 = vperm.xlu0 %3598, %v3541
    %v3600 = vpop.permute.xlu0 %3599
    %3601 = vset.pattern.permute.xlu0 0
    %3602 = vperm.xlu0 %3601, %v3543
    %v3603 = vpop.permute.xlu0 %3602
    %3604 = vset.pattern.permute.xlu0 0
    %3605 = vperm.xlu0 %3604, %v3545
    %v3606 = vpop.permute.xlu0 %3605
    %3607 = vset.pattern.permute.xlu0 0
    %3608 = vperm.xlu0 %3607, %v3547
    %v3609 = vpop.permute.xlu0 %3608
    %3610 = vset.pattern.permute.xlu0 0
    %3611 = vperm.xlu0 %3610, %v3549
    %v3612 = vpop.permute.xlu0 %3611
    %3613 = vset.pattern.permute.xlu0 0
    %3614 = vperm.xlu0 %3613, %v3551
    %v3615 = vpop.permute.xlu0 %3614
    %v3616 = vperm.slane %v3570, %v80
    %v3617 = vperm.slane %v3573, %v80
    %v3618 = vperm.slane %v3576, %v80
    %v3619 = vperm.slane %v3579, %v80
    %v3620 = vperm.slane %v3582, %v80
    %v3621 = vperm.slane %v3585, %v80
    %v3622 = vperm.slane %v3588, %v80
    %v3623 = vperm.slane %v3591, %v80
    %v3624 = vperm.slane %v3594, %v80
    %v3625 = vperm.slane %v3597, %v80
    %v3626 = vperm.slane %v3600, %v80
    %v3627 = vperm.slane %v3603, %v80
    %v3628 = vperm.slane %v3606, %v80
    %v3629 = vperm.slane %v3609, %v80
    %v3630 = vperm.slane %v3612, %v80
    %v3631 = vperm.slane %v3615, %v80
    %v3632 = vsel %vm317, %v3617, %v3616
    %v3633 = vsel %vm319, %v3618, %v3632
    %v3634 = vsel %vm321, %v3619, %v3633
    %v3635 = vsel %vm323, %v3620, %v3634
    %v3636 = vsel %vm325, %v3621, %v3635
    %v3637 = vsel %vm327, %v3622, %v3636
    %v3638 = vsel %vm329, %v3623, %v3637
    %v3639 = vsel %vm317, %v3625, %v3624
    %v3640 = vsel %vm319, %v3626, %v3639
    %v3641 = vsel %vm321, %v3627, %v3640
    %v3642 = vsel %vm323, %v3628, %v3641
    %v3643 = vsel %vm325, %v3629, %v3642
    %v3644 = vsel %vm327, %v3630, %v3643
    %v3645 = vsel %vm329, %v3631, %v3644
    %v3648 = vsel %vm220, %v3638, 0.0
    %3649 = vadd.xlane.f32.xlu0 %v3648
    %v3650 = vpop.xlane.xlu0 %3649
    %v3651 = vsel %vm220, %v3645, 0.0
    %3652 = vadd.xlane.f32.xlu0 %v3651
    %v3653 = vpop.xlane.xlu0 %3652
    %v3654 = vrcp.pop %v3650
    %v3655 = vrcp.pop %v3653
    %v3658 = vperm.slane %v3654, 0
    %v3659 = vperm.slane %v3654, 1
    %v3660 = vperm.slane %v3654, 2
    %v3661 = vperm.slane %v3654, 3
    %v3662 = vperm.slane %v3654, 4
    %v3663 = vperm.slane %v3654, 5
    %v3664 = vperm.slane %v3654, 6
    %v3665 = vperm.slane %v3654, 7
    %v3666 = vperm.slane %v3655, 0
    %v3667 = vperm.slane %v3655, 1
    %v3668 = vperm.slane %v3655, 2
    %v3669 = vperm.slane %v3655, 3
    %v3670 = vperm.slane %v3655, 4
    %v3671 = vperm.slane %v3655, 5
    %v3672 = vperm.slane %v3655, 6
    %v3673 = vperm.slane %v3655, 7
    %v3690 = vmul.f32 %v3521, %v3658
    %v3691 = vmul.f32 %v3523, %v3659
    %v3692 = vmul.f32 %v3525, %v3660
    %v3693 = vmul.f32 %v3527, %v3661
    %v3694 = vmul.f32 %v3529, %v3662
    %v3695 = vmul.f32 %v3531, %v3663
    %v3696 = vmul.f32 %v3533, %v3664
    %v3697 = vmul.f32 %v3535, %v3665
    %v3698 = vmul.f32 %v3537, %v3666
    %v3699 = vmul.f32 %v3539, %v3667
    %v3700 = vmul.f32 %v3541, %v3668
    %v3701 = vmul.f32 %v3543, %v3669
    %v3702 = vmul.f32 %v3545, %v3670
    %v3703 = vmul.f32 %v3547, %v3671
    %v3704 = vmul.f32 %v3549, %v3672
    %v3705 = vmul.f32 %v3551, %v3673
    %3707 = vset.pattern.permute.xlu0 0
    %3708 = vperm.xlu0 %3707, %v3690
    %v3709 = vpop.permute.xlu0 %3708
    %3712 = vset.pattern.permute.xlu0 0
    %3713 = vperm.xlu0 %3712, %v3691
    %v3714 = vpop.permute.xlu0 %3713
    %3717 = vset.pattern.permute.xlu0 0
    %3718 = vperm.xlu0 %3717, %v3692
    %v3719 = vpop.permute.xlu0 %3718
    %3722 = vset.pattern.permute.xlu0 0
    %3723 = vperm.xlu0 %3722, %v3693
    %v3724 = vpop.permute.xlu0 %3723
    %3727 = vset.pattern.permute.xlu0 0
    %3728 = vperm.xlu0 %3727, %v3694
    %v3729 = vpop.permute.xlu0 %3728
    %3732 = vset.pattern.permute.xlu0 0
    %3733 = vperm.xlu0 %3732, %v3695
    %v3734 = vpop.permute.xlu0 %3733
    %3737 = vset.pattern.permute.xlu0 0
    %3738 = vperm.xlu0 %3737, %v3696
    %v3739 = vpop.permute.xlu0 %3738
    %3742 = vset.pattern.permute.xlu0 0
    %3743 = vperm.xlu0 %3742, %v3697
    %v3744 = vpop.permute.xlu0 %3743
    %3747 = vset.pattern.permute.xlu0 0
    %3748 = vperm.xlu0 %3747, %v3698
    %v3749 = vpop.permute.xlu0 %3748
    %3752 = vset.pattern.permute.xlu0 0
    %3753 = vperm.xlu0 %3752, %v3699
    %v3754 = vpop.permute.xlu0 %3753
    %3757 = vset.pattern.permute.xlu0 0
    %3758 = vperm.xlu0 %3757, %v3700
    %v3759 = vpop.permute.xlu0 %3758
    %3762 = vset.pattern.permute.xlu0 0
    %3763 = vperm.xlu0 %3762, %v3701
    %v3764 = vpop.permute.xlu0 %3763
    %3767 = vset.pattern.permute.xlu0 0
    %3768 = vperm.xlu0 %3767, %v3702
    %v3769 = vpop.permute.xlu0 %3768
    %3772 = vset.pattern.permute.xlu0 0
    %3773 = vperm.xlu0 %3772, %v3703
    %v3774 = vpop.permute.xlu0 %3773
    %3777 = vset.pattern.permute.xlu0 0
    %3778 = vperm.xlu0 %3777, %v3704
    %v3779 = vpop.permute.xlu0 %3778
    %3782 = vset.pattern.permute.xlu0 0
    %3783 = vperm.xlu0 %3782, %v3705
    %v3784 = vpop.permute.xlu0 %3783
    %v3786 = vsel %vm1115, %v3709, 0.0
    %v3787 = vsel %vm1115, %v3714, 0.0
    %v3788 = vsel %vm1115, %v3719, 0.0
    %v3789 = vsel %vm1115, %v3724, 0.0
    %v3790 = vsel %vm1115, %v3729, 0.0
    %v3791 = vsel %vm1115, %v3734, 0.0
    %v3792 = vsel %vm1115, %v3739, 0.0
    %v3793 = vsel %vm1115, %v3744, 0.0
    %v3794 = vsel %vm1115, %v3749, 0.0
    %v3795 = vsel %vm1115, %v3754, 0.0
    %v3796 = vsel %vm1115, %v3759, 0.0
    %v3797 = vsel %vm1115, %v3764, 0.0
    %v3798 = vsel %vm1115, %v3769, 0.0
    %v3799 = vsel %vm1115, %v3774, 0.0
    %v3800 = vsel %vm1115, %v3779, 0.0
    %v3801 = vsel %vm1115, %v3784, 0.0
    %v3802 = vadd.f32 %v3272, %v3786
    %v3803 = vadd.f32 %v3273, %v3787
    %v3804 = vadd.f32 %v3274, %v3788
    %v3805 = vadd.f32 %v3275, %v3789
    %v3806 = vadd.f32 %v3276, %v3790
    %v3807 = vadd.f32 %v3277, %v3791
    %v3808 = vadd.f32 %v3278, %v3792
    %v3809 = vadd.f32 %v3279, %v3793
    %v3810 = vadd.f32 %v3280, %v3794
    %v3811 = vadd.f32 %v3281, %v3795
    %v3812 = vadd.f32 %v3282, %v3796
    %v3813 = vadd.f32 %v3283, %v3797
    %v3814 = vadd.f32 %v3284, %v3798
    %v3815 = vadd.f32 %v3285, %v3799
    %v3816 = vadd.f32 %v3286, %v3800
    %v3817 = vadd.f32 %v3287, %v3801
    %3818 = vrot.lane.b32.xlu0 %v2806, 112
    %v3819 = vpop.permute.xlu0 %3818
    %3820 = vrot.lane.b32.xlu0 %v2807, 112
    %v3821 = vpop.permute.xlu0 %3820
    %3822 = vrot.lane.b32.xlu0 %v2808, 112
    %v3823 = vpop.permute.xlu0 %3822
    %3824 = vrot.lane.b32.xlu0 %v2809, 112
    %v3825 = vpop.permute.xlu0 %3824
    %3826 = vrot.lane.b32.xlu0 %v2810, 112
    %v3827 = vpop.permute.xlu0 %3826
    %3828 = vrot.lane.b32.xlu0 %v2811, 112
    %v3829 = vpop.permute.xlu0 %3828
    %3830 = vrot.lane.b32.xlu0 %v2812, 112
    %v3831 = vpop.permute.xlu0 %3830
    %3832 = vrot.lane.b32.xlu0 %v2813, 112
    %v3833 = vpop.permute.xlu0 %3832
    %3834 = vrot.lane.b32.xlu0 %v2814, 112
    %v3835 = vpop.permute.xlu0 %3834
    %3836 = vrot.lane.b32.xlu0 %v2815, 112
    %v3837 = vpop.permute.xlu0 %3836
    %3838 = vrot.lane.b32.xlu0 %v2816, 112
    %v3839 = vpop.permute.xlu0 %3838
    %3840 = vrot.lane.b32.xlu0 %v2817, 112
    %v3841 = vpop.permute.xlu0 %3840
    %3842 = vrot.lane.b32.xlu0 %v2818, 112
    %v3843 = vpop.permute.xlu0 %3842
    %3844 = vrot.lane.b32.xlu0 %v2819, 112
    %v3845 = vpop.permute.xlu0 %3844
    %3846 = vrot.lane.b32.xlu0 %v2820, 112
    %v3847 = vpop.permute.xlu0 %3846
    %3848 = vrot.lane.b32.xlu0 %v2821, 112
    %v3849 = vpop.permute.xlu0 %3848
    %v3866 = vsel %vm220, %v3819, 0.0
    %3867 = vadd.xlane.f32.xlu0 %v3866
    %v3868 = vpop.xlane.xlu0 %3867
    %v3869 = vsel %vm220, %v3821, 0.0
    %3870 = vadd.xlane.f32.xlu0 %v3869
    %v3871 = vpop.xlane.xlu0 %3870
    %v3872 = vsel %vm220, %v3823, 0.0
    %3873 = vadd.xlane.f32.xlu0 %v3872
    %v3874 = vpop.xlane.xlu0 %3873
    %v3875 = vsel %vm220, %v3825, 0.0
    %3876 = vadd.xlane.f32.xlu0 %v3875
    %v3877 = vpop.xlane.xlu0 %3876
    %v3878 = vsel %vm220, %v3827, 0.0
    %3879 = vadd.xlane.f32.xlu0 %v3878
    %v3880 = vpop.xlane.xlu0 %3879
    %v3881 = vsel %vm220, %v3829, 0.0
    %3882 = vadd.xlane.f32.xlu0 %v3881
    %v3883 = vpop.xlane.xlu0 %3882
    %v3884 = vsel %vm220, %v3831, 0.0
    %3885 = vadd.xlane.f32.xlu0 %v3884
    %v3886 = vpop.xlane.xlu0 %3885
    %v3887 = vsel %vm220, %v3833, 0.0
    %3888 = vadd.xlane.f32.xlu0 %v3887
    %v3889 = vpop.xlane.xlu0 %3888
    %v3890 = vsel %vm220, %v3835, 0.0
    %3891 = vadd.xlane.f32.xlu0 %v3890
    %v3892 = vpop.xlane.xlu0 %3891
    %v3893 = vsel %vm220, %v3837, 0.0
    %3894 = vadd.xlane.f32.xlu0 %v3893
    %v3895 = vpop.xlane.xlu0 %3894
    %v3896 = vsel %vm220, %v3839, 0.0
    %3897 = vadd.xlane.f32.xlu0 %v3896
    %v3898 = vpop.xlane.xlu0 %3897
    %v3899 = vsel %vm220, %v3841, 0.0
    %3900 = vadd.xlane.f32.xlu0 %v3899
    %v3901 = vpop.xlane.xlu0 %3900
    %v3902 = vsel %vm220, %v3843, 0.0
    %3903 = vadd.xlane.f32.xlu0 %v3902
    %v3904 = vpop.xlane.xlu0 %3903
    %v3905 = vsel %vm220, %v3845, 0.0
    %3906 = vadd.xlane.f32.xlu0 %v3905
    %v3907 = vpop.xlane.xlu0 %3906
    %v3908 = vsel %vm220, %v3847, 0.0
    %3909 = vadd.xlane.f32.xlu0 %v3908
    %v3910 = vpop.xlane.xlu0 %3909
    %v3911 = vsel %vm220, %v3849, 0.0
    %3912 = vadd.xlane.f32.xlu0 %v3911
    %v3913 = vpop.xlane.xlu0 %3912
    %v3914 = vmul.f32 %v3868, 0.35355338
    %v3915 = vmul.f32 %v3871, 0.35355338
    %v3916 = vmul.f32 %v3874, 0.35355338
    %v3917 = vmul.f32 %v3877, 0.35355338
    %v3918 = vmul.f32 %v3880, 0.35355338
    %v3919 = vmul.f32 %v3883, 0.35355338
    %v3920 = vmul.f32 %v3886, 0.35355338
    %v3921 = vmul.f32 %v3889, 0.35355338
    %v3922 = vmul.f32 %v3892, 0.35355338
    %v3923 = vmul.f32 %v3895, 0.35355338
    %v3924 = vmul.f32 %v3898, 0.35355338
    %v3925 = vmul.f32 %v3901, 0.35355338
    %v3926 = vmul.f32 %v3904, 0.35355338
    %v3927 = vmul.f32 %v3907, 0.35355338
    %v3928 = vmul.f32 %v3910, 0.35355338
    %v3929 = vmul.f32 %v3913, 0.35355338
    %v3946 = vperm.slane %v3914, %v80
    %v3947 = vperm.slane %v3915, %v80
    %v3948 = vperm.slane %v3916, %v80
    %v3949 = vperm.slane %v3917, %v80
    %v3950 = vperm.slane %v3918, %v80
    %v3951 = vperm.slane %v3919, %v80
    %v3952 = vperm.slane %v3920, %v80
    %v3953 = vperm.slane %v3921, %v80
    %v3954 = vperm.slane %v3922, %v80
    %v3955 = vperm.slane %v3923, %v80
    %v3956 = vperm.slane %v3924, %v80
    %v3957 = vperm.slane %v3925, %v80
    %v3958 = vperm.slane %v3926, %v80
    %v3959 = vperm.slane %v3927, %v80
    %v3960 = vperm.slane %v3928, %v80
    %v3961 = vperm.slane %v3929, %v80
    %v3962 = vsel %vm317, %v3947, %v3946
    %v3963 = vsel %vm319, %v3948, %v3962
    %v3964 = vsel %vm321, %v3949, %v3963
    %v3965 = vsel %vm323, %v3950, %v3964
    %v3966 = vsel %vm325, %v3951, %v3965
    %v3967 = vsel %vm327, %v3952, %v3966
    %v3968 = vsel %vm329, %v3953, %v3967
    %v3969 = vsel %vm317, %v3955, %v3954
    %v3970 = vsel %vm319, %v3956, %v3969
    %v3971 = vsel %vm321, %v3957, %v3970
    %v3972 = vsel %vm323, %v3958, %v3971
    %v3973 = vsel %vm325, %v3959, %v3972
    %v3974 = vsel %vm327, %v3960, %v3973
    %v3975 = vsel %vm329, %v3961, %v3974
    %v3978 = vsel %vm220, %v3968, -inf
    %3979 = vmax.xlane.f32.xlu0 %v3978
    %v3980 = vpop.xlane.xlu0 %3979
    %v3981 = vsel %vm220, %v3975, -inf
    %3982 = vmax.xlane.f32.xlu0 %v3981
    %v3983 = vpop.xlane.xlu0 %3982
    %v3986 = vperm.slane %v3980, 0
    %v3987 = vperm.slane %v3980, 1
    %v3988 = vperm.slane %v3980, 2
    %v3989 = vperm.slane %v3980, 3
    %v3990 = vperm.slane %v3980, 4
    %v3991 = vperm.slane %v3980, 5
    %v3992 = vperm.slane %v3980, 6
    %v3993 = vperm.slane %v3980, 7
    %v3994 = vperm.slane %v3983, 0
    %v3995 = vperm.slane %v3983, 1
    %v3996 = vperm.slane %v3983, 2
    %v3997 = vperm.slane %v3983, 3
    %v3998 = vperm.slane %v3983, 4
    %v3999 = vperm.slane %v3983, 5
    %v4000 = vperm.slane %v3983, 6
    %v4001 = vperm.slane %v3983, 7
    %v4018 = vsub.f32 %v3914, %v3986
    %v4019 = vsub.f32 %v3915, %v3987
    %v4020 = vsub.f32 %v3916, %v3988
    %v4021 = vsub.f32 %v3917, %v3989
    %v4022 = vsub.f32 %v3918, %v3990
    %v4023 = vsub.f32 %v3919, %v3991
    %v4024 = vsub.f32 %v3920, %v3992
    %v4025 = vsub.f32 %v3921, %v3993
    %v4026 = vsub.f32 %v3922, %v3994
    %v4027 = vsub.f32 %v3923, %v3995
    %v4028 = vsub.f32 %v3924, %v3996
    %v4029 = vsub.f32 %v3925, %v3997
    %v4030 = vsub.f32 %v3926, %v3998
    %v4031 = vsub.f32 %v3927, %v3999
    %v4032 = vsub.f32 %v3928, %v4000
    %v4033 = vsub.f32 %v3929, %v4001
    %v4034 = vmul.f32 %v4018, 1.442695
    %v4035 = vpow.pop %v4034
    %v4036 = vmul.f32 %v4019, 1.442695
    %v4037 = vpow.pop %v4036
    %v4038 = vmul.f32 %v4020, 1.442695
    %v4039 = vpow.pop %v4038
    %v4040 = vmul.f32 %v4021, 1.442695
    %v4041 = vpow.pop %v4040
    %v4042 = vmul.f32 %v4022, 1.442695
    %v4043 = vpow.pop %v4042
    %v4044 = vmul.f32 %v4023, 1.442695
    %v4045 = vpow.pop %v4044
    %v4046 = vmul.f32 %v4024, 1.442695
    %v4047 = vpow.pop %v4046
    %v4048 = vmul.f32 %v4025, 1.442695
    %v4049 = vpow.pop %v4048
    %v4050 = vmul.f32 %v4026, 1.442695
    %v4051 = vpow.pop %v4050
    %v4052 = vmul.f32 %v4027, 1.442695
    %v4053 = vpow.pop %v4052
    %v4054 = vmul.f32 %v4028, 1.442695
    %v4055 = vpow.pop %v4054
    %v4056 = vmul.f32 %v4029, 1.442695
    %v4057 = vpow.pop %v4056
    %v4058 = vmul.f32 %v4030, 1.442695
    %v4059 = vpow.pop %v4058
    %v4060 = vmul.f32 %v4031, 1.442695
    %v4061 = vpow.pop %v4060
    %v4062 = vmul.f32 %v4032, 1.442695
    %v4063 = vpow.pop %v4062
    %v4064 = vmul.f32 %v4033, 1.442695
    %v4065 = vpow.pop %v4064
    %4082 = vset.pattern.permute.xlu0 0
    %4083 = vperm.xlu0 %4082, %v4035
    %v4084 = vpop.permute.xlu0 %4083
    %4085 = vset.pattern.permute.xlu0 0
    %4086 = vperm.xlu0 %4085, %v4037
    %v4087 = vpop.permute.xlu0 %4086
    %4088 = vset.pattern.permute.xlu0 0
    %4089 = vperm.xlu0 %4088, %v4039
    %v4090 = vpop.permute.xlu0 %4089
    %4091 = vset.pattern.permute.xlu0 0
    %4092 = vperm.xlu0 %4091, %v4041
    %v4093 = vpop.permute.xlu0 %4092
    %4094 = vset.pattern.permute.xlu0 0
    %4095 = vperm.xlu0 %4094, %v4043
    %v4096 = vpop.permute.xlu0 %4095
    %4097 = vset.pattern.permute.xlu0 0
    %4098 = vperm.xlu0 %4097, %v4045
    %v4099 = vpop.permute.xlu0 %4098
    %4100 = vset.pattern.permute.xlu0 0
    %4101 = vperm.xlu0 %4100, %v4047
    %v4102 = vpop.permute.xlu0 %4101
    %4103 = vset.pattern.permute.xlu0 0
    %4104 = vperm.xlu0 %4103, %v4049
    %v4105 = vpop.permute.xlu0 %4104
    %4106 = vset.pattern.permute.xlu0 0
    %4107 = vperm.xlu0 %4106, %v4051
    %v4108 = vpop.permute.xlu0 %4107
    %4109 = vset.pattern.permute.xlu0 0
    %4110 = vperm.xlu0 %4109, %v4053
    %v4111 = vpop.permute.xlu0 %4110
    %4112 = vset.pattern.permute.xlu0 0
    %4113 = vperm.xlu0 %4112, %v4055
    %v4114 = vpop.permute.xlu0 %4113
    %4115 = vset.pattern.permute.xlu0 0
    %4116 = vperm.xlu0 %4115, %v4057
    %v4117 = vpop.permute.xlu0 %4116
    %4118 = vset.pattern.permute.xlu0 0
    %4119 = vperm.xlu0 %4118, %v4059
    %v4120 = vpop.permute.xlu0 %4119
    %4121 = vset.pattern.permute.xlu0 0
    %4122 = vperm.xlu0 %4121, %v4061
    %v4123 = vpop.permute.xlu0 %4122
    %4124 = vset.pattern.permute.xlu0 0
    %4125 = vperm.xlu0 %4124, %v4063
    %v4126 = vpop.permute.xlu0 %4125
    %4127 = vset.pattern.permute.xlu0 0
    %4128 = vperm.xlu0 %4127, %v4065
    %v4129 = vpop.permute.xlu0 %4128
    %v4130 = vperm.slane %v4084, %v80
    %v4131 = vperm.slane %v4087, %v80
    %v4132 = vperm.slane %v4090, %v80
    %v4133 = vperm.slane %v4093, %v80
    %v4134 = vperm.slane %v4096, %v80
    %v4135 = vperm.slane %v4099, %v80
    %v4136 = vperm.slane %v4102, %v80
    %v4137 = vperm.slane %v4105, %v80
    %v4138 = vperm.slane %v4108, %v80
    %v4139 = vperm.slane %v4111, %v80
    %v4140 = vperm.slane %v4114, %v80
    %v4141 = vperm.slane %v4117, %v80
    %v4142 = vperm.slane %v4120, %v80
    %v4143 = vperm.slane %v4123, %v80
    %v4144 = vperm.slane %v4126, %v80
    %v4145 = vperm.slane %v4129, %v80
    %v4146 = vsel %vm317, %v4131, %v4130
    %v4147 = vsel %vm319, %v4132, %v4146
    %v4148 = vsel %vm321, %v4133, %v4147
    %v4149 = vsel %vm323, %v4134, %v4148
    %v4150 = vsel %vm325, %v4135, %v4149
    %v4151 = vsel %vm327, %v4136, %v4150
    %v4152 = vsel %vm329, %v4137, %v4151
    %v4153 = vsel %vm317, %v4139, %v4138
    %v4154 = vsel %vm319, %v4140, %v4153
    %v4155 = vsel %vm321, %v4141, %v4154
    %v4156 = vsel %vm323, %v4142, %v4155
    %v4157 = vsel %vm325, %v4143, %v4156
    %v4158 = vsel %vm327, %v4144, %v4157
    %v4159 = vsel %vm329, %v4145, %v4158
    %v4162 = vsel %vm220, %v4152, 0.0
    %4163 = vadd.xlane.f32.xlu0 %v4162
    %v4164 = vpop.xlane.xlu0 %4163
    %v4165 = vsel %vm220, %v4159, 0.0
    %4166 = vadd.xlane.f32.xlu0 %v4165
    %v4167 = vpop.xlane.xlu0 %4166
    %v4168 = vrcp.pop %v4164
    %v4169 = vrcp.pop %v4167
    %v4172 = vperm.slane %v4168, 0
    %v4173 = vperm.slane %v4168, 1
    %v4174 = vperm.slane %v4168, 2
    %v4175 = vperm.slane %v4168, 3
    %v4176 = vperm.slane %v4168, 4
    %v4177 = vperm.slane %v4168, 5
    %v4178 = vperm.slane %v4168, 6
    %v4179 = vperm.slane %v4168, 7
    %v4180 = vperm.slane %v4169, 0
    %v4181 = vperm.slane %v4169, 1
    %v4182 = vperm.slane %v4169, 2
    %v4183 = vperm.slane %v4169, 3
    %v4184 = vperm.slane %v4169, 4
    %v4185 = vperm.slane %v4169, 5
    %v4186 = vperm.slane %v4169, 6
    %v4187 = vperm.slane %v4169, 7
    %v4204 = vmul.f32 %v4035, %v4172
    %v4205 = vmul.f32 %v4037, %v4173
    %v4206 = vmul.f32 %v4039, %v4174
    %v4207 = vmul.f32 %v4041, %v4175
    %v4208 = vmul.f32 %v4043, %v4176
    %v4209 = vmul.f32 %v4045, %v4177
    %v4210 = vmul.f32 %v4047, %v4178
    %v4211 = vmul.f32 %v4049, %v4179
    %v4212 = vmul.f32 %v4051, %v4180
    %v4213 = vmul.f32 %v4053, %v4181
    %v4214 = vmul.f32 %v4055, %v4182
    %v4215 = vmul.f32 %v4057, %v4183
    %v4216 = vmul.f32 %v4059, %v4184
    %v4217 = vmul.f32 %v4061, %v4185
    %v4218 = vmul.f32 %v4063, %v4186
    %v4219 = vmul.f32 %v4065, %v4187
    %4221 = vset.pattern.permute.xlu0 0
    %4222 = vperm.xlu0 %4221, %v4204
    %v4223 = vpop.permute.xlu0 %4222
    %4226 = vset.pattern.permute.xlu0 0
    %4227 = vperm.xlu0 %4226, %v4205
    %v4228 = vpop.permute.xlu0 %4227
    %4231 = vset.pattern.permute.xlu0 0
    %4232 = vperm.xlu0 %4231, %v4206
    %v4233 = vpop.permute.xlu0 %4232
    %4236 = vset.pattern.permute.xlu0 0
    %4237 = vperm.xlu0 %4236, %v4207
    %v4238 = vpop.permute.xlu0 %4237
    %4241 = vset.pattern.permute.xlu0 0
    %4242 = vperm.xlu0 %4241, %v4208
    %v4243 = vpop.permute.xlu0 %4242
    %4246 = vset.pattern.permute.xlu0 0
    %4247 = vperm.xlu0 %4246, %v4209
    %v4248 = vpop.permute.xlu0 %4247
    %4251 = vset.pattern.permute.xlu0 0
    %4252 = vperm.xlu0 %4251, %v4210
    %v4253 = vpop.permute.xlu0 %4252
    %4256 = vset.pattern.permute.xlu0 0
    %4257 = vperm.xlu0 %4256, %v4211
    %v4258 = vpop.permute.xlu0 %4257
    %4261 = vset.pattern.permute.xlu0 0
    %4262 = vperm.xlu0 %4261, %v4212
    %v4263 = vpop.permute.xlu0 %4262
    %4266 = vset.pattern.permute.xlu0 0
    %4267 = vperm.xlu0 %4266, %v4213
    %v4268 = vpop.permute.xlu0 %4267
    %4271 = vset.pattern.permute.xlu0 0
    %4272 = vperm.xlu0 %4271, %v4214
    %v4273 = vpop.permute.xlu0 %4272
    %4276 = vset.pattern.permute.xlu0 0
    %4277 = vperm.xlu0 %4276, %v4215
    %v4278 = vpop.permute.xlu0 %4277
    %4281 = vset.pattern.permute.xlu0 0
    %4282 = vperm.xlu0 %4281, %v4216
    %v4283 = vpop.permute.xlu0 %4282
    %4286 = vset.pattern.permute.xlu0 0
    %4287 = vperm.xlu0 %4286, %v4217
    %v4288 = vpop.permute.xlu0 %4287
    %4291 = vset.pattern.permute.xlu0 0
    %4292 = vperm.xlu0 %4291, %v4218
    %v4293 = vpop.permute.xlu0 %4292
    %4296 = vset.pattern.permute.xlu0 0
    %4297 = vperm.xlu0 %4296, %v4219
    %v4298 = vpop.permute.xlu0 %4297
    %v4300 = vsel %vm1631, %v4223, 0.0
    %v4301 = vsel %vm1631, %v4228, 0.0
    %v4302 = vsel %vm1631, %v4233, 0.0
    %v4303 = vsel %vm1631, %v4238, 0.0
    %v4304 = vsel %vm1631, %v4243, 0.0
    %v4305 = vsel %vm1631, %v4248, 0.0
    %v4306 = vsel %vm1631, %v4253, 0.0
    %v4307 = vsel %vm1631, %v4258, 0.0
    %v4308 = vsel %vm1631, %v4263, 0.0
    %v4309 = vsel %vm1631, %v4268, 0.0
    %v4310 = vsel %vm1631, %v4273, 0.0
    %v4311 = vsel %vm1631, %v4278, 0.0
    %v4312 = vsel %vm1631, %v4283, 0.0
    %v4313 = vsel %vm1631, %v4288, 0.0
    %v4314 = vsel %vm1631, %v4293, 0.0
    %v4315 = vsel %vm1631, %v4298, 0.0
    %v4316 = vadd.f32 %v3802, %v4300
    %v4317 = vadd.f32 %v3803, %v4301
    %v4318 = vadd.f32 %v3804, %v4302
    %v4319 = vadd.f32 %v3805, %v4303
    %v4320 = vadd.f32 %v3806, %v4304
    %v4321 = vadd.f32 %v3807, %v4305
    %v4322 = vadd.f32 %v3808, %v4306
    %v4323 = vadd.f32 %v3809, %v4307
    %v4324 = vadd.f32 %v3810, %v4308
    %v4325 = vadd.f32 %v3811, %v4309
    %v4326 = vadd.f32 %v3812, %v4310
    %v4327 = vadd.f32 %v3813, %v4311
    %v4328 = vadd.f32 %v3814, %v4312
    %v4329 = vadd.f32 %v3815, %v4313
    %v4330 = vadd.f32 %v3816, %v4314
    %v4331 = vadd.f32 %v3817, %v4315
    %4332 = vrot.lane.b32.xlu0 %v2806, 104
    %v4333 = vpop.permute.xlu0 %4332
    %4334 = vrot.lane.b32.xlu0 %v2807, 104
    %v4335 = vpop.permute.xlu0 %4334
    %4336 = vrot.lane.b32.xlu0 %v2808, 104
    %v4337 = vpop.permute.xlu0 %4336
    %4338 = vrot.lane.b32.xlu0 %v2809, 104
    %v4339 = vpop.permute.xlu0 %4338
    %4340 = vrot.lane.b32.xlu0 %v2810, 104
    %v4341 = vpop.permute.xlu0 %4340
    %4342 = vrot.lane.b32.xlu0 %v2811, 104
    %v4343 = vpop.permute.xlu0 %4342
    %4344 = vrot.lane.b32.xlu0 %v2812, 104
    %v4345 = vpop.permute.xlu0 %4344
    %4346 = vrot.lane.b32.xlu0 %v2813, 104
    %v4347 = vpop.permute.xlu0 %4346
    %4348 = vrot.lane.b32.xlu0 %v2814, 104
    %v4349 = vpop.permute.xlu0 %4348
    %4350 = vrot.lane.b32.xlu0 %v2815, 104
    %v4351 = vpop.permute.xlu0 %4350
    %4352 = vrot.lane.b32.xlu0 %v2816, 104
    %v4353 = vpop.permute.xlu0 %4352
    %4354 = vrot.lane.b32.xlu0 %v2817, 104
    %v4355 = vpop.permute.xlu0 %4354
    %4356 = vrot.lane.b32.xlu0 %v2818, 104
    %v4357 = vpop.permute.xlu0 %4356
    %4358 = vrot.lane.b32.xlu0 %v2819, 104
    %v4359 = vpop.permute.xlu0 %4358
    %4360 = vrot.lane.b32.xlu0 %v2820, 104
    %v4361 = vpop.permute.xlu0 %4360
    %4362 = vrot.lane.b32.xlu0 %v2821, 104
    %v4363 = vpop.permute.xlu0 %4362
    %v4380 = vsel %vm220, %v4333, 0.0
    %4381 = vadd.xlane.f32.xlu0 %v4380
    %v4382 = vpop.xlane.xlu0 %4381
    %v4383 = vsel %vm220, %v4335, 0.0
    %4384 = vadd.xlane.f32.xlu0 %v4383
    %v4385 = vpop.xlane.xlu0 %4384
    %v4386 = vsel %vm220, %v4337, 0.0
    %4387 = vadd.xlane.f32.xlu0 %v4386
    %v4388 = vpop.xlane.xlu0 %4387
    %v4389 = vsel %vm220, %v4339, 0.0
    %4390 = vadd.xlane.f32.xlu0 %v4389
    %v4391 = vpop.xlane.xlu0 %4390
    %v4392 = vsel %vm220, %v4341, 0.0
    %4393 = vadd.xlane.f32.xlu0 %v4392
    %v4394 = vpop.xlane.xlu0 %4393
    %v4395 = vsel %vm220, %v4343, 0.0
    %4396 = vadd.xlane.f32.xlu0 %v4395
    %v4397 = vpop.xlane.xlu0 %4396
    %v4398 = vsel %vm220, %v4345, 0.0
    %4399 = vadd.xlane.f32.xlu0 %v4398
    %v4400 = vpop.xlane.xlu0 %4399
    %v4401 = vsel %vm220, %v4347, 0.0
    %4402 = vadd.xlane.f32.xlu0 %v4401
    %v4403 = vpop.xlane.xlu0 %4402
    %v4404 = vsel %vm220, %v4349, 0.0
    %4405 = vadd.xlane.f32.xlu0 %v4404
    %v4406 = vpop.xlane.xlu0 %4405
    %v4407 = vsel %vm220, %v4351, 0.0
    %4408 = vadd.xlane.f32.xlu0 %v4407
    %v4409 = vpop.xlane.xlu0 %4408
    %v4410 = vsel %vm220, %v4353, 0.0
    %4411 = vadd.xlane.f32.xlu0 %v4410
    %v4412 = vpop.xlane.xlu0 %4411
    %v4413 = vsel %vm220, %v4355, 0.0
    %4414 = vadd.xlane.f32.xlu0 %v4413
    %v4415 = vpop.xlane.xlu0 %4414
    %v4416 = vsel %vm220, %v4357, 0.0
    %4417 = vadd.xlane.f32.xlu0 %v4416
    %v4418 = vpop.xlane.xlu0 %4417
    %v4419 = vsel %vm220, %v4359, 0.0
    %4420 = vadd.xlane.f32.xlu0 %v4419
    %v4421 = vpop.xlane.xlu0 %4420
    %v4422 = vsel %vm220, %v4361, 0.0
    %4423 = vadd.xlane.f32.xlu0 %v4422
    %v4424 = vpop.xlane.xlu0 %4423
    %v4425 = vsel %vm220, %v4363, 0.0
    %4426 = vadd.xlane.f32.xlu0 %v4425
    %v4427 = vpop.xlane.xlu0 %4426
    %v4428 = vmul.f32 %v4382, 0.35355338
    %v4429 = vmul.f32 %v4385, 0.35355338
    %v4430 = vmul.f32 %v4388, 0.35355338
    %v4431 = vmul.f32 %v4391, 0.35355338
    %v4432 = vmul.f32 %v4394, 0.35355338
    %v4433 = vmul.f32 %v4397, 0.35355338
    %v4434 = vmul.f32 %v4400, 0.35355338
    %v4435 = vmul.f32 %v4403, 0.35355338
    %v4436 = vmul.f32 %v4406, 0.35355338
    %v4437 = vmul.f32 %v4409, 0.35355338
    %v4438 = vmul.f32 %v4412, 0.35355338
    %v4439 = vmul.f32 %v4415, 0.35355338
    %v4440 = vmul.f32 %v4418, 0.35355338
    %v4441 = vmul.f32 %v4421, 0.35355338
    %v4442 = vmul.f32 %v4424, 0.35355338
    %v4443 = vmul.f32 %v4427, 0.35355338
    %v4460 = vperm.slane %v4428, %v80
    %v4461 = vperm.slane %v4429, %v80
    %v4462 = vperm.slane %v4430, %v80
    %v4463 = vperm.slane %v4431, %v80
    %v4464 = vperm.slane %v4432, %v80
    %v4465 = vperm.slane %v4433, %v80
    %v4466 = vperm.slane %v4434, %v80
    %v4467 = vperm.slane %v4435, %v80
    %v4468 = vperm.slane %v4436, %v80
    %v4469 = vperm.slane %v4437, %v80
    %v4470 = vperm.slane %v4438, %v80
    %v4471 = vperm.slane %v4439, %v80
    %v4472 = vperm.slane %v4440, %v80
    %v4473 = vperm.slane %v4441, %v80
    %v4474 = vperm.slane %v4442, %v80
    %v4475 = vperm.slane %v4443, %v80
    %v4476 = vsel %vm317, %v4461, %v4460
    %v4477 = vsel %vm319, %v4462, %v4476
    %v4478 = vsel %vm321, %v4463, %v4477
    %v4479 = vsel %vm323, %v4464, %v4478
    %v4480 = vsel %vm325, %v4465, %v4479
    %v4481 = vsel %vm327, %v4466, %v4480
    %v4482 = vsel %vm329, %v4467, %v4481
    %v4483 = vsel %vm317, %v4469, %v4468
    %v4484 = vsel %vm319, %v4470, %v4483
    %v4485 = vsel %vm321, %v4471, %v4484
    %v4486 = vsel %vm323, %v4472, %v4485
    %v4487 = vsel %vm325, %v4473, %v4486
    %v4488 = vsel %vm327, %v4474, %v4487
    %v4489 = vsel %vm329, %v4475, %v4488
    %v4492 = vsel %vm220, %v4482, -inf
    %4493 = vmax.xlane.f32.xlu0 %v4492
    %v4494 = vpop.xlane.xlu0 %4493
    %v4495 = vsel %vm220, %v4489, -inf
    %4496 = vmax.xlane.f32.xlu0 %v4495
    %v4497 = vpop.xlane.xlu0 %4496
    %v4500 = vperm.slane %v4494, 0
    %v4501 = vperm.slane %v4494, 1
    %v4502 = vperm.slane %v4494, 2
    %v4503 = vperm.slane %v4494, 3
    %v4504 = vperm.slane %v4494, 4
    %v4505 = vperm.slane %v4494, 5
    %v4506 = vperm.slane %v4494, 6
    %v4507 = vperm.slane %v4494, 7
    %v4508 = vperm.slane %v4497, 0
    %v4509 = vperm.slane %v4497, 1
    %v4510 = vperm.slane %v4497, 2
    %v4511 = vperm.slane %v4497, 3
    %v4512 = vperm.slane %v4497, 4
    %v4513 = vperm.slane %v4497, 5
    %v4514 = vperm.slane %v4497, 6
    %v4515 = vperm.slane %v4497, 7
    %v4532 = vsub.f32 %v4428, %v4500
    %v4533 = vsub.f32 %v4429, %v4501
    %v4534 = vsub.f32 %v4430, %v4502
    %v4535 = vsub.f32 %v4431, %v4503
    %v4536 = vsub.f32 %v4432, %v4504
    %v4537 = vsub.f32 %v4433, %v4505
    %v4538 = vsub.f32 %v4434, %v4506
    %v4539 = vsub.f32 %v4435, %v4507
    %v4540 = vsub.f32 %v4436, %v4508
    %v4541 = vsub.f32 %v4437, %v4509
    %v4542 = vsub.f32 %v4438, %v4510
    %v4543 = vsub.f32 %v4439, %v4511
    %v4544 = vsub.f32 %v4440, %v4512
    %v4545 = vsub.f32 %v4441, %v4513
    %v4546 = vsub.f32 %v4442, %v4514
    %v4547 = vsub.f32 %v4443, %v4515
    %v4548 = vmul.f32 %v4532, 1.442695
    %v4549 = vpow.pop %v4548
    %v4550 = vmul.f32 %v4533, 1.442695
    %v4551 = vpow.pop %v4550
    %v4552 = vmul.f32 %v4534, 1.442695
    %v4553 = vpow.pop %v4552
    %v4554 = vmul.f32 %v4535, 1.442695
    %v4555 = vpow.pop %v4554
    %v4556 = vmul.f32 %v4536, 1.442695
    %v4557 = vpow.pop %v4556
    %v4558 = vmul.f32 %v4537, 1.442695
    %v4559 = vpow.pop %v4558
    %v4560 = vmul.f32 %v4538, 1.442695
    %v4561 = vpow.pop %v4560
    %v4562 = vmul.f32 %v4539, 1.442695
    %v4563 = vpow.pop %v4562
    %v4564 = vmul.f32 %v4540, 1.442695
    %v4565 = vpow.pop %v4564
    %v4566 = vmul.f32 %v4541, 1.442695
    %v4567 = vpow.pop %v4566
    %v4568 = vmul.f32 %v4542, 1.442695
    %v4569 = vpow.pop %v4568
    %v4570 = vmul.f32 %v4543, 1.442695
    %v4571 = vpow.pop %v4570
    %v4572 = vmul.f32 %v4544, 1.442695
    %v4573 = vpow.pop %v4572
    %v4574 = vmul.f32 %v4545, 1.442695
    %v4575 = vpow.pop %v4574
    %v4576 = vmul.f32 %v4546, 1.442695
    %v4577 = vpow.pop %v4576
    %v4578 = vmul.f32 %v4547, 1.442695
    %v4579 = vpow.pop %v4578
    %4596 = vset.pattern.permute.xlu0 0
    %4597 = vperm.xlu0 %4596, %v4549
    %v4598 = vpop.permute.xlu0 %4597
    %4599 = vset.pattern.permute.xlu0 0
    %4600 = vperm.xlu0 %4599, %v4551
    %v4601 = vpop.permute.xlu0 %4600
    %4602 = vset.pattern.permute.xlu0 0
    %4603 = vperm.xlu0 %4602, %v4553
    %v4604 = vpop.permute.xlu0 %4603
    %4605 = vset.pattern.permute.xlu0 0
    %4606 = vperm.xlu0 %4605, %v4555
    %v4607 = vpop.permute.xlu0 %4606
    %4608 = vset.pattern.permute.xlu0 0
    %4609 = vperm.xlu0 %4608, %v4557
    %v4610 = vpop.permute.xlu0 %4609
    %4611 = vset.pattern.permute.xlu0 0
    %4612 = vperm.xlu0 %4611, %v4559
    %v4613 = vpop.permute.xlu0 %4612
    %4614 = vset.pattern.permute.xlu0 0
    %4615 = vperm.xlu0 %4614, %v4561
    %v4616 = vpop.permute.xlu0 %4615
    %4617 = vset.pattern.permute.xlu0 0
    %4618 = vperm.xlu0 %4617, %v4563
    %v4619 = vpop.permute.xlu0 %4618
    %4620 = vset.pattern.permute.xlu0 0
    %4621 = vperm.xlu0 %4620, %v4565
    %v4622 = vpop.permute.xlu0 %4621
    %4623 = vset.pattern.permute.xlu0 0
    %4624 = vperm.xlu0 %4623, %v4567
    %v4625 = vpop.permute.xlu0 %4624
    %4626 = vset.pattern.permute.xlu0 0
    %4627 = vperm.xlu0 %4626, %v4569
    %v4628 = vpop.permute.xlu0 %4627
    %4629 = vset.pattern.permute.xlu0 0
    %4630 = vperm.xlu0 %4629, %v4571
    %v4631 = vpop.permute.xlu0 %4630
    %4632 = vset.pattern.permute.xlu0 0
    %4633 = vperm.xlu0 %4632, %v4573
    %v4634 = vpop.permute.xlu0 %4633
    %4635 = vset.pattern.permute.xlu0 0
    %4636 = vperm.xlu0 %4635, %v4575
    %v4637 = vpop.permute.xlu0 %4636
    %4638 = vset.pattern.permute.xlu0 0
    %4639 = vperm.xlu0 %4638, %v4577
    %v4640 = vpop.permute.xlu0 %4639
    %4641 = vset.pattern.permute.xlu0 0
    %4642 = vperm.xlu0 %4641, %v4579
    %v4643 = vpop.permute.xlu0 %4642
    %v4644 = vperm.slane %v4598, %v80
    %v4645 = vperm.slane %v4601, %v80
    %v4646 = vperm.slane %v4604, %v80
    %v4647 = vperm.slane %v4607, %v80
    %v4648 = vperm.slane %v4610, %v80
    %v4649 = vperm.slane %v4613, %v80
    %v4650 = vperm.slane %v4616, %v80
    %v4651 = vperm.slane %v4619, %v80
    %v4652 = vperm.slane %v4622, %v80
    %v4653 = vperm.slane %v4625, %v80
    %v4654 = vperm.slane %v4628, %v80
    %v4655 = vperm.slane %v4631, %v80
    %v4656 = vperm.slane %v4634, %v80
    %v4657 = vperm.slane %v4637, %v80
    %v4658 = vperm.slane %v4640, %v80
    %v4659 = vperm.slane %v4643, %v80
    %v4660 = vsel %vm317, %v4645, %v4644
    %v4661 = vsel %vm319, %v4646, %v4660
    %v4662 = vsel %vm321, %v4647, %v4661
    %v4663 = vsel %vm323, %v4648, %v4662
    %v4664 = vsel %vm325, %v4649, %v4663
    %v4665 = vsel %vm327, %v4650, %v4664
    %v4666 = vsel %vm329, %v4651, %v4665
    %v4667 = vsel %vm317, %v4653, %v4652
    %v4668 = vsel %vm319, %v4654, %v4667
    %v4669 = vsel %vm321, %v4655, %v4668
    %v4670 = vsel %vm323, %v4656, %v4669
    %v4671 = vsel %vm325, %v4657, %v4670
    %v4672 = vsel %vm327, %v4658, %v4671
    %v4673 = vsel %vm329, %v4659, %v4672
    %v4676 = vsel %vm220, %v4666, 0.0
    %4677 = vadd.xlane.f32.xlu0 %v4676
    %v4678 = vpop.xlane.xlu0 %4677
    %v4679 = vsel %vm220, %v4673, 0.0
    %4680 = vadd.xlane.f32.xlu0 %v4679
    %v4681 = vpop.xlane.xlu0 %4680
    %v4682 = vrcp.pop %v4678
    %v4683 = vrcp.pop %v4681
    %v4686 = vperm.slane %v4682, 0
    %v4687 = vperm.slane %v4682, 1
    %v4688 = vperm.slane %v4682, 2
    %v4689 = vperm.slane %v4682, 3
    %v4690 = vperm.slane %v4682, 4
    %v4691 = vperm.slane %v4682, 5
    %v4692 = vperm.slane %v4682, 6
    %v4693 = vperm.slane %v4682, 7
    %v4694 = vperm.slane %v4683, 0
    %v4695 = vperm.slane %v4683, 1
    %v4696 = vperm.slane %v4683, 2
    %v4697 = vperm.slane %v4683, 3
    %v4698 = vperm.slane %v4683, 4
    %v4699 = vperm.slane %v4683, 5
    %v4700 = vperm.slane %v4683, 6
    %v4701 = vperm.slane %v4683, 7
    %v4718 = vmul.f32 %v4549, %v4686
    %v4719 = vmul.f32 %v4551, %v4687
    %v4720 = vmul.f32 %v4553, %v4688
    %v4721 = vmul.f32 %v4555, %v4689
    %v4722 = vmul.f32 %v4557, %v4690
    %v4723 = vmul.f32 %v4559, %v4691
    %v4724 = vmul.f32 %v4561, %v4692
    %v4725 = vmul.f32 %v4563, %v4693
    %v4726 = vmul.f32 %v4565, %v4694
    %v4727 = vmul.f32 %v4567, %v4695
    %v4728 = vmul.f32 %v4569, %v4696
    %v4729 = vmul.f32 %v4571, %v4697
    %v4730 = vmul.f32 %v4573, %v4698
    %v4731 = vmul.f32 %v4575, %v4699
    %v4732 = vmul.f32 %v4577, %v4700
    %v4733 = vmul.f32 %v4579, %v4701
    %4735 = vset.pattern.permute.xlu0 0
    %4736 = vperm.xlu0 %4735, %v4718
    %v4737 = vpop.permute.xlu0 %4736
    %4740 = vset.pattern.permute.xlu0 0
    %4741 = vperm.xlu0 %4740, %v4719
    %v4742 = vpop.permute.xlu0 %4741
    %4745 = vset.pattern.permute.xlu0 0
    %4746 = vperm.xlu0 %4745, %v4720
    %v4747 = vpop.permute.xlu0 %4746
    %4750 = vset.pattern.permute.xlu0 0
    %4751 = vperm.xlu0 %4750, %v4721
    %v4752 = vpop.permute.xlu0 %4751
    %4755 = vset.pattern.permute.xlu0 0
    %4756 = vperm.xlu0 %4755, %v4722
    %v4757 = vpop.permute.xlu0 %4756
    %4760 = vset.pattern.permute.xlu0 0
    %4761 = vperm.xlu0 %4760, %v4723
    %v4762 = vpop.permute.xlu0 %4761
    %4765 = vset.pattern.permute.xlu0 0
    %4766 = vperm.xlu0 %4765, %v4724
    %v4767 = vpop.permute.xlu0 %4766
    %4770 = vset.pattern.permute.xlu0 0
    %4771 = vperm.xlu0 %4770, %v4725
    %v4772 = vpop.permute.xlu0 %4771
    %4775 = vset.pattern.permute.xlu0 0
    %4776 = vperm.xlu0 %4775, %v4726
    %v4777 = vpop.permute.xlu0 %4776
    %4780 = vset.pattern.permute.xlu0 0
    %4781 = vperm.xlu0 %4780, %v4727
    %v4782 = vpop.permute.xlu0 %4781
    %4785 = vset.pattern.permute.xlu0 0
    %4786 = vperm.xlu0 %4785, %v4728
    %v4787 = vpop.permute.xlu0 %4786
    %4790 = vset.pattern.permute.xlu0 0
    %4791 = vperm.xlu0 %4790, %v4729
    %v4792 = vpop.permute.xlu0 %4791
    %4795 = vset.pattern.permute.xlu0 0
    %4796 = vperm.xlu0 %4795, %v4730
    %v4797 = vpop.permute.xlu0 %4796
    %4800 = vset.pattern.permute.xlu0 0
    %4801 = vperm.xlu0 %4800, %v4731
    %v4802 = vpop.permute.xlu0 %4801
    %4805 = vset.pattern.permute.xlu0 0
    %4806 = vperm.xlu0 %4805, %v4732
    %v4807 = vpop.permute.xlu0 %4806
    %4810 = vset.pattern.permute.xlu0 0
    %4811 = vperm.xlu0 %4810, %v4733
    %v4812 = vpop.permute.xlu0 %4811
    %v4814 = vsel %vm2147, %v4737, 0.0
    %v4815 = vsel %vm2147, %v4742, 0.0
    %v4816 = vsel %vm2147, %v4747, 0.0
    %v4817 = vsel %vm2147, %v4752, 0.0
    %v4818 = vsel %vm2147, %v4757, 0.0
    %v4819 = vsel %vm2147, %v4762, 0.0
    %v4820 = vsel %vm2147, %v4767, 0.0
    %v4821 = vsel %vm2147, %v4772, 0.0
    %v4822 = vsel %vm2147, %v4777, 0.0
    %v4823 = vsel %vm2147, %v4782, 0.0
    %v4824 = vsel %vm2147, %v4787, 0.0
    %v4825 = vsel %vm2147, %v4792, 0.0
    %v4826 = vsel %vm2147, %v4797, 0.0
    %v4827 = vsel %vm2147, %v4802, 0.0
    %v4828 = vsel %vm2147, %v4807, 0.0
    %v4829 = vsel %vm2147, %v4812, 0.0
    %v4830 = vadd.f32 %v4316, %v4814
    %v4831 = vadd.f32 %v4317, %v4815
    %v4832 = vadd.f32 %v4318, %v4816
    %v4833 = vadd.f32 %v4319, %v4817
    %v4834 = vadd.f32 %v4320, %v4818
    %v4835 = vadd.f32 %v4321, %v4819
    %v4836 = vadd.f32 %v4322, %v4820
    %v4837 = vadd.f32 %v4323, %v4821
    %v4838 = vadd.f32 %v4324, %v4822
    %v4839 = vadd.f32 %v4325, %v4823
    %v4840 = vadd.f32 %v4326, %v4824
    %v4841 = vadd.f32 %v4327, %v4825
    %v4842 = vadd.f32 %v4328, %v4826
    %v4843 = vadd.f32 %v4329, %v4827
    %v4844 = vadd.f32 %v4330, %v4828
    %v4845 = vadd.f32 %v4331, %v4829
    %4846 = vrot.lane.b32.xlu0 %v2748, 64
    %v4847 = vpop.permute.xlu0 %4846
    %4848 = vrot.lane.b32.xlu0 %v2750, 64
    %v4849 = vpop.permute.xlu0 %4848
    %v4852 = vmul.f32 %v4830, %v4847
    %v4853 = vmul.f32 %v4831, %v4847
    %v4854 = vmul.f32 %v4832, %v4847
    %v4855 = vmul.f32 %v4833, %v4847
    %v4856 = vmul.f32 %v4834, %v4847
    %v4857 = vmul.f32 %v4835, %v4847
    %v4858 = vmul.f32 %v4836, %v4847
    %v4859 = vmul.f32 %v4837, %v4847
    %v4860 = vmul.f32 %v4838, %v4849
    %v4861 = vmul.f32 %v4839, %v4849
    %v4862 = vmul.f32 %v4840, %v4849
    %v4863 = vmul.f32 %v4841, %v4849
    %v4864 = vmul.f32 %v4842, %v4849
    %v4865 = vmul.f32 %v4843, %v4849
    %v4866 = vmul.f32 %v4844, %v4849
    %v4867 = vmul.f32 %v4845, %v4849
    %v4868 = vsel %vm132, %v4852, 0.0
    %v4869 = vrot.slane %v4868, 4
    %v4870 = vadd.f32 %v4868, %v4869
    %v4871 = vrot.slane %v4870, 2
    %v4872 = vadd.f32 %v4870, %v4871
    %v4873 = vrot.slane %v4872, 1
    %v4874 = vadd.f32 %v4872, %v4873
    %v4875 = vsel %vm132, %v4853, 0.0
    %v4876 = vrot.slane %v4875, 4
    %v4877 = vadd.f32 %v4875, %v4876
    %v4878 = vrot.slane %v4877, 2
    %v4879 = vadd.f32 %v4877, %v4878
    %v4880 = vrot.slane %v4879, 1
    %v4881 = vadd.f32 %v4879, %v4880
    %v4882 = vsel %vm132, %v4854, 0.0
    %v4883 = vrot.slane %v4882, 4
    %v4884 = vadd.f32 %v4882, %v4883
    %v4885 = vrot.slane %v4884, 2
    %v4886 = vadd.f32 %v4884, %v4885
    %v4887 = vrot.slane %v4886, 1
    %v4888 = vadd.f32 %v4886, %v4887
    %v4889 = vsel %vm132, %v4855, 0.0
    %v4890 = vrot.slane %v4889, 4
    %v4891 = vadd.f32 %v4889, %v4890
    %v4892 = vrot.slane %v4891, 2
    %v4893 = vadd.f32 %v4891, %v4892
    %v4894 = vrot.slane %v4893, 1
    %v4895 = vadd.f32 %v4893, %v4894
    %v4896 = vsel %vm132, %v4856, 0.0
    %v4897 = vrot.slane %v4896, 4
    %v4898 = vadd.f32 %v4896, %v4897
    %v4899 = vrot.slane %v4898, 2
    %v4900 = vadd.f32 %v4898, %v4899
    %v4901 = vrot.slane %v4900, 1
    %v4902 = vadd.f32 %v4900, %v4901
    %v4903 = vsel %vm132, %v4857, 0.0
    %v4904 = vrot.slane %v4903, 4
    %v4905 = vadd.f32 %v4903, %v4904
    %v4906 = vrot.slane %v4905, 2
    %v4907 = vadd.f32 %v4905, %v4906
    %v4908 = vrot.slane %v4907, 1
    %v4909 = vadd.f32 %v4907, %v4908
    %v4910 = vsel %vm132, %v4858, 0.0
    %v4911 = vrot.slane %v4910, 4
    %v4912 = vadd.f32 %v4910, %v4911
    %v4913 = vrot.slane %v4912, 2
    %v4914 = vadd.f32 %v4912, %v4913
    %v4915 = vrot.slane %v4914, 1
    %v4916 = vadd.f32 %v4914, %v4915
    %v4917 = vsel %vm132, %v4859, 0.0
    %v4918 = vrot.slane %v4917, 4
    %v4919 = vadd.f32 %v4917, %v4918
    %v4920 = vrot.slane %v4919, 2
    %v4921 = vadd.f32 %v4919, %v4920
    %v4922 = vrot.slane %v4921, 1
    %v4923 = vadd.f32 %v4921, %v4922
    %v4924 = vsel %vm132, %v4860, 0.0
    %v4925 = vrot.slane %v4924, 4
    %v4926 = vadd.f32 %v4924, %v4925
    %v4927 = vrot.slane %v4926, 2
    %v4928 = vadd.f32 %v4926, %v4927
    %v4929 = vrot.slane %v4928, 1
    %v4930 = vadd.f32 %v4928, %v4929
    %v4931 = vsel %vm132, %v4861, 0.0
    %v4932 = vrot.slane %v4931, 4
    %v4933 = vadd.f32 %v4931, %v4932
    %v4934 = vrot.slane %v4933, 2
    %v4935 = vadd.f32 %v4933, %v4934
    %v4936 = vrot.slane %v4935, 1
    %v4937 = vadd.f32 %v4935, %v4936
    %v4938 = vsel %vm132, %v4862, 0.0
    %v4939 = vrot.slane %v4938, 4
    %v4940 = vadd.f32 %v4938, %v4939
    %v4941 = vrot.slane %v4940, 2
    %v4942 = vadd.f32 %v4940, %v4941
    %v4943 = vrot.slane %v4942, 1
    %v4944 = vadd.f32 %v4942, %v4943
    %v4945 = vsel %vm132, %v4863, 0.0
    %v4946 = vrot.slane %v4945, 4
    %v4947 = vadd.f32 %v4945, %v4946
    %v4948 = vrot.slane %v4947, 2
    %v4949 = vadd.f32 %v4947, %v4948
    %v4950 = vrot.slane %v4949, 1
    %v4951 = vadd.f32 %v4949, %v4950
    %v4952 = vsel %vm132, %v4864, 0.0
    %v4953 = vrot.slane %v4952, 4
    %v4954 = vadd.f32 %v4952, %v4953
    %v4955 = vrot.slane %v4954, 2
    %v4956 = vadd.f32 %v4954, %v4955
    %v4957 = vrot.slane %v4956, 1
    %v4958 = vadd.f32 %v4956, %v4957
    %v4959 = vsel %vm132, %v4865, 0.0
    %v4960 = vrot.slane %v4959, 4
    %v4961 = vadd.f32 %v4959, %v4960
    %v4962 = vrot.slane %v4961, 2
    %v4963 = vadd.f32 %v4961, %v4962
    %v4964 = vrot.slane %v4963, 1
    %v4965 = vadd.f32 %v4963, %v4964
    %v4966 = vsel %vm132, %v4866, 0.0
    %v4967 = vrot.slane %v4966, 4
    %v4968 = vadd.f32 %v4966, %v4967
    %v4969 = vrot.slane %v4968, 2
    %v4970 = vadd.f32 %v4968, %v4969
    %v4971 = vrot.slane %v4970, 1
    %v4972 = vadd.f32 %v4970, %v4971
    %v4973 = vsel %vm132, %v4867, 0.0
    %v4974 = vrot.slane %v4973, 4
    %v4975 = vadd.f32 %v4973, %v4974
    %v4976 = vrot.slane %v4975, 2
    %v4977 = vadd.f32 %v4975, %v4976
    %v4978 = vrot.slane %v4977, 1
    %v4979 = vadd.f32 %v4977, %v4978
    %v4980 = vpack.c.bf16 %v4874, %v4874
    %v4981 = vpack.c.bf16 %v4881, %v4881
    %v4982 = vpack.c.bf16 %v4888, %v4888
    %v4983 = vpack.c.bf16 %v4895, %v4895
    %v4984 = vpack.c.bf16 %v4902, %v4902
    %v4985 = vpack.c.bf16 %v4909, %v4909
    %v4986 = vpack.c.bf16 %v4916, %v4916
    %v4987 = vpack.c.bf16 %v4923, %v4923
    %v4988 = vpack.c.bf16 %v4930, %v4930
    %v4989 = vpack.c.bf16 %v4937, %v4937
    %v4990 = vpack.c.bf16 %v4944, %v4944
    %v4991 = vpack.c.bf16 %v4951, %v4951
    %v4992 = vpack.c.bf16 %v4958, %v4958
    %v4993 = vpack.c.bf16 %v4965, %v4965
    %v4994 = vpack.c.bf16 %v4972, %v4972
    %v4995 = vpack.c.bf16 %v4979, %v4979
    %v5012 = vunpack.c.l.b16 %v4980
    %v5013 = vunpack.c.l.b16 %v4981
    %v5014 = vunpack.c.l.b16 %v4982
    %v5015 = vunpack.c.l.b16 %v4983
    %v5016 = vunpack.c.l.b16 %v4984
    %v5017 = vunpack.c.l.b16 %v4985
    %v5018 = vunpack.c.l.b16 %v4986
    %v5019 = vunpack.c.l.b16 %v4987
    %v5020 = vunpack.c.l.b16 %v4988
    %v5021 = vunpack.c.l.b16 %v4989
    %v5022 = vunpack.c.l.b16 %v4990
    %v5023 = vunpack.c.l.b16 %v4991
    %v5024 = vunpack.c.l.b16 %v4992
    %v5025 = vunpack.c.l.b16 %v4993
    %v5026 = vunpack.c.l.b16 %v4994
    %v5027 = vunpack.c.l.b16 %v4995
    %v5028 = vsel %vm317, %v5013, %v5012
    %v5029 = vsel %vm319, %v5014, %v5028
    %v5030 = vsel %vm321, %v5015, %v5029
    %v5031 = vsel %vm323, %v5016, %v5030
    %v5032 = vsel %vm325, %v5017, %v5031
    %v5033 = vsel %vm327, %v5018, %v5032
    %v5034 = vsel %vm329, %v5019, %v5033
    %v5035 = vsel %vm317, %v5021, %v5020
    %v5036 = vsel %vm319, %v5022, %v5035
    %v5037 = vsel %vm321, %v5023, %v5036
    %v5038 = vsel %vm323, %v5024, %v5037
    %v5039 = vsel %vm325, %v5025, %v5038
    %v5040 = vsel %vm327, %v5026, %v5039
    %v5041 = vsel %vm329, %v5027, %v5040
    %v5042 = vpack.c.b16 %v5041, %v5034
    %5043 = vrot.lane.b32.xlu0 %v2731, 32
    %v5044 = vpop.permute.xlu0 %5043
    %5045 = vrot.lane.b32.xlu0 %v2732, 32
    %v5046 = vpop.permute.xlu0 %5045
    %5050 = vrot.lane.b32.xlu0 %v2722, 32
    %v5051 = vpop.permute.xlu0 %5050
    %v5054 = vsel %vm132, %v5042, 0
    %5056 = vmatpush.bf16.msra.mxu0 0
    %5057 = vmatpush.bf16.msra.mxu0 0
    %5058 = vmatpush.bf16.msra.mxu0 0
    %5059 = vmatpush.bf16.msra.mxu0 0
    %5060 = vmatpush.bf16.msra.mxu0 0
    %5061 = vmatpush.bf16.msra.mxu0 0
    %5062 = vmatpush.bf16.msra.mxu0 %v5046
    %5063 = vmatpush.bf16.msra.mxu0 %v5044
    %5064 = vmatmul.bf16.gmra.mxu0 %v5054
    %v5065 = vpop.f32.mrf.mxu0
    %v5066 = vadd.f32 %v5051, %v5065
    %v5067 = vpop.f32.mrf.mxu0
    %v5068 = vadd.f32 %v5051, %v5067
    %5069 = vdwg.mxu0
    %v5070 = vadd.f32 %v2690, %v5066
    %v5071 = vadd.f32 %v2691, %v5068
    %v5072 = vsel %vm132, %v5070, 0.0
    %5073 = vadd.xlane.f32.xlu0 %v5072
    %v5074 = vpop.xlane.xlu0 %5073
    %v5075 = vsel %vm132, %v5071, 0.0
    %5076 = vadd.xlane.f32.xlu0 %v5075
    %v5077 = vpop.xlane.xlu0 %5076
    %v5078 = vmul.f32 %v5074, %v2498
    %v5079 = vmul.f32 %v5077, %v2498
    %v5080 = vsub.f32 %v5070, %v5078
    %v5081 = vsub.f32 %v5071, %v5079
    %v5082 = vmul.f32 %v5080, %v5080
    %v5083 = vmul.f32 %v5081, %v5081
    %v5084 = vsel %vm132, %v5082, 0.0
    %5085 = vadd.xlane.f32.xlu0 %v5084
    %v5086 = vpop.xlane.xlu0 %5085
    %v5087 = vsel %vm132, %v5083, 0.0
    %5088 = vadd.xlane.f32.xlu0 %v5087
    %v5089 = vpop.xlane.xlu0 %5088
    %v5090 = vmul.f32 %v5086, %v2498
    %v5091 = vmul.f32 %v5089, %v2498
    %v5092 = vadd.f32 %v5090, 1e-05
    %v5093 = vadd.f32 %v5091, 1e-05
    %v5094 = vrsqrt.pop %v5092
    %v5095 = vmul.f32 %v5094, %v5092
    %v5096 = vmul.f32 %v5095, %v5094
    %v5097 = vmul.f32 0.5, %v5096
    %v5098 = vsub.f32 1.5, %v5097
    %v5099 = vmul.f32 %v5094, %v5098
    %vm5100 = vweird.f32 %v5092
    %vm5101 = vweird.f32 %v5094
    %vm5102 = vmor %vm5100, %vm5101
    %v5103 = vsel %vm5102, %v5094, %v5099
    %v5104 = vrsqrt.pop %v5093
    %v5105 = vmul.f32 %v5104, %v5093
    %v5106 = vmul.f32 %v5105, %v5104
    %v5107 = vmul.f32 0.5, %v5106
    %v5108 = vsub.f32 1.5, %v5107
    %v5109 = vmul.f32 %v5104, %v5108
    %vm5110 = vweird.f32 %v5093
    %vm5111 = vweird.f32 %v5104
    %vm5112 = vmor %vm5110, %vm5111
    %v5113 = vsel %vm5112, %v5104, %v5109
    %v5114 = vmul.f32 %v5080, %v5103
    %v5115 = vmul.f32 %v5081, %v5113
    %v5116 = vperm.slane %v2720, 3
    %v5117 = vmul.f32 %v5114, %v5116
    %v5118 = vmul.f32 %v5115, %v5116
    %v5119 = vperm.slane %v2720, 4
    %v5120 = vadd.f32 %v5117, %v5119
    %v5121 = vadd.f32 %v5118, %v5119
    %v5122 = vpack.c.bf16 %v5121, %v5120
    %v5123 = vperm.slane %v2720, 1
    %v5128 = vunpack.c.l.b16 %v2698
    %v5129 = vunpack.c.l.b16 %v2699
    %v5130 = vunpack.c.l.b16 %v2700
    %v5131 = vunpack.c.l.b16 %v2701
    %v5132 = vpack.c.b16 %v5129, %v5128
    %v5133 = vpack.c.b16 %v5131, %v5130
    %v5137 = vsel %vm132, %v5122, 0
    %5139 = vmatpush.bf16.msra.mxu0 0
    %5140 = vmatpush.bf16.msra.mxu0 0
    %5141 = vmatpush.bf16.msra.mxu0 0
    %5142 = vmatpush.bf16.msra.mxu0 0
    %5143 = vmatpush.bf16.msra.mxu0 0
    %5144 = vmatpush.bf16.msra.mxu0 0
    %5145 = vmatpush.bf16.msra.mxu0 %v5133
    %5146 = vmatpush.bf16.msra.mxu0 %v5132
    %5147 = vmatmul.bf16.gmra.mxu0 %v5137
    %v5148 = vpop.f32.mrf.mxu0
    %v5149 = vadd.f32 %v5123, %v5148
    %v5150 = vpop.f32.mrf.mxu0
    %v5151 = vadd.f32 %v5123, %v5150
    %5152 = vdwg.mxu0
    %v5153 = vmax.f32 %v5149, 0.0
    %v5154 = vmax.f32 %v5151, 0.0
    %v5155 = vpack.c.bf16 %v5154, %v5153
    %v5156 = vperm.slane %v2720, 2
    %v5173 = vunpack.c.l.b16 %v2703
    %v5174 = vunpack.c.l.b16 %v2704
    %v5175 = vunpack.c.l.b16 %v2705
    %v5176 = vunpack.c.l.b16 %v2706
    %v5177 = vunpack.c.l.b16 %v2707
    %v5178 = vunpack.c.l.b16 %v2708
    %v5179 = vunpack.c.l.b16 %v2709
    %v5180 = vunpack.c.l.b16 %v2710
    %v5181 = vunpack.c.l.b16 %v2711
    %v5182 = vunpack.c.l.b16 %v2712
    %v5183 = vunpack.c.l.b16 %v2713
    %v5184 = vunpack.c.l.b16 %v2714
    %v5185 = vunpack.c.l.b16 %v2715
    %v5186 = vunpack.c.l.b16 %v2716
    %v5187 = vunpack.c.l.b16 %v2717
    %v5188 = vunpack.c.l.b16 %v2718
    %v5189 = vpack.c.b16 %v5174, %v5173
    %v5190 = vpack.c.b16 %v5176, %v5175
    %v5191 = vpack.c.b16 %v5178, %v5177
    %v5192 = vpack.c.b16 %v5180, %v5179
    %v5193 = vpack.c.b16 %v5182, %v5181
    %v5194 = vpack.c.b16 %v5184, %v5183
    %v5195 = vpack.c.b16 %v5186, %v5185
    %v5196 = vpack.c.b16 %v5188, %v5187
    %5205 = vmatpush.bf16.msra.mxu0 %v5196
    %5206 = vmatpush.bf16.msra.mxu0 %v5195
    %5207 = vmatpush.bf16.msra.mxu0 %v5194
    %5208 = vmatpush.bf16.msra.mxu0 %v5193
    %5209 = vmatpush.bf16.msra.mxu0 %v5192
    %5210 = vmatpush.bf16.msra.mxu0 %v5191
    %5211 = vmatpush.bf16.msra.mxu0 %v5190
    %5212 = vmatpush.bf16.msra.mxu0 %v5189
    %5213 = vmatmul.bf16.gmra.mxu0 %v5155
    %v5214 = vpop.f32.mrf.mxu0
    %v5215 = vadd.f32 %v5156, %v5214
    %v5216 = vpop.f32.mrf.mxu0
    %v5217 = vadd.f32 %v5156, %v5216
    %5218 = vdwg.mxu0
    %v5219 = vadd.f32 %v5120, %v5215
    %v5220 = vadd.f32 %v5121, %v5217
    %v5221 = vsel %vm132, %v5219, 0.0
    %5222 = vadd.xlane.f32.xlu0 %v5221
    %v5223 = vpop.xlane.xlu0 %5222
    %v5224 = vsel %vm132, %v5220, 0.0
    %5225 = vadd.xlane.f32.xlu0 %v5224
    %v5226 = vpop.xlane.xlu0 %5225
    %v5227 = vmul.f32 %v5223, %v2498
    %v5228 = vmul.f32 %v5226, %v2498
    %v5229 = vsub.f32 %v5219, %v5227
    %v5230 = vsub.f32 %v5220, %v5228
    %v5231 = vmul.f32 %v5229, %v5229
    %v5232 = vmul.f32 %v5230, %v5230
    %v5233 = vsel %vm132, %v5231, 0.0
    %5234 = vadd.xlane.f32.xlu0 %v5233
    %v5235 = vpop.xlane.xlu0 %5234
    %v5236 = vsel %vm132, %v5232, 0.0
    %5237 = vadd.xlane.f32.xlu0 %v5236
    %v5238 = vpop.xlane.xlu0 %5237
    %v5239 = vmul.f32 %v5235, %v2498
    %v5240 = vmul.f32 %v5238, %v2498
    %v5241 = vadd.f32 %v5239, 1e-05
    %v5242 = vadd.f32 %v5240, 1e-05
    %v5243 = vrsqrt.pop %v5241
    %v5244 = vmul.f32 %v5243, %v5241
    %v5245 = vmul.f32 %v5244, %v5243
    %v5246 = vmul.f32 0.5, %v5245
    %v5247 = vsub.f32 1.5, %v5246
    %v5248 = vmul.f32 %v5243, %v5247
    %vm5249 = vweird.f32 %v5241
    %vm5250 = vweird.f32 %v5243
    %vm5251 = vmor %vm5249, %vm5250
    %v5252 = vsel %vm5251, %v5243, %v5248
    %v5253 = vrsqrt.pop %v5242
    %v5254 = vmul.f32 %v5253, %v5242
    %v5255 = vmul.f32 %v5254, %v5253
    %v5256 = vmul.f32 0.5, %v5255
    %v5257 = vsub.f32 1.5, %v5256
    %v5258 = vmul.f32 %v5253, %v5257
    %vm5259 = vweird.f32 %v5242
    %vm5260 = vweird.f32 %v5253
    %vm5261 = vmor %vm5259, %vm5260
    %v5262 = vsel %vm5261, %v5253, %v5258
    %v5263 = vmul.f32 %v5229, %v5252
    %v5264 = vmul.f32 %v5230, %v5262
    %v5265 = vperm.slane %v2720, 5
    %v5266 = vmul.f32 %v5263, %v5265
    %v5267 = vmul.f32 %v5264, %v5265
    %v5268 = vperm.slane %v2720, 6
    %v5269 = vadd.f32 %v5266, %v5268
    %v5270 = vadd.f32 %v5267, %v5268
    %v5271 = vsel %vm132, %v5269, 0.0
    %v5272 = vrot.slane %v5271, 4
    %v5273 = vadd.f32 %v5271, %v5272
    %v5274 = vrot.slane %v5273, 2
    %v5275 = vadd.f32 %v5273, %v5274
    %v5276 = vrot.slane %v5275, 1
    %v5277 = vadd.f32 %v5275, %v5276
    %v5278 = vsel %vm132, %v5270, 0.0
    %v5279 = vrot.slane %v5278, 4
    %v5280 = vadd.f32 %v5278, %v5279
    %v5281 = vrot.slane %v5280, 2
    %v5282 = vadd.f32 %v5280, %v5281
    %v5283 = vrot.slane %v5282, 1
    %v5284 = vadd.f32 %v5282, %v5283
    %v5285 = vmul.f32 %v5277, 0.125
    %v5286 = vmul.f32 %v5284, 0.125
    %v5287 = vld [vmem:[%s7] sm:$0xf]
    %v5288 = vld [vmem:[%s7 + $0x4] sm:$0xf]
    %v5289 = vld [vmem:[%s7 + $0x8] sm:$0xf]
    %v5290 = vld [vmem:[%s7 + $0xc] sm:$0xf]
    %v5291 = vpack.c.bf16 %v5285, %v5285
    %v5292 = vpack.c.bf16 %v5286, %v5286
    %v5293 = vld [vmem:[%s8] sm:$0x1]
    %v5295 = vperm.slane %v5293, 0
    %v5299 = vunpack.c.l.b16 %v5291
    %v5300 = vunpack.c.l.b16 %v5292
    %v5301 = vsel %vm317, %v5300, %v5299
    %v5302 = vpack.c.b16 %v5301, %v5301
    %v5307 = vunpack.c.l.b16 %v5287
    %v5308 = vunpack.c.l.b16 %v5288
    %v5309 = vunpack.c.l.b16 %v5289
    %v5310 = vunpack.c.l.b16 %v5290
    %v5311 = vpack.c.b16 %v5308, %v5307
    %v5312 = vpack.c.b16 %v5310, %v5309
    %v5316 = vsel %vm132, %v5302, 0
    %5318 = vmatpush.bf16.msra.mxu0 0
    %5319 = vmatpush.bf16.msra.mxu0 0
    %5320 = vmatpush.bf16.msra.mxu0 0
    %5321 = vmatpush.bf16.msra.mxu0 0
    %5322 = vmatpush.bf16.msra.mxu0 0
    %5323 = vmatpush.bf16.msra.mxu0 0
    %5324 = vmatpush.bf16.msra.mxu0 %v5312
    %5325 = vmatpush.bf16.msra.mxu0 %v5311
    %5326 = vmatmul.bf16.gmra.mxu0 %v5316
    %v5327 = vpop.f32.mrf.mxu0
    %v5328 = vadd.f32 %v5295, %v5327
    %v5329 = vpop.f32.mrf.mxu0
    %5330 = vdwg.mxu0
    %v5331 = vmax.f32 %v5328, -10.0
    %v5332 = vmin.f32 %v5331, 10.0
    %v5333 = vsel %vm85, %v5328, %v5332
    %vm5334 = vcmask 254976
    %5335 = vst.msk [vmem:[#allocation2] sm:$0x3] %vm5334, %v5333
    // Predicated region
    $region38: #{tpu_custom_call.1} parent=1 // pred_check
      _
    $region39: #{tpu_custom_call.1} parent=1 // pred_check_branch
      %5337 = sbr.rel (0) target = $region41
    $region40: #{tpu_custom_call.1} parent=1 // pred_region
      %5339 = vsyncadd [#allocation3], 0
      %s5341 = sshll.u32 [#allocation2], 4
      %s5342 = int_to_ptr.vmem [resolvable:$true] %s5341
      %s5343 = sshll.u32 %s9, 4
      %s5344 = int_to_ptr.hbm [resolvable:$true] %s5343
      %5346 = dma.vmem_to_hbm [thread:$0]  %s5342, 32, %s5344, [#allocation3]
    $region41: #{tpu_custom_call.1} parent=1 // pred_fallthru
      _
    // Predicated region
    $region42: #{tpu_custom_call.1} parent=1 // pred_check
      _
    $region43: #{tpu_custom_call.1} parent=1 // pred_check_branch
      %5348 = sbr.rel (0) target = $region45
    $region44: #{tpu_custom_call.1} parent=1 // pred_region
      %5350 = dma.done [#allocation3], 32
    $region45: #{tpu_custom_call.1} parent=1 // pred_fallthru
      _
    %5351 = vsyncpa [#allocation3], 1

</llo_original>
